<compile_context>
chip_gen: v6e
topology: v6e:2x2x1
jax: 0.10.0
libtpu: 0.0.40
codegen_flags: <defaults>
</compile_context>

<pallas_src>
import functools

import jax
import jax.numpy as jnp
from jax.experimental import pallas as pl
from jax.experimental.pallas import tpu as pltpu

LOG_STD_MAX = 2.0
LOG_STD_MIN = -20.0

H1, H2 = 400, 300  # hidden sizes from Actor.__init__


def _rpf_actor_kernel(x_ref, w1_ref, b1_ref, w2_ref, b2_ref, w3_ref, b3_ref,
                      eps_ref, out_ref, *, max_action, K, A):
    x = x_ref[...].astype(jnp.bfloat16)        # (B, S)  bf16 operand for the MXU
    b1 = b1_ref[0]                             # (K, H1)  f32
    b2 = b2_ref[0]                             # (K, H2)  f32
    b3 = b3_ref[0]                             # (K, 2A)  f32
    eps = eps_ref[0]                           # (K, B, A) f32

    # Static unroll over the K ensemble members of this {prior|model} set.
    for k in range(K):
        # l1 + ReLU
        h1 = jnp.dot(x, w1_ref[0, k], preferred_element_type=jnp.float32)
        h1 = jnp.maximum(h1 + b1[k:k + 1], 0.0)                    # (B, H1) f32

        # l2 + ReLU
        h2 = jnp.dot(h1.astype(jnp.bfloat16), w2_ref[0, k],
                     preferred_element_type=jnp.float32)
        h2 = jnp.maximum(h2 + b2[k:k + 1], 0.0)                    # (B, H2) f32

        # fused l3 head -> split into mu / log_std lanes
        head = jnp.dot(h2.astype(jnp.bfloat16), w3_ref[0, k],
                       preferred_element_type=jnp.float32) + b3[k:k + 1]  # (B, 2A)
        mu = head[:, :A]
        log_std = jnp.tanh(head[:, A:])
        log_std = LOG_STD_MIN + 0.5 * (LOG_STD_MAX - LOG_STD_MIN) * (log_std + 1.0)
        std = jnp.exp(log_std)                                     # all post-MXU math in f32

        # Normal(mu, std).rsample() == mu + std * eps, tanh squash, scale.
        out_ref[0, k] = max_action * jnp.tanh(mu + std * eps[k])   # (B, A) f32


def rpf_actor_forward(x, params, eps, max_action):
    """params: dict with w1,b1,w2,b2,w3,b3 stacked over (2={priors,models}, K)."""
    W1, B1 = params["w1"], params["b1"]
    W2, B2 = params["w2"], params["b2"]
    W3, B3 = params["w3"], params["b3"]
    _, K, S, _ = W1.shape
    B = x.shape[0]
    A = eps.shape[-1]

    kernel = functools.partial(_rpf_actor_kernel,
                               max_action=float(max_action), K=K, A=A)

    # Advisory cost estimate: essentially a bytes_accessed (HBM-bound) problem.
    flops = int(2 * 2 * K * B * (S * H1 + H1 * H2 + H2 * 2 * A))
    transcendentals = int(2 * K * B * 3 * A)
    bytes_accessed = int((W1.size + W2.size + W3.size) * 2       # bf16 weights
                         + (B1.size + B2.size + B3.size) * 4     # f32 biases
                         + x.size * 4 + eps.size * 4             # f32 inputs
                         + 2 * K * B * A * 4)                    # f32 output

    out2 = pl.pallas_call(
        kernel,
        out_shape=jax.ShapeDtypeStruct((2, K, B, A), jnp.float32),
        grid_spec=pltpu.PrefetchScalarGridSpec(
            num_scalar_prefetch=0,
            grid=(2,),  # {priors, models}; K handled inside the body
            in_specs=[
                pl.BlockSpec((B, S), lambda g: (0, 0)),                  # x (shared)
                pl.BlockSpec((1, K, S, H1), lambda g: (g, 0, 0, 0)),     # W1
                pl.BlockSpec((1, K, H1), lambda g: (g, 0, 0)),           # b1
                pl.BlockSpec((1, K, H1, H2), lambda g: (g, 0, 0, 0)),    # W2
                pl.BlockSpec((1, K, H2), lambda g: (g, 0, 0)),           # b2
                pl.BlockSpec((1, K, H2, 2 * A), lambda g: (g, 0, 0, 0)), # W3 (fused head)
                pl.BlockSpec((1, K, 2 * A), lambda g: (g, 0, 0)),        # b3 (fused head)
                pl.BlockSpec((1, K, B, A), lambda g: (g, 0, 0, 0)),      # eps
            ],
            out_specs=pl.BlockSpec((1, K, B, A), lambda g: (g, 0, 0, 0)),
        ),
        compiler_params=pltpu.CompilerParams(
            dimension_semantics=("parallel",)),  # 2 TCs on v7x each take one set
        cost_estimate=pl.CostEstimate(flops=flops,
                                      transcendentals=transcendentals,
                                      bytes_accessed=bytes_accessed),
    )(x, W1, B1, W2, B2, W3, B3, eps)

    # prior_k(x) + model_k(x)  ->  (K, B, A); tiny elementwise add outside the kernel.
    return out2[0] + out2[1]


def _reference_forward(x, params, eps, max_action):
    """Pure-JAX f32 reference of RPFActor.forward for validation."""
    w1 = params["w1"].astype(jnp.float32)
    w2 = params["w2"].astype(jnp.float32)
    w3 = params["w3"].astype(jnp.float32)
    K = w1.shape[1]
    A = eps.shape[-1]
    outs = []
    for k in range(K):
        parts = []
        for g in range(2):  # g=0 priors, g=1 models (detach only affects grads)
            h1 = jax.nn.relu(x @ w1[g, k] + params["b1"][g, k])
            h2 = jax.nn.relu(h1 @ w2[g, k] + params["b2"][g, k])
            head = h2 @ w3[g, k] + params["b3"][g, k]
            mu, ls = head[:, :A], head[:, A:]
            ls = jnp.tanh(ls)
            ls = LOG_STD_MIN + 0.5 * (LOG_STD_MAX - LOG_STD_MIN) * (ls + 1.0)
            parts.append(max_action * jnp.tanh(mu + jnp.exp(ls) * eps[g, k]))
        outs.append(parts[0] + parts[1])
    return jnp.stack(outs)


def init_params(key, K, state_dim, action_dim):
    """Deterministic init (uniform +/- 1/sqrt(fan_in), like torch Linear default)."""
    def lin(k, fan_in, shape):
        bound = 1.0 / jnp.sqrt(jnp.float32(fan_in))
        return jax.random.uniform(k, shape, jnp.float32, -bound, bound)

    ks = jax.random.split(key, 6)
    A = action_dim
    params = {
        # leading axis: 0 = priors, 1 = models (K independent Actors each)
        "w1": lin(ks[0], state_dim, (2, K, state_dim, H1)),
        "b1": lin(ks[1], state_dim, (2, K, H1)),
        "w2": lin(ks[2], H1, (2, K, H1, H2)),
        "b2": lin(ks[3], H1, (2, K, H2)),
        # l3 produces 2*A outputs (mu || log_std) -- kept fused.
        "w3": lin(ks[4], H2, (2, K, H2, 2 * A)),
        "b3": lin(ks[5], H2, (2, K, 2 * A)),
    }
    # HBM-bandwidth-bound kernel: store weights in bf16, keep biases in f32.
    for name in ("w1", "w2", "w3"):
        params[name] = params[name].astype(jnp.bfloat16)
    return params


if __name__ == "__main__":
    K = 5
    state_dim = 16
    action_dim = 8
    batch = 2
    max_action = 1.0

    root = jax.random.PRNGKey(0)
    k_params, k_x, k_eps = jax.random.split(root, 3)

    params = init_params(k_params, K, state_dim, action_dim)
    x = jax.random.normal(k_x, (batch, state_dim), jnp.float32)
    # Reparameterization-trick noise: independent draws for priors and models.
    eps = jax.random.normal(k_eps, (2, K, batch, action_dim), jnp.float32)

    out = rpf_actor_forward(x, params, eps, max_action)
    out = jax.block_until_ready(out)

    ref = _reference_forward(x, params, eps, max_action)
    assert out.shape == (K, batch, action_dim)
    assert jnp.all(jnp.isfinite(out))
    # bf16 weights / bf16 MXU operands in the kernel vs f32 reference math.
    assert jnp.allclose(out, ref, atol=2e-2, rtol=2e-2)

    print("KERNEL_OK")
</pallas_src>

<mosaic_0001>
module attributes {stable_mosaic.version = 11 : i64} {
  func.func @_rpf_actor_kernel(%arg0: i32, %arg1: memref<2x16xf32, #tpu.memory_space<vmem>>, %arg2: memref<1x5x16x400xbf16, #tpu.memory_space<vmem>>, %arg3: memref<1x5x400xf32, #tpu.memory_space<vmem>>, %arg4: memref<1x5x400x300xbf16, #tpu.memory_space<vmem>>, %arg5: memref<1x5x300xf32, #tpu.memory_space<vmem>>, %arg6: memref<1x5x300x16xbf16, #tpu.memory_space<vmem>>, %arg7: memref<1x5x16xf32, #tpu.memory_space<vmem>>, %arg8: memref<1x5x2x8xf32, #tpu.memory_space<vmem>>, %arg9: memref<1x5x2x8xf32, #tpu.memory_space<vmem>>) attributes {dimension_semantics = [#tpu.dimension_semantics<parallel>], iteration_bounds = array<i64: 2>, scalar_prefetch = 0 : i64, scratch_operands = 0 : i64, tpu.core_type = #tpu.core_type<tc>, window_params = [{pipeline_mode = #tpu.pipeline_mode<synchronous>, transform_indices = @transform_0, window_bounds = array<i64: 2, 16>}, {transform_indices = @transform_1, window_bounds = array<i64: 1, 5, 16, 400>}, {transform_indices = @transform_2, window_bounds = array<i64: 1, 5, 400>}, {transform_indices = @transform_3, window_bounds = array<i64: 1, 5, 400, 300>}, {transform_indices = @transform_4, window_bounds = array<i64: 1, 5, 300>}, {transform_indices = @transform_5, window_bounds = array<i64: 1, 5, 300, 16>}, {transform_indices = @transform_6, window_bounds = array<i64: 1, 5, 16>}, {transform_indices = @transform_7, window_bounds = array<i64: 1, 5, 2, 8>}, {transform_indices = @transform_8, window_bounds = array<i64: 1, 5, 2, 8>}]} {
    %c0 = arith.constant 0 : index
    %c0_0 = arith.constant 0 : index
    %0 = vector.load %arg1[%c0, %c0_0] : memref<2x16xf32, #tpu.memory_space<vmem>>, vector<2x16xf32>
    %1 = arith.truncf %0 : vector<2x16xf32> to vector<2x16xbf16>
    %c0_1 = arith.constant 0 : index
    %c0_2 = arith.constant 0 : index
    %c0_3 = arith.constant 0 : index
    %2 = vector.load %arg3[%c0_1, %c0_2, %c0_3] : memref<1x5x400xf32, #tpu.memory_space<vmem>>, vector<1x5x400xf32>
    %3 = vector.shape_cast %2 : vector<1x5x400xf32> to vector<5x400xf32>
    %c0_4 = arith.constant 0 : index
    %c0_5 = arith.constant 0 : index
    %c0_6 = arith.constant 0 : index
    %4 = vector.load %arg5[%c0_4, %c0_5, %c0_6] : memref<1x5x300xf32, #tpu.memory_space<vmem>>, vector<1x5x300xf32>
    %5 = vector.shape_cast %4 : vector<1x5x300xf32> to vector<5x300xf32>
    %c0_7 = arith.constant 0 : index
    %c0_8 = arith.constant 0 : index
    %c0_9 = arith.constant 0 : index
    %6 = vector.load %arg7[%c0_7, %c0_8, %c0_9] : memref<1x5x16xf32, #tpu.memory_space<vmem>>, vector<1x5x16xf32>
    %7 = vector.shape_cast %6 : vector<1x5x16xf32> to vector<5x16xf32>
    %c0_10 = arith.constant 0 : index
    %c0_11 = arith.constant 0 : index
    %c0_12 = arith.constant 0 : index
    %c0_13 = arith.constant 0 : index
    %8 = vector.load %arg8[%c0_10, %c0_11, %c0_12, %c0_13] : memref<1x5x2x8xf32, #tpu.memory_space<vmem>>, vector<1x5x2x8xf32>
    %9 = vector.shape_cast %8 : vector<1x5x2x8xf32> to vector<5x2x8xf32>
    %c0_14 = arith.constant 0 : index
    %c0_15 = arith.constant 0 : index
    %c0_16 = arith.constant 0 : index
    %c0_17 = arith.constant 0 : index
    %10 = vector.load %arg2[%c0_14, %c0_15, %c0_16, %c0_17] : memref<1x5x16x400xbf16, #tpu.memory_space<vmem>>, vector<1x1x16x400xbf16>
    %11 = vector.shape_cast %10 : vector<1x1x16x400xbf16> to vector<16x400xbf16>
    %cst = arith.constant dense<0.000000e+00> : vector<2x400xf32>
    %12 = tpu.matmul %1, %11, %cst {dimension_numbers = #tpu.dot_dimension_numbers<[1], [0], [0], [1], [0, 0, 1, 1], [], []>} : vector<2x16xbf16>, vector<16x400xbf16>, vector<2x400xf32> -> vector<2x400xf32>
    %13 = vector.extract_strided_slice %3 {offsets = [0, 0], sizes = [1, 400], strides = [1, 1]} : vector<5x400xf32> to vector<1x400xf32>
    %14 = vector.broadcast %13 : vector<1x400xf32> to vector<2x400xf32>
    %15 = arith.addf %12, %14 : vector<2x400xf32>
    %cst_18 = arith.constant 0.000000e+00 : f32
    %16 = vector.broadcast %cst_18 : f32 to vector<2x400xf32>
    %17 = arith.maximumf %15, %16 : vector<2x400xf32>
    %18 = arith.truncf %17 : vector<2x400xf32> to vector<2x400xbf16>
    %c0_19 = arith.constant 0 : index
    %c0_20 = arith.constant 0 : index
    %c0_21 = arith.constant 0 : index
    %c0_22 = arith.constant 0 : index
    %19 = vector.load %arg4[%c0_19, %c0_20, %c0_21, %c0_22] : memref<1x5x400x300xbf16, #tpu.memory_space<vmem>>, vector<1x1x400x300xbf16>
    %20 = vector.shape_cast %19 : vector<1x1x400x300xbf16> to vector<400x300xbf16>
    %cst_23 = arith.constant dense<0.000000e+00> : vector<2x300xf32>
    %21 = tpu.matmul %18, %20, %cst_23 {dimension_numbers = #tpu.dot_dimension_numbers<[1], [0], [0], [1], [0, 0, 1, 1], [], []>} : vector<2x400xbf16>, vector<400x300xbf16>, vector<2x300xf32> -> vector<2x300xf32>
    %22 = vector.extract_strided_slice %5 {offsets = [0, 0], sizes = [1, 300], strides = [1, 1]} : vector<5x300xf32> to vector<1x300xf32>
    %23 = vector.broadcast %22 : vector<1x300xf32> to vector<2x300xf32>
    %24 = arith.addf %21, %23 : vector<2x300xf32>
    %cst_24 = arith.constant 0.000000e+00 : f32
    %25 = vector.broadcast %cst_24 : f32 to vector<2x300xf32>
    %26 = arith.maximumf %24, %25 : vector<2x300xf32>
    %27 = arith.truncf %26 : vector<2x300xf32> to vector<2x300xbf16>
    %c0_25 = arith.constant 0 : index
    %c0_26 = arith.constant 0 : index
    %c0_27 = arith.constant 0 : index
    %c0_28 = arith.constant 0 : index
    %28 = vector.load %arg6[%c0_25, %c0_26, %c0_27, %c0_28] : memref<1x5x300x16xbf16, #tpu.memory_space<vmem>>, vector<1x1x300x16xbf16>
    %29 = vector.shape_cast %28 : vector<1x1x300x16xbf16> to vector<300x16xbf16>
    %cst_29 = arith.constant dense<0.000000e+00> : vector<2x16xf32>
    %30 = tpu.matmul %27, %29, %cst_29 {dimension_numbers = #tpu.dot_dimension_numbers<[1], [0], [0], [1], [0, 0, 1, 1], [], []>} : vector<2x300xbf16>, vector<300x16xbf16>, vector<2x16xf32> -> vector<2x16xf32>
    %31 = vector.extract_strided_slice %7 {offsets = [0, 0], sizes = [1, 16], strides = [1, 1]} : vector<5x16xf32> to vector<1x16xf32>
    %32 = vector.broadcast %31 : vector<1x16xf32> to vector<2x16xf32>
    %33 = arith.addf %30, %32 : vector<2x16xf32>
    %34 = vector.extract_strided_slice %33 {offsets = [0, 0], sizes = [2, 8], strides = [1, 1]} : vector<2x16xf32> to vector<2x8xf32>
    %35 = vector.extract_strided_slice %33 {offsets = [0, 8], sizes = [2, 8], strides = [1, 1]} : vector<2x16xf32> to vector<2x8xf32>
    %36 = math.tanh %35 : vector<2x8xf32>
    %cst_30 = arith.constant 1.000000e+00 : f32
    %37 = vector.broadcast %cst_30 : f32 to vector<2x8xf32>
    %38 = arith.addf %36, %37 : vector<2x8xf32>
    %cst_31 = arith.constant 1.100000e+01 : f32
    %39 = vector.broadcast %cst_31 : f32 to vector<2x8xf32>
    %40 = arith.mulf %39, %38 : vector<2x8xf32>
    %cst_32 = arith.constant -2.000000e+01 : f32
    %41 = vector.broadcast %cst_32 : f32 to vector<2x8xf32>
    %42 = arith.addf %41, %40 : vector<2x8xf32>
    %43 = math.exp %42 : vector<2x8xf32>
    %44 = vector.extract_strided_slice %9 {offsets = [0, 0, 0], sizes = [1, 2, 8], strides = [1, 1, 1]} : vector<5x2x8xf32> to vector<1x2x8xf32>
    %45 = vector.shape_cast %44 : vector<1x2x8xf32> to vector<2x8xf32>
    %46 = arith.mulf %43, %45 : vector<2x8xf32>
    %47 = arith.addf %34, %46 : vector<2x8xf32>
    %48 = math.tanh %47 : vector<2x8xf32>
    %cst_33 = arith.constant 1.000000e+00 : f32
    %49 = vector.broadcast %cst_33 : f32 to vector<2x8xf32>
    %50 = arith.mulf %49, %48 : vector<2x8xf32>
    %c0_34 = arith.constant 0 : index
    %c0_35 = arith.constant 0 : index
    %c0_36 = arith.constant 0 : index
    %c0_37 = arith.constant 0 : index
    %51 = vector.load %arg9[%c0_34, %c0_35, %c0_36, %c0_37] : memref<1x5x2x8xf32, #tpu.memory_space<vmem>>, vector<1x1x2x8xf32>
    %52 = vector.shape_cast %51 : vector<1x1x2x8xf32> to vector<2x8xf32>
    %53 = vector.shape_cast %50 : vector<2x8xf32> to vector<1x1x2x8xf32>
    tpu.vector_store %arg9[%c0_34, %c0_35, %c0_36, %c0_37], %53 {strides = array<i32>} : memref<1x5x2x8xf32, #tpu.memory_space<vmem>>, vector<1x1x2x8xf32>,
    %c0_38 = arith.constant 0 : index
    %c1 = arith.constant 1 : index
    %c0_39 = arith.constant 0 : index
    %c0_40 = arith.constant 0 : index
    %54 = vector.load %arg2[%c0_38, %c1, %c0_39, %c0_40] : memref<1x5x16x400xbf16, #tpu.memory_space<vmem>>, vector<1x1x16x400xbf16>
    %55 = vector.shape_cast %54 : vector<1x1x16x400xbf16> to vector<16x400xbf16>
    %cst_41 = arith.constant dense<0.000000e+00> : vector<2x400xf32>
    %56 = tpu.matmul %1, %55, %cst_41 {dimension_numbers = #tpu.dot_dimension_numbers<[1], [0], [0], [1], [0, 0, 1, 1], [], []>} : vector<2x16xbf16>, vector<16x400xbf16>, vector<2x400xf32> -> vector<2x400xf32>
    %57 = vector.extract_strided_slice %3 {offsets = [1, 0], sizes = [1, 400], strides = [1, 1]} : vector<5x400xf32> to vector<1x400xf32>
    %58 = vector.broadcast %57 : vector<1x400xf32> to vector<2x400xf32>
    %59 = arith.addf %56, %58 : vector<2x400xf32>
    %cst_42 = arith.constant 0.000000e+00 : f32
    %60 = vector.broadcast %cst_42 : f32 to vector<2x400xf32>
    %61 = arith.maximumf %59, %60 : vector<2x400xf32>
    %62 = arith.truncf %61 : vector<2x400xf32> to vector<2x400xbf16>
    %c0_43 = arith.constant 0 : index
    %c1_44 = arith.constant 1 : index
    %c0_45 = arith.constant 0 : index
    %c0_46 = arith.constant 0 : index
    %63 = vector.load %arg4[%c0_43, %c1_44, %c0_45, %c0_46] : memref<1x5x400x300xbf16, #tpu.memory_space<vmem>>, vector<1x1x400x300xbf16>
    %64 = vector.shape_cast %63 : vector<1x1x400x300xbf16> to vector<400x300xbf16>
    %cst_47 = arith.constant dense<0.000000e+00> : vector<2x300xf32>
    %65 = tpu.matmul %62, %64, %cst_47 {dimension_numbers = #tpu.dot_dimension_numbers<[1], [0], [0], [1], [0, 0, 1, 1], [], []>} : vector<2x400xbf16>, vector<400x300xbf16>, vector<2x300xf32> -> vector<2x300xf32>
    %66 = vector.extract_strided_slice %5 {offsets = [1, 0], sizes = [1, 300], strides = [1, 1]} : vector<5x300xf32> to vector<1x300xf32>
    %67 = vector.broadcast %66 : vector<1x300xf32> to vector<2x300xf32>
    %68 = arith.addf %65, %67 : vector<2x300xf32>
    %cst_48 = arith.constant 0.000000e+00 : f32
    %69 = vector.broadcast %cst_48 : f32 to vector<2x300xf32>
    %70 = arith.maximumf %68, %69 : vector<2x300xf32>
    %71 = arith.truncf %70 : vector<2x300xf32> to vector<2x300xbf16>
    %c0_49 = arith.constant 0 : index
    %c1_50 = arith.constant 1 : index
    %c0_51 = arith.constant 0 : index
    %c0_52 = arith.constant 0 : index
    %72 = vector.load %arg6[%c0_49, %c1_50, %c0_51, %c0_52] : memref<1x5x300x16xbf16, #tpu.memory_space<vmem>>, vector<1x1x300x16xbf16>
    %73 = vector.shape_cast %72 : vector<1x1x300x16xbf16> to vector<300x16xbf16>
    %cst_53 = arith.constant dense<0.000000e+00> : vector<2x16xf32>
    %74 = tpu.matmul %71, %73, %cst_53 {dimension_numbers = #tpu.dot_dimension_numbers<[1], [0], [0], [1], [0, 0, 1, 1], [], []>} : vector<2x300xbf16>, vector<300x16xbf16>, vector<2x16xf32> -> vector<2x16xf32>
    %75 = vector.extract_strided_slice %7 {offsets = [1, 0], sizes = [1, 16], strides = [1, 1]} : vector<5x16xf32> to vector<1x16xf32>
    %76 = vector.broadcast %75 : vector<1x16xf32> to vector<2x16xf32>
    %77 = arith.addf %74, %76 : vector<2x16xf32>
    %78 = vector.extract_strided_slice %77 {offsets = [0, 0], sizes = [2, 8], strides = [1, 1]} : vector<2x16xf32> to vector<2x8xf32>
    %79 = vector.extract_strided_slice %77 {offsets = [0, 8], sizes = [2, 8], strides = [1, 1]} : vector<2x16xf32> to vector<2x8xf32>
    %80 = math.tanh %79 : vector<2x8xf32>
    %cst_54 = arith.constant 1.000000e+00 : f32
    %81 = vector.broadcast %cst_54 : f32 to vector<2x8xf32>
    %82 = arith.addf %80, %81 : vector<2x8xf32>
    %cst_55 = arith.constant 1.100000e+01 : f32
    %83 = vector.broadcast %cst_55 : f32 to vector<2x8xf32>
    %84 = arith.mulf %83, %82 : vector<2x8xf32>
    %cst_56 = arith.constant -2.000000e+01 : f32
    %85 = vector.broadcast %cst_56 : f32 to vector<2x8xf32>
    %86 = arith.addf %85, %84 : vector<2x8xf32>
    %87 = math.exp %86 : vector<2x8xf32>
    %88 = vector.extract_strided_slice %9 {offsets = [1, 0, 0], sizes = [1, 2, 8], strides = [1, 1, 1]} : vector<5x2x8xf32> to vector<1x2x8xf32>
    %89 = vector.shape_cast %88 : vector<1x2x8xf32> to vector<2x8xf32>
    %90 = arith.mulf %87, %89 : vector<2x8xf32>
    %91 = arith.addf %78, %90 : vector<2x8xf32>
    %92 = math.tanh %91 : vector<2x8xf32>
    %cst_57 = arith.constant 1.000000e+00 : f32
    %93 = vector.broadcast %cst_57 : f32 to vector<2x8xf32>
    %94 = arith.mulf %93, %92 : vector<2x8xf32>
    %c0_58 = arith.constant 0 : index
    %c1_59 = arith.constant 1 : index
    %c0_60 = arith.constant 0 : index
    %c0_61 = arith.constant 0 : index
    %95 = vector.load %arg9[%c0_58, %c1_59, %c0_60, %c0_61] : memref<1x5x2x8xf32, #tpu.memory_space<vmem>>, vector<1x1x2x8xf32>
    %96 = vector.shape_cast %95 : vector<1x1x2x8xf32> to vector<2x8xf32>
    %97 = vector.shape_cast %94 : vector<2x8xf32> to vector<1x1x2x8xf32>
    tpu.vector_store %arg9[%c0_58, %c1_59, %c0_60, %c0_61], %97 {strides = array<i32>} : memref<1x5x2x8xf32, #tpu.memory_space<vmem>>, vector<1x1x2x8xf32>,
    %c0_62 = arith.constant 0 : index
    %c2 = arith.constant 2 : index
    %c0_63 = arith.constant 0 : index
    %c0_64 = arith.constant 0 : index
    %98 = vector.load %arg2[%c0_62, %c2, %c0_63, %c0_64] : memref<1x5x16x400xbf16, #tpu.memory_space<vmem>>, vector<1x1x16x400xbf16>
    %99 = vector.shape_cast %98 : vector<1x1x16x400xbf16> to vector<16x400xbf16>
    %cst_65 = arith.constant dense<0.000000e+00> : vector<2x400xf32>
    %100 = tpu.matmul %1, %99, %cst_65 {dimension_numbers = #tpu.dot_dimension_numbers<[1], [0], [0], [1], [0, 0, 1, 1], [], []>} : vector<2x16xbf16>, vector<16x400xbf16>, vector<2x400xf32> -> vector<2x400xf32>
    %101 = vector.extract_strided_slice %3 {offsets = [2, 0], sizes = [1, 400], strides = [1, 1]} : vector<5x400xf32> to vector<1x400xf32>
    %102 = vector.broadcast %101 : vector<1x400xf32> to vector<2x400xf32>
    %103 = arith.addf %100, %102 : vector<2x400xf32>
    %cst_66 = arith.constant 0.000000e+00 : f32
    %104 = vector.broadcast %cst_66 : f32 to vector<2x400xf32>
    %105 = arith.maximumf %103, %104 : vector<2x400xf32>
    %106 = arith.truncf %105 : vector<2x400xf32> to vector<2x400xbf16>
    %c0_67 = arith.constant 0 : index
    %c2_68 = arith.constant 2 : index
    %c0_69 = arith.constant 0 : index
    %c0_70 = arith.constant 0 : index
    %107 = vector.load %arg4[%c0_67, %c2_68, %c0_69, %c0_70] : memref<1x5x400x300xbf16, #tpu.memory_space<vmem>>, vector<1x1x400x300xbf16>
    %108 = vector.shape_cast %107 : vector<1x1x400x300xbf16> to vector<400x300xbf16>
    %cst_71 = arith.constant dense<0.000000e+00> : vector<2x300xf32>
    %109 = tpu.matmul %106, %108, %cst_71 {dimension_numbers = #tpu.dot_dimension_numbers<[1], [0], [0], [1], [0, 0, 1, 1], [], []>} : vector<2x400xbf16>, vector<400x300xbf16>, vector<2x300xf32> -> vector<2x300xf32>
    %110 = vector.extract_strided_slice %5 {offsets = [2, 0], sizes = [1, 300], strides = [1, 1]} : vector<5x300xf32> to vector<1x300xf32>
    %111 = vector.broadcast %110 : vector<1x300xf32> to vector<2x300xf32>
    %112 = arith.addf %109, %111 : vector<2x300xf32>
    %cst_72 = arith.constant 0.000000e+00 : f32
    %113 = vector.broadcast %cst_72 : f32 to vector<2x300xf32>
    %114 = arith.maximumf %112, %113 : vector<2x300xf32>
    %115 = arith.truncf %114 : vector<2x300xf32> to vector<2x300xbf16>
    %c0_73 = arith.constant 0 : index
    %c2_74 = arith.constant 2 : index
    %c0_75 = arith.constant 0 : index
    %c0_76 = arith.constant 0 : index
    %116 = vector.load %arg6[%c0_73, %c2_74, %c0_75, %c0_76] : memref<1x5x300x16xbf16, #tpu.memory_space<vmem>>, vector<1x1x300x16xbf16>
    %117 = vector.shape_cast %116 : vector<1x1x300x16xbf16> to vector<300x16xbf16>
    %cst_77 = arith.constant dense<0.000000e+00> : vector<2x16xf32>
    %118 = tpu.matmul %115, %117, %cst_77 {dimension_numbers = #tpu.dot_dimension_numbers<[1], [0], [0], [1], [0, 0, 1, 1], [], []>} : vector<2x300xbf16>, vector<300x16xbf16>, vector<2x16xf32> -> vector<2x16xf32>
    %119 = vector.extract_strided_slice %7 {offsets = [2, 0], sizes = [1, 16], strides = [1, 1]} : vector<5x16xf32> to vector<1x16xf32>
    %120 = vector.broadcast %119 : vector<1x16xf32> to vector<2x16xf32>
    %121 = arith.addf %118, %120 : vector<2x16xf32>
    %122 = vector.extract_strided_slice %121 {offsets = [0, 0], sizes = [2, 8], strides = [1, 1]} : vector<2x16xf32> to vector<2x8xf32>
    %123 = vector.extract_strided_slice %121 {offsets = [0, 8], sizes = [2, 8], strides = [1, 1]} : vector<2x16xf32> to vector<2x8xf32>
    %124 = math.tanh %123 : vector<2x8xf32>
    %cst_78 = arith.constant 1.000000e+00 : f32
    %125 = vector.broadcast %cst_78 : f32 to vector<2x8xf32>
    %126 = arith.addf %124, %125 : vector<2x8xf32>
    %cst_79 = arith.constant 1.100000e+01 : f32
    %127 = vector.broadcast %cst_79 : f32 to vector<2x8xf32>
    %128 = arith.mulf %127, %126 : vector<2x8xf32>
    %cst_80 = arith.constant -2.000000e+01 : f32
    %129 = vector.broadcast %cst_80 : f32 to vector<2x8xf32>
    %130 = arith.addf %129, %128 : vector<2x8xf32>
    %131 = math.exp %130 : vector<2x8xf32>
    %132 = vector.extract_strided_slice %9 {offsets = [2, 0, 0], sizes = [1, 2, 8], strides = [1, 1, 1]} : vector<5x2x8xf32> to vector<1x2x8xf32>
    %133 = vector.shape_cast %132 : vector<1x2x8xf32> to vector<2x8xf32>
    %134 = arith.mulf %131, %133 : vector<2x8xf32>
    %135 = arith.addf %122, %134 : vector<2x8xf32>
    %136 = math.tanh %135 : vector<2x8xf32>
    %cst_81 = arith.constant 1.000000e+00 : f32
    %137 = vector.broadcast %cst_81 : f32 to vector<2x8xf32>
    %138 = arith.mulf %137, %136 : vector<2x8xf32>
    %c0_82 = arith.constant 0 : index
    %c2_83 = arith.constant 2 : index
    %c0_84 = arith.constant 0 : index
    %c0_85 = arith.constant 0 : index
    %139 = vector.load %arg9[%c0_82, %c2_83, %c0_84, %c0_85] : memref<1x5x2x8xf32, #tpu.memory_space<vmem>>, vector<1x1x2x8xf32>
    %140 = vector.shape_cast %139 : vector<1x1x2x8xf32> to vector<2x8xf32>
    %141 = vector.shape_cast %138 : vector<2x8xf32> to vector<1x1x2x8xf32>
    tpu.vector_store %arg9[%c0_82, %c2_83, %c0_84, %c0_85], %141 {strides = array<i32>} : memref<1x5x2x8xf32, #tpu.memory_space<vmem>>, vector<1x1x2x8xf32>,
    %c0_86 = arith.constant 0 : index
    %c3 = arith.constant 3 : index
    %c0_87 = arith.constant 0 : index
    %c0_88 = arith.constant 0 : index
    %142 = vector.load %arg2[%c0_86, %c3, %c0_87, %c0_88] : memref<1x5x16x400xbf16, #tpu.memory_space<vmem>>, vector<1x1x16x400xbf16>
    %143 = vector.shape_cast %142 : vector<1x1x16x400xbf16> to vector<16x400xbf16>
    %cst_89 = arith.constant dense<0.000000e+00> : vector<2x400xf32>
    %144 = tpu.matmul %1, %143, %cst_89 {dimension_numbers = #tpu.dot_dimension_numbers<[1], [0], [0], [1], [0, 0, 1, 1], [], []>} : vector<2x16xbf16>, vector<16x400xbf16>, vector<2x400xf32> -> vector<2x400xf32>
    %145 = vector.extract_strided_slice %3 {offsets = [3, 0], sizes = [1, 400], strides = [1, 1]} : vector<5x400xf32> to vector<1x400xf32>
    %146 = vector.broadcast %145 : vector<1x400xf32> to vector<2x400xf32>
    %147 = arith.addf %144, %146 : vector<2x400xf32>
    %cst_90 = arith.constant 0.000000e+00 : f32
    %148 = vector.broadcast %cst_90 : f32 to vector<2x400xf32>
    %149 = arith.maximumf %147, %148 : vector<2x400xf32>
    %150 = arith.truncf %149 : vector<2x400xf32> to vector<2x400xbf16>
    %c0_91 = arith.constant 0 : index
    %c3_92 = arith.constant 3 : index
    %c0_93 = arith.constant 0 : index
    %c0_94 = arith.constant 0 : index
    %151 = vector.load %arg4[%c0_91, %c3_92, %c0_93, %c0_94] : memref<1x5x400x300xbf16, #tpu.memory_space<vmem>>, vector<1x1x400x300xbf16>
    %152 = vector.shape_cast %151 : vector<1x1x400x300xbf16> to vector<400x300xbf16>
    %cst_95 = arith.constant dense<0.000000e+00> : vector<2x300xf32>
    %153 = tpu.matmul %150, %152, %cst_95 {dimension_numbers = #tpu.dot_dimension_numbers<[1], [0], [0], [1], [0, 0, 1, 1], [], []>} : vector<2x400xbf16>, vector<400x300xbf16>, vector<2x300xf32> -> vector<2x300xf32>
    %154 = vector.extract_strided_slice %5 {offsets = [3, 0], sizes = [1, 300], strides = [1, 1]} : vector<5x300xf32> to vector<1x300xf32>
    %155 = vector.broadcast %154 : vector<1x300xf32> to vector<2x300xf32>
    %156 = arith.addf %153, %155 : vector<2x300xf32>
    %cst_96 = arith.constant 0.000000e+00 : f32
    %157 = vector.broadcast %cst_96 : f32 to vector<2x300xf32>
    %158 = arith.maximumf %156, %157 : vector<2x300xf32>
    %159 = arith.truncf %158 : vector<2x300xf32> to vector<2x300xbf16>
    %c0_97 = arith.constant 0 : index
    %c3_98 = arith.constant 3 : index
    %c0_99 = arith.constant 0 : index
    %c0_100 = arith.constant 0 : index
    %160 = vector.load %arg6[%c0_97, %c3_98, %c0_99, %c0_100] : memref<1x5x300x16xbf16, #tpu.memory_space<vmem>>, vector<1x1x300x16xbf16>
    %161 = vector.shape_cast %160 : vector<1x1x300x16xbf16> to vector<300x16xbf16>
    %cst_101 = arith.constant dense<0.000000e+00> : vector<2x16xf32>
    %162 = tpu.matmul %159, %161, %cst_101 {dimension_numbers = #tpu.dot_dimension_numbers<[1], [0], [0], [1], [0, 0, 1, 1], [], []>} : vector<2x300xbf16>, vector<300x16xbf16>, vector<2x16xf32> -> vector<2x16xf32>
    %163 = vector.extract_strided_slice %7 {offsets = [3, 0], sizes = [1, 16], strides = [1, 1]} : vector<5x16xf32> to vector<1x16xf32>
    %164 = vector.broadcast %163 : vector<1x16xf32> to vector<2x16xf32>
    %165 = arith.addf %162, %164 : vector<2x16xf32>
    %166 = vector.extract_strided_slice %165 {offsets = [0, 0], sizes = [2, 8], strides = [1, 1]} : vector<2x16xf32> to vector<2x8xf32>
    %167 = vector.extract_strided_slice %165 {offsets = [0, 8], sizes = [2, 8], strides = [1, 1]} : vector<2x16xf32> to vector<2x8xf32>
    %168 = math.tanh %167 : vector<2x8xf32>
    %cst_102 = arith.constant 1.000000e+00 : f32
    %169 = vector.broadcast %cst_102 : f32 to vector<2x8xf32>
    %170 = arith.addf %168, %169 : vector<2x8xf32>
    %cst_103 = arith.constant 1.100000e+01 : f32
    %171 = vector.broadcast %cst_103 : f32 to vector<2x8xf32>
    %172 = arith.mulf %171, %170 : vector<2x8xf32>
    %cst_104 = arith.constant -2.000000e+01 : f32
    %173 = vector.broadcast %cst_104 : f32 to vector<2x8xf32>
    %174 = arith.addf %173, %172 : vector<2x8xf32>
    %175 = math.exp %174 : vector<2x8xf32>
    %176 = vector.extract_strided_slice %9 {offsets = [3, 0, 0], sizes = [1, 2, 8], strides = [1, 1, 1]} : vector<5x2x8xf32> to vector<1x2x8xf32>
    %177 = vector.shape_cast %176 : vector<1x2x8xf32> to vector<2x8xf32>
    %178 = arith.mulf %175, %177 : vector<2x8xf32>
    %179 = arith.addf %166, %178 : vector<2x8xf32>
    %180 = math.tanh %179 : vector<2x8xf32>
    %cst_105 = arith.constant 1.000000e+00 : f32
    %181 = vector.broadcast %cst_105 : f32 to vector<2x8xf32>
    %182 = arith.mulf %181, %180 : vector<2x8xf32>
    %c0_106 = arith.constant 0 : index
    %c3_107 = arith.constant 3 : index
    %c0_108 = arith.constant 0 : index
    %c0_109 = arith.constant 0 : index
    %183 = vector.load %arg9[%c0_106, %c3_107, %c0_108, %c0_109] : memref<1x5x2x8xf32, #tpu.memory_space<vmem>>, vector<1x1x2x8xf32>
    %184 = vector.shape_cast %183 : vector<1x1x2x8xf32> to vector<2x8xf32>
    %185 = vector.shape_cast %182 : vector<2x8xf32> to vector<1x1x2x8xf32>
    tpu.vector_store %arg9[%c0_106, %c3_107, %c0_108, %c0_109], %185 {strides = array<i32>} : memref<1x5x2x8xf32, #tpu.memory_space<vmem>>, vector<1x1x2x8xf32>,
    %c0_110 = arith.constant 0 : index
    %c4 = arith.constant 4 : index
    %c0_111 = arith.constant 0 : index
    %c0_112 = arith.constant 0 : index
    %186 = vector.load %arg2[%c0_110, %c4, %c0_111, %c0_112] : memref<1x5x16x400xbf16, #tpu.memory_space<vmem>>, vector<1x1x16x400xbf16>
    %187 = vector.shape_cast %186 : vector<1x1x16x400xbf16> to vector<16x400xbf16>
    %cst_113 = arith.constant dense<0.000000e+00> : vector<2x400xf32>
    %188 = tpu.matmul %1, %187, %cst_113 {dimension_numbers = #tpu.dot_dimension_numbers<[1], [0], [0], [1], [0, 0, 1, 1], [], []>} : vector<2x16xbf16>, vector<16x400xbf16>, vector<2x400xf32> -> vector<2x400xf32>
    %189 = vector.extract_strided_slice %3 {offsets = [4, 0], sizes = [1, 400], strides = [1, 1]} : vector<5x400xf32> to vector<1x400xf32>
    %190 = vector.broadcast %189 : vector<1x400xf32> to vector<2x400xf32>
    %191 = arith.addf %188, %190 : vector<2x400xf32>
    %cst_114 = arith.constant 0.000000e+00 : f32
    %192 = vector.broadcast %cst_114 : f32 to vector<2x400xf32>
    %193 = arith.maximumf %191, %192 : vector<2x400xf32>
    %194 = arith.truncf %193 : vector<2x400xf32> to vector<2x400xbf16>
    %c0_115 = arith.constant 0 : index
    %c4_116 = arith.constant 4 : index
    %c0_117 = arith.constant 0 : index
    %c0_118 = arith.constant 0 : index
    %195 = vector.load %arg4[%c0_115, %c4_116, %c0_117, %c0_118] : memref<1x5x400x300xbf16, #tpu.memory_space<vmem>>, vector<1x1x400x300xbf16>
    %196 = vector.shape_cast %195 : vector<1x1x400x300xbf16> to vector<400x300xbf16>
    %cst_119 = arith.constant dense<0.000000e+00> : vector<2x300xf32>
    %197 = tpu.matmul %194, %196, %cst_119 {dimension_numbers = #tpu.dot_dimension_numbers<[1], [0], [0], [1], [0, 0, 1, 1], [], []>} : vector<2x400xbf16>, vector<400x300xbf16>, vector<2x300xf32> -> vector<2x300xf32>
    %198 = vector.extract_strided_slice %5 {offsets = [4, 0], sizes = [1, 300], strides = [1, 1]} : vector<5x300xf32> to vector<1x300xf32>
    %199 = vector.broadcast %198 : vector<1x300xf32> to vector<2x300xf32>
    %200 = arith.addf %197, %199 : vector<2x300xf32>
    %cst_120 = arith.constant 0.000000e+00 : f32
    %201 = vector.broadcast %cst_120 : f32 to vector<2x300xf32>
    %202 = arith.maximumf %200, %201 : vector<2x300xf32>
    %203 = arith.truncf %202 : vector<2x300xf32> to vector<2x300xbf16>
    %c0_121 = arith.constant 0 : index
    %c4_122 = arith.constant 4 : index
    %c0_123 = arith.constant 0 : index
    %c0_124 = arith.constant 0 : index
    %204 = vector.load %arg6[%c0_121, %c4_122, %c0_123, %c0_124] : memref<1x5x300x16xbf16, #tpu.memory_space<vmem>>, vector<1x1x300x16xbf16>
    %205 = vector.shape_cast %204 : vector<1x1x300x16xbf16> to vector<300x16xbf16>
    %cst_125 = arith.constant dense<0.000000e+00> : vector<2x16xf32>
    %206 = tpu.matmul %203, %205, %cst_125 {dimension_numbers = #tpu.dot_dimension_numbers<[1], [0], [0], [1], [0, 0, 1, 1], [], []>} : vector<2x300xbf16>, vector<300x16xbf16>, vector<2x16xf32> -> vector<2x16xf32>
    %207 = vector.extract_strided_slice %7 {offsets = [4, 0], sizes = [1, 16], strides = [1, 1]} : vector<5x16xf32> to vector<1x16xf32>
    %208 = vector.broadcast %207 : vector<1x16xf32> to vector<2x16xf32>
    %209 = arith.addf %206, %208 : vector<2x16xf32>
    %210 = vector.extract_strided_slice %209 {offsets = [0, 0], sizes = [2, 8], strides = [1, 1]} : vector<2x16xf32> to vector<2x8xf32>
    %211 = vector.extract_strided_slice %209 {offsets = [0, 8], sizes = [2, 8], strides = [1, 1]} : vector<2x16xf32> to vector<2x8xf32>
    %212 = math.tanh %211 : vector<2x8xf32>
    %cst_126 = arith.constant 1.000000e+00 : f32
    %213 = vector.broadcast %cst_126 : f32 to vector<2x8xf32>
    %214 = arith.addf %212, %213 : vector<2x8xf32>
    %cst_127 = arith.constant 1.100000e+01 : f32
    %215 = vector.broadcast %cst_127 : f32 to vector<2x8xf32>
    %216 = arith.mulf %215, %214 : vector<2x8xf32>
    %cst_128 = arith.constant -2.000000e+01 : f32
    %217 = vector.broadcast %cst_128 : f32 to vector<2x8xf32>
    %218 = arith.addf %217, %216 : vector<2x8xf32>
    %219 = math.exp %218 : vector<2x8xf32>
    %220 = vector.extract_strided_slice %9 {offsets = [4, 0, 0], sizes = [1, 2, 8], strides = [1, 1, 1]} : vector<5x2x8xf32> to vector<1x2x8xf32>
    %221 = vector.shape_cast %220 : vector<1x2x8xf32> to vector<2x8xf32>
    %222 = arith.mulf %219, %221 : vector<2x8xf32>
    %223 = arith.addf %210, %222 : vector<2x8xf32>
    %224 = math.tanh %223 : vector<2x8xf32>
    %cst_129 = arith.constant 1.000000e+00 : f32
    %225 = vector.broadcast %cst_129 : f32 to vector<2x8xf32>
    %226 = arith.mulf %225, %224 : vector<2x8xf32>
    %c0_130 = arith.constant 0 : index
    %c4_131 = arith.constant 4 : index
    %c0_132 = arith.constant 0 : index
    %c0_133 = arith.constant 0 : index
    %227 = vector.load %arg9[%c0_130, %c4_131, %c0_132, %c0_133] : memref<1x5x2x8xf32, #tpu.memory_space<vmem>>, vector<1x1x2x8xf32>
    %228 = vector.shape_cast %227 : vector<1x1x2x8xf32> to vector<2x8xf32>
    %229 = vector.shape_cast %226 : vector<2x8xf32> to vector<1x1x2x8xf32>
    tpu.vector_store %arg9[%c0_130, %c4_131, %c0_132, %c0_133], %229 {strides = array<i32>} : memref<1x5x2x8xf32, #tpu.memory_space<vmem>>, vector<1x1x2x8xf32>,
    return
  }
  func.func @transform_0(%arg0: i32) -> (i32, i32) {
    %c0_i32 = arith.constant 0 : i32
    %c0_i32_0 = arith.constant 0 : i32
    %c0_i32_1 = arith.constant 0 : i32
    return %c0_i32, %c0_i32_0 : i32, i32
  }
  func.func @transform_1(%arg0: i32) -> (i32, i32, i32, i32) {
    %c0_i32 = arith.constant 0 : i32
    %c0_i32_0 = arith.constant 0 : i32
    %c0_i32_1 = arith.constant 0 : i32
    %c0_i32_2 = arith.constant 0 : i32
    return %arg0, %c0_i32, %c0_i32_0, %c0_i32_1 : i32, i32, i32, i32
  }
  func.func @transform_2(%arg0: i32) -> (i32, i32, i32) {
    %c0_i32 = arith.constant 0 : i32
    %c0_i32_0 = arith.constant 0 : i32
    %c0_i32_1 = arith.constant 0 : i32
    return %arg0, %c0_i32, %c0_i32_0 : i32, i32, i32
  }
  func.func @transform_3(%arg0: i32) -> (i32, i32, i32, i32) {
    %c0_i32 = arith.constant 0 : i32
    %c0_i32_0 = arith.constant 0 : i32
    %c0_i32_1 = arith.constant 0 : i32
    %c0_i32_2 = arith.constant 0 : i32
    return %arg0, %c0_i32, %c0_i32_0, %c0_i32_1 : i32, i32, i32, i32
  }
  func.func @transform_4(%arg0: i32) -> (i32, i32, i32) {
    %c0_i32 = arith.constant 0 : i32
    %c0_i32_0 = arith.constant 0 : i32
    %c0_i32_1 = arith.constant 0 : i32
    return %arg0, %c0_i32, %c0_i32_0 : i32, i32, i32
  }
  func.func @transform_5(%arg0: i32) -> (i32, i32, i32, i32) {
    %c0_i32 = arith.constant 0 : i32
    %c0_i32_0 = arith.constant 0 : i32
    %c0_i32_1 = arith.constant 0 : i32
    %c0_i32_2 = arith.constant 0 : i32
    return %arg0, %c0_i32, %c0_i32_0, %c0_i32_1 : i32, i32, i32, i32
  }
  func.func @transform_6(%arg0: i32) -> (i32, i32, i32) {
    %c0_i32 = arith.constant 0 : i32
    %c0_i32_0 = arith.constant 0 : i32
    %c0_i32_1 = arith.constant 0 : i32
    return %arg0, %c0_i32, %c0_i32_0 : i32, i32, i32
  }
  func.func @transform_7(%arg0: i32) -> (i32, i32, i32, i32) {
    %c0_i32 = arith.constant 0 : i32
    %c0_i32_0 = arith.constant 0 : i32
    %c0_i32_1 = arith.constant 0 : i32
    %c0_i32_2 = arith.constant 0 : i32
    return %arg0, %c0_i32, %c0_i32_0, %c0_i32_1 : i32, i32, i32, i32
  }
  func.func @transform_8(%arg0: i32) -> (i32, i32, i32, i32) {
    %c0_i32 = arith.constant 0 : i32
    %c0_i32_0 = arith.constant 0 : i32
    %c0_i32_1 = arith.constant 0 : i32
    %c0_i32_2 = arith.constant 0 : i32
    return %arg0, %c0_i32, %c0_i32_0, %c0_i32_1 : i32, i32, i32, i32
  }
}

</mosaic_0001>

<llo_original>
// kernel: tpu_custom_call.1
$region0: #{tpu_custom_call.1}
  #allocation0 [shape = 'u32[]', space=smem, size = 0x4, offset = 0x4, fixed_abs, tag = 'smem constant byte address 0x4 - core index']
  #allocation1 [shape = 'u32[144,128]{1,0:T(1,128)}', space=vmem, size = 0x12000, scoped, tag = 'internal scratch']
  %s0 = inlined_call_operand.hbm [shape: f32[2,16], index: 0, kind: input, shape index: {}]
  %s1 = inlined_call_operand.hbm [shape: bf16[2,5,16,400], index: 1, kind: input, shape index: {}]
  %s2 = inlined_call_operand.vmem [shape: f32[2,5,400], index: 2, kind: input, shape index: {}]
  %s3 = inlined_call_operand.hbm [shape: bf16[2,5,400,300], index: 3, kind: input, shape index: {}]
  %s4 = inlined_call_operand.vmem [shape: f32[2,5,300], index: 4, kind: input, shape index: {}]
  %s5 = inlined_call_operand.vmem [shape: bf16[2,5,300,16], index: 5, kind: input, shape index: {}]
  %s6 = inlined_call_operand.vmem [shape: f32[2,5,16], index: 6, kind: input, shape index: {}]
  %s7 = inlined_call_operand.hbm [shape: f32[2,5,2,8], index: 7, kind: input, shape index: {}]
  %s8 = inlined_call_operand.hbm [shape: f32[2,5,2,8], index: 8, kind: output, shape index: {}]
  %s9 = sld [smem:[#allocation0]]
  $region81: #{tpu_custom_call.1} parent=0
    _
  %s11 = ssub.s32 1, %s9
  %s12 = scalar_select 0, %s11, %s9
  $region1: #{tpu_custom_call.1} parent=0
    #allocation2 [shape = 'u8[1024]{0}', space=vmem, size = 0x400, scoped, tag = 'input window, operand 0, single buffered']
    #allocation3 [shape = 's32[2]{0}', space=sflag, size = 0x8, scoped, tag = 'scoped memory for tpu_custom_call.1']
    #allocation4 [shape = 's32[2]{0}', space=sflag, size = 0x8, scoped, tag = 'scoped memory for tpu_custom_call.1']
    #allocation5 [shape = 'u8[163840]{0}', space=vmem, size = 0x28000, scoped, tag = 'input window, operand 1']
    #allocation6 [shape = 's32[2]{0}', space=sflag, size = 0x8, scoped, tag = 'scoped memory for tpu_custom_call.1']
    #allocation7 [shape = 'u8[3072000]{0}', space=vmem, size = 0x2ee000, scoped, tag = 'input window, operand 3']
    #allocation8 [shape = 'u8[10240]{0}', space=vmem, size = 0x2800, scoped, tag = 'input window, operand 7']
    #allocation9 [shape = 's32[2]{0}', space=sflag, size = 0x8, scoped, tag = 'scoped memory for tpu_custom_call.1']
    #allocation10 [shape = 'u8[10240]{0}', space=vmem, size = 0x2800, scoped, tag = 'output window, operand 0']
    %13 = vsyncpa [#allocation3], 0
    %14 = vsyncpa [#allocation6], 0
    %s15 = scalar_lea.sflag [#allocation6], 1
    %16 = vsyncpa %s15, 0
    %17 = vsyncpa [#allocation9], 0
    %s18 = scalar_lea.sflag [#allocation9], 1
    %19 = vsyncpa %s18, 0
    %20 = vsyncpa [#allocation4], 0
    %s21 = scalar_lea.sflag [#allocation4], 1
    %22 = vsyncpa %s21, 0
    loop: start=0, step=1, limit=4
    $region2: #{tpu_custom_call.1} parent=1 // loop_pre_header
      _
    $region3: #{tpu_custom_call.1} parent=1 // loop_header
      %s24 = sphi 0, %s28
      %p25 = scmp.ge.s32.totalorder %s24, 4
      %s32 = sphi 0, %s32
      %s34 = sphi 0, %s32
      %s35 = sphi 0, %s34
      %s49 = sphi 0, %s35
      %s55 = sphi 0, %s57
      %s58 = sphi 0, %s55
      %s59 = sphi 0, %s58
      %s75 = sphi 0, %s59
      %s81 = sphi 0, %s83
      %s84 = sphi 0, %s81
      %s85 = sphi 0, %s84
      %s101 = sphi 0, %s85
      %s107 = sphi 0, %s109
      %s110 = sphi 0, %s107
      %s111 = sphi 0, %s110
      %s127 = sphi 0, %s111
      %s133 = sphi 0, %s135
      %s136 = sphi 0, %s133
      %s137 = sphi 0, %s136
      %s153 = sphi 0, %s137
      %s159 = sphi 0, %s161
      %s162 = sphi 0, %s159
      %s163 = sphi 0, %s162
      %s179 = sphi 0, %s163
      %s185 = sphi 0, %s187
      %s188 = sphi 0, %s185
      %s189 = sphi 0, %s188
      %s205 = sphi 0, %s189
      %s211 = sphi 0, %s213
      %s214 = sphi 0, %s211
      %s215 = sphi 0, %s214
      %s231 = sphi 0, %s215
      %s237 = sphi 0, %s239
      %s240 = sphi 0, %s237
      %s241 = sphi 0, %s240
      %s257 = sphi 0, %s241
    $region4: #{tpu_custom_call.1} parent=1 // loop_header_branch
      %27 = sbr.rel (%p25) target = $region8
    $region5: #{tpu_custom_call.1} parent=1 // loop_body
      %s29 = ssub.s32 %s24, 1
      %s30 = ssub.s32 %s24, 2
      %s31 = sadd.s32 %s24, 1
      %s33 = sadd.s32 %s32, 1
      %p36 = scmp.eq.s32.totalorder %s24, 1
      %p37 = scmp.ne.s32.totalorder %s32, %s34
      %p38 = scmp.eq.s32.totalorder %s24, 0
      %p39 = por %p37, %p38
      %p40 = scmp.ne.s32.totalorder %s32, %s34
      %p41 = scmp.eq.s32.totalorder %s29, 1
      %p42 = por %p40, %p41
      %p43 = scmp.ne.s32.totalorder %s34, %s35
      %p44 = scmp.eq.s32.totalorder %s29, 0
      %p45 = por %p43, %p44
      %p46 = scmp.ne.s32.totalorder %s34, %s35
      %p47 = scmp.eq.s32.totalorder %s30, 1
      %p48 = por %p46, %p47
      %p50 = scmp.ne.s32.totalorder %s35, %s49
      %p51 = scmp.eq.s32.totalorder %s30, 0
      %p52 = por %p50, %p51
      %s53 = ssub.s32 %s24, %s31
      %p54 = scmp.eq.s32.totalorder %s53, 0
      %s56 = sadd.s32 %s55, 1
      %s57 = scalar_select %p54, %s55, %s56
      %p60 = pneg %p54
      %p61 = scmp.eq.s32.totalorder %s24, 1
      %p62 = por %p60, %p61
      %p63 = scmp.ne.s32.totalorder %s55, %s58
      %p64 = scmp.eq.s32.totalorder %s24, 0
      %p65 = por %p63, %p64
      %p66 = scmp.ne.s32.totalorder %s55, %s58
      %p67 = scmp.eq.s32.totalorder %s29, 1
      %p68 = por %p66, %p67
      %p69 = scmp.ne.s32.totalorder %s58, %s59
      %p70 = scmp.eq.s32.totalorder %s29, 0
      %p71 = por %p69, %p70
      %p72 = scmp.ne.s32.totalorder %s58, %s59
      %p73 = scmp.eq.s32.totalorder %s30, 1
      %p74 = por %p72, %p73
      %p76 = scmp.ne.s32.totalorder %s59, %s75
      %p77 = scmp.eq.s32.totalorder %s30, 0
      %p78 = por %p76, %p77
      %s79 = ssub.s32 %s24, %s31
      %p80 = scmp.eq.s32.totalorder %s79, 0
      %s82 = sadd.s32 %s81, 1
      %s83 = scalar_select %p80, %s81, %s82
      %p86 = pneg %p80
      %p87 = scmp.eq.s32.totalorder %s24, 1
      %p88 = por %p86, %p87
      %p89 = scmp.ne.s32.totalorder %s81, %s84
      %p90 = scmp.eq.s32.totalorder %s24, 0
      %p91 = por %p89, %p90
      %p92 = scmp.ne.s32.totalorder %s81, %s84
      %p93 = scmp.eq.s32.totalorder %s29, 1
      %p94 = por %p92, %p93
      %p95 = scmp.ne.s32.totalorder %s84, %s85
      %p96 = scmp.eq.s32.totalorder %s29, 0
      %p97 = por %p95, %p96
      %p98 = scmp.ne.s32.totalorder %s84, %s85
      %p99 = scmp.eq.s32.totalorder %s30, 1
      %p100 = por %p98, %p99
      %p102 = scmp.ne.s32.totalorder %s85, %s101
      %p103 = scmp.eq.s32.totalorder %s30, 0
      %p104 = por %p102, %p103
      %s105 = ssub.s32 %s24, %s31
      %p106 = scmp.eq.s32.totalorder %s105, 0
      %s108 = sadd.s32 %s107, 1
      %s109 = scalar_select %p106, %s107, %s108
      %p112 = pneg %p106
      %p113 = scmp.eq.s32.totalorder %s24, 1
      %p114 = por %p112, %p113
      %p115 = scmp.ne.s32.totalorder %s107, %s110
      %p116 = scmp.eq.s32.totalorder %s24, 0
      %p117 = por %p115, %p116
      %p118 = scmp.ne.s32.totalorder %s107, %s110
      %p119 = scmp.eq.s32.totalorder %s29, 1
      %p120 = por %p118, %p119
      %p121 = scmp.ne.s32.totalorder %s110, %s111
      %p122 = scmp.eq.s32.totalorder %s29, 0
      %p123 = por %p121, %p122
      %p124 = scmp.ne.s32.totalorder %s110, %s111
      %p125 = scmp.eq.s32.totalorder %s30, 1
      %p126 = por %p124, %p125
      %p128 = scmp.ne.s32.totalorder %s111, %s127
      %p129 = scmp.eq.s32.totalorder %s30, 0
      %p130 = por %p128, %p129
      %s131 = ssub.s32 %s24, %s31
      %p132 = scmp.eq.s32.totalorder %s131, 0
      %s134 = sadd.s32 %s133, 1
      %s135 = scalar_select %p132, %s133, %s134
      %p138 = pneg %p132
      %p139 = scmp.eq.s32.totalorder %s24, 1
      %p140 = por %p138, %p139
      %p141 = scmp.ne.s32.totalorder %s133, %s136
      %p142 = scmp.eq.s32.totalorder %s24, 0
      %p143 = por %p141, %p142
      %p144 = scmp.ne.s32.totalorder %s133, %s136
      %p145 = scmp.eq.s32.totalorder %s29, 1
      %p146 = por %p144, %p145
      %p147 = scmp.ne.s32.totalorder %s136, %s137
      %p148 = scmp.eq.s32.totalorder %s29, 0
      %p149 = por %p147, %p148
      %p150 = scmp.ne.s32.totalorder %s136, %s137
      %p151 = scmp.eq.s32.totalorder %s30, 1
      %p152 = por %p150, %p151
      %p154 = scmp.ne.s32.totalorder %s137, %s153
      %p155 = scmp.eq.s32.totalorder %s30, 0
      %p156 = por %p154, %p155
      %s157 = ssub.s32 %s24, %s31
      %p158 = scmp.eq.s32.totalorder %s157, 0
      %s160 = sadd.s32 %s159, 1
      %s161 = scalar_select %p158, %s159, %s160
      %p164 = pneg %p158
      %p165 = scmp.eq.s32.totalorder %s24, 1
      %p166 = por %p164, %p165
      %p167 = scmp.ne.s32.totalorder %s159, %s162
      %p168 = scmp.eq.s32.totalorder %s24, 0
      %p169 = por %p167, %p168
      %p170 = scmp.ne.s32.totalorder %s159, %s162
      %p171 = scmp.eq.s32.totalorder %s29, 1
      %p172 = por %p170, %p171
      %p173 = scmp.ne.s32.totalorder %s162, %s163
      %p174 = scmp.eq.s32.totalorder %s29, 0
      %p175 = por %p173, %p174
      %p176 = scmp.ne.s32.totalorder %s162, %s163
      %p177 = scmp.eq.s32.totalorder %s30, 1
      %p178 = por %p176, %p177
      %p180 = scmp.ne.s32.totalorder %s163, %s179
      %p181 = scmp.eq.s32.totalorder %s30, 0
      %p182 = por %p180, %p181
      %s183 = ssub.s32 %s24, %s31
      %p184 = scmp.eq.s32.totalorder %s183, 0
      %s186 = sadd.s32 %s185, 1
      %s187 = scalar_select %p184, %s185, %s186
      %p190 = pneg %p184
      %p191 = scmp.eq.s32.totalorder %s24, 1
      %p192 = por %p190, %p191
      %p193 = scmp.ne.s32.totalorder %s185, %s188
      %p194 = scmp.eq.s32.totalorder %s24, 0
      %p195 = por %p193, %p194
      %p196 = scmp.ne.s32.totalorder %s185, %s188
      %p197 = scmp.eq.s32.totalorder %s29, 1
      %p198 = por %p196, %p197
      %p199 = scmp.ne.s32.totalorder %s188, %s189
      %p200 = scmp.eq.s32.totalorder %s29, 0
      %p201 = por %p199, %p200
      %p202 = scmp.ne.s32.totalorder %s188, %s189
      %p203 = scmp.eq.s32.totalorder %s30, 1
      %p204 = por %p202, %p203
      %p206 = scmp.ne.s32.totalorder %s189, %s205
      %p207 = scmp.eq.s32.totalorder %s30, 0
      %p208 = por %p206, %p207
      %s209 = ssub.s32 %s24, %s31
      %p210 = scmp.eq.s32.totalorder %s209, 0
      %s212 = sadd.s32 %s211, 1
      %s213 = scalar_select %p210, %s211, %s212
      %p216 = pneg %p210
      %p217 = scmp.eq.s32.totalorder %s24, 1
      %p218 = por %p216, %p217
      %p219 = scmp.ne.s32.totalorder %s211, %s214
      %p220 = scmp.eq.s32.totalorder %s24, 0
      %p221 = por %p219, %p220
      %p222 = scmp.ne.s32.totalorder %s211, %s214
      %p223 = scmp.eq.s32.totalorder %s29, 1
      %p224 = por %p222, %p223
      %p225 = scmp.ne.s32.totalorder %s214, %s215
      %p226 = scmp.eq.s32.totalorder %s29, 0
      %p227 = por %p225, %p226
      %p228 = scmp.ne.s32.totalorder %s214, %s215
      %p229 = scmp.eq.s32.totalorder %s30, 1
      %p230 = por %p228, %p229
      %p232 = scmp.ne.s32.totalorder %s215, %s231
      %p233 = scmp.eq.s32.totalorder %s30, 0
      %p234 = por %p232, %p233
      %s235 = ssub.s32 %s24, %s31
      %p236 = scmp.eq.s32.totalorder %s235, 0
      %s238 = sadd.s32 %s237, 1
      %s239 = scalar_select %p236, %s237, %s238
      %p242 = pneg %p236
      %p243 = scmp.eq.s32.totalorder %s24, 1
      %p244 = por %p242, %p243
      %p245 = scmp.ne.s32.totalorder %s237, %s240
      %p246 = scmp.eq.s32.totalorder %s24, 0
      %p247 = por %p245, %p246
      %p248 = scmp.ne.s32.totalorder %s237, %s240
      %p249 = scmp.eq.s32.totalorder %s29, 1
      %p250 = por %p248, %p249
      %p251 = scmp.ne.s32.totalorder %s240, %s241
      %p252 = scmp.eq.s32.totalorder %s29, 0
      %p253 = por %p251, %p252
      %p254 = scmp.ne.s32.totalorder %s240, %s241
      %p255 = scmp.eq.s32.totalorder %s30, 1
      %p256 = por %p254, %p255
      %p258 = scmp.ne.s32.totalorder %s241, %s257
      %p259 = scmp.eq.s32.totalorder %s30, 0
      %p260 = por %p258, %p259
      %p261 = scmp.le.s32.totalorder 1, %s24
      %p262 = scmp.lt.s32.totalorder %s24, 3
      %p263 = pnand %p261, %p262
      %p264 = pneg %p263
      // Predicated region
      $region9: #{tpu_custom_call.1} parent=5 // pred_check
        _
      $region10: #{tpu_custom_call.1} parent=5 // pred_check_branch
        %266 = sbr.rel (%p263) target = $region12
      $region11: #{tpu_custom_call.1} parent=5 // pred_region
        %s267 = ssub.s32 %s24, 1
        // Predicated region
        $region13: #{tpu_custom_call.1} parent=11 // pred_check
          %p268 = pneg %p45
        $region14: #{tpu_custom_call.1} parent=11 // pred_check_branch
          %270 = sbr.rel (%p268) target = $region16
        $region15: #{tpu_custom_call.1} parent=11 // pred_region
          %s272 = ssub.s32 32, 32
          %273 = vsyncadd [#allocation3], %s272
          %s275 = sshll.u32 [#allocation2], 4
          %s276 = int_to_ptr.vmem [resolvable:$true] %s275
          %278 = dma.hbm_to_vmem [thread:$0]  %s0, 32, %s276, [#allocation3]
        $region16: #{tpu_custom_call.1} parent=11 // pred_fallthru
          _
      $region12: #{tpu_custom_call.1} parent=5 // pred_fallthru
        _
      %p279 = scmp.lt.s32.totalorder %s24, 2
      // Predicated region
      $region17: #{tpu_custom_call.1} parent=5 // pred_check
        %p280 = pneg %p279
      $region18: #{tpu_custom_call.1} parent=5 // pred_check_branch
        %282 = sbr.rel (%p280) target = $region20
      $region19: #{tpu_custom_call.1} parent=5 // pred_region
        // Predicated region
        $region21: #{tpu_custom_call.1} parent=19 // pred_check
          %p283 = pneg %p65
        $region22: #{tpu_custom_call.1} parent=19 // pred_check_branch
          %285 = sbr.rel (%p283) target = $region24
        $region23: #{tpu_custom_call.1} parent=19 // pred_region
          %s286 = sand.u32 %s24, 1
          %s287 = scalar_lea.sflag [#allocation6], %s286
          %s288 = sand.u32 %s55, 1
          %s289 = smul.addr %s288, 160
          %s290 = scalar_lea.vmem [#allocation5], %s289
          %s292 = ssub.s32 2560, 2560
          %293 = vsyncadd %s287, %s292
          %s294 = smul.addr %s24, 40
          %s295 = smul.addr %s294, 64
          %s296 = scalar_lea.hbm %s1, %s295
          %s297 = sshll.u32 %s290, 4
          %s298 = int_to_ptr.vmem [resolvable:$true] %s297
          %303 = dma.hbm_to_vmem [thread:$0]  %s296, 2560, %s298, %s287, 256, 256, 16
        $region24: #{tpu_custom_call.1} parent=19 // pred_fallthru
          _
        // Predicated region
        $region25: #{tpu_custom_call.1} parent=19 // pred_check
          %p304 = pneg %p91
        $region26: #{tpu_custom_call.1} parent=19 // pred_check_branch
          %306 = sbr.rel (%p304) target = $region28
        $region27: #{tpu_custom_call.1} parent=19 // pred_region
          %p307 = scmp.lt.s32.totalorder %s24, 1
          %s308 = scalar_select %p307, %s24, 1
          %s309 = smul.addr %s308, 4
          %s310 = smul.addr %s309, 8
          %s311 = scalar_lea.vmem %s2, %s310
        $region28: #{tpu_custom_call.1} parent=19 // pred_fallthru
          _
        // Predicated region
        $region29: #{tpu_custom_call.1} parent=19 // pred_check
          %p312 = pneg %p117
        $region30: #{tpu_custom_call.1} parent=19 // pred_check_branch
          %314 = sbr.rel (%p312) target = $region32
        $region31: #{tpu_custom_call.1} parent=19 // pred_region
          %s315 = sand.u32 %s24, 1
          %s316 = scalar_lea.sflag [#allocation6], %s315
          %s317 = sand.u32 %s107, 1
          %s318 = smul.addr %s317, 3000
          %s319 = scalar_lea.vmem [#allocation7], %s318
          %s321 = ssub.s32 48000, 48000
          %322 = vsyncadd %s316, %s321
          %s323 = smul.addr %s24, 750
          %s324 = smul.addr %s323, 64
          %s325 = scalar_lea.hbm %s3, %s324
          %s326 = sshll.u32 %s319, 4
          %s327 = int_to_ptr.vmem [resolvable:$true] %s326
          %332 = dma.hbm_to_vmem [thread:$0]  %s325, 48000, %s327, %s316, 192, 192, 12
        $region32: #{tpu_custom_call.1} parent=19 // pred_fallthru
          _
        // Predicated region
        $region33: #{tpu_custom_call.1} parent=19 // pred_check
          %p333 = pneg %p143
        $region34: #{tpu_custom_call.1} parent=19 // pred_check_branch
          %335 = sbr.rel (%p333) target = $region36
        $region35: #{tpu_custom_call.1} parent=19 // pred_region
          %p336 = scmp.lt.s32.totalorder %s24, 1
          %s337 = scalar_select %p336, %s24, 1
          %s338 = smul.addr %s337, 3
          %s339 = smul.addr %s338, 8
          %s340 = scalar_lea.vmem %s4, %s339
        $region36: #{tpu_custom_call.1} parent=19 // pred_fallthru
          _
        // Predicated region
        $region37: #{tpu_custom_call.1} parent=19 // pred_check
          %p341 = pneg %p169
        $region38: #{tpu_custom_call.1} parent=19 // pred_check_branch
          %343 = sbr.rel (%p341) target = $region40
        $region39: #{tpu_custom_call.1} parent=19 // pred_region
          %p344 = scmp.lt.s32.totalorder %s24, 1
          %s345 = scalar_select %p344, %s24, 1
          %s346 = smul.addr %s345, 190
          %s347 = smul.addr %s346, 4
          %s348 = scalar_lea.vmem %s5, %s347
        $region40: #{tpu_custom_call.1} parent=19 // pred_fallthru
          _
        // Predicated region
        $region41: #{tpu_custom_call.1} parent=19 // pred_check
          %p349 = pneg %p195
        $region42: #{tpu_custom_call.1} parent=19 // pred_check_branch
          %351 = sbr.rel (%p349) target = $region44
        $region43: #{tpu_custom_call.1} parent=19 // pred_region
          %p352 = scmp.lt.s32.totalorder %s24, 1
          %s353 = scalar_select %p352, %s24, 1
          %s354 = smul.addr %s353, 8
          %s355 = scalar_lea.vmem %s6, %s354
        $region44: #{tpu_custom_call.1} parent=19 // pred_fallthru
          _
        // Predicated region
        $region45: #{tpu_custom_call.1} parent=19 // pred_check
          %p356 = pneg %p221
        $region46: #{tpu_custom_call.1} parent=19 // pred_check_branch
          %358 = sbr.rel (%p356) target = $region48
        $region47: #{tpu_custom_call.1} parent=19 // pred_region
          %s359 = sand.u32 %s211, 1
          %s360 = scalar_lea.sflag [#allocation9], %s359
          %s361 = sand.u32 %s211, 1
          %s362 = smul.addr %s361, 10
          %s363 = scalar_lea.vmem [#allocation8], %s362
          %s365 = ssub.s32 160, 160
          %366 = vsyncadd %s360, %s365
          %s367 = smul.addr %s24, 5
          %s368 = smul.addr %s367, 32
          %s369 = scalar_lea.hbm %s7, %s368
          %s370 = sshll.u32 %s363, 4
          %s371 = int_to_ptr.vmem [resolvable:$true] %s370
          %376 = dma.hbm_to_vmem [thread:$0]  %s369, 160, %s371, %s360, 32, 32, 2
        $region48: #{tpu_custom_call.1} parent=19 // pred_fallthru
          _
      $region20: #{tpu_custom_call.1} parent=5 // pred_fallthru
        _
      %p377 = scmp.le.s32.totalorder 1, %s24
      %p378 = scmp.lt.s32.totalorder %s24, 3
      %p379 = pnand %p377, %p378
      %p380 = pneg %p379
      // Predicated region
      $region49: #{tpu_custom_call.1} parent=5 // pred_check
        _
      $region50: #{tpu_custom_call.1} parent=5 // pred_check_branch
        %382 = sbr.rel (%p379) target = $region52
      $region51: #{tpu_custom_call.1} parent=5 // pred_region
        %s383 = ssub.s32 %s24, 1
        // Predicated region
        $region53: #{tpu_custom_call.1} parent=51 // pred_check
          %p384 = pneg %p45
        $region54: #{tpu_custom_call.1} parent=51 // pred_check_branch
          %386 = sbr.rel (%p384) target = $region56
        $region55: #{tpu_custom_call.1} parent=51 // pred_region
          %387 = dma.done [#allocation3], 32
        $region56: #{tpu_custom_call.1} parent=51 // pred_fallthru
          _
        %s388 = sand.u32 %s29, 1
        %s389 = scalar_lea.sflag [#allocation6], %s388
        %s390 = sand.u32 %s58, 1
        %s391 = smul.addr %s390, 160
        %s392 = scalar_lea.vmem [#allocation5], %s391
        // Predicated region
        $region57: #{tpu_custom_call.1} parent=51 // pred_check
          %p393 = pneg %p71
        $region58: #{tpu_custom_call.1} parent=51 // pred_check_branch
          %395 = sbr.rel (%p393) target = $region60
        $region59: #{tpu_custom_call.1} parent=51 // pred_region
          %396 = dma.done %s389, 2560
        $region60: #{tpu_custom_call.1} parent=51 // pred_fallthru
          _
        %s397 = sand.u32 %s29, 1
        %s398 = scalar_lea.sflag [#allocation6], %s397
        %s399 = sand.u32 %s110, 1
        %s400 = smul.addr %s399, 3000
        %s401 = scalar_lea.vmem [#allocation7], %s400
        // Predicated region
        $region61: #{tpu_custom_call.1} parent=51 // pred_check
          %p402 = pneg %p123
        $region62: #{tpu_custom_call.1} parent=51 // pred_check_branch
          %404 = sbr.rel (%p402) target = $region64
        $region63: #{tpu_custom_call.1} parent=51 // pred_region
          %405 = dma.done %s398, 48000
        $region64: #{tpu_custom_call.1} parent=51 // pred_fallthru
          _
        %s406 = sand.u32 %s214, 1
        %s407 = scalar_lea.sflag [#allocation9], %s406
        %s408 = sand.u32 %s214, 1
        %s409 = smul.addr %s408, 10
        %s410 = scalar_lea.vmem [#allocation8], %s409
        // Predicated region
        $region65: #{tpu_custom_call.1} parent=51 // pred_check
          %p411 = pneg %p227
        $region66: #{tpu_custom_call.1} parent=51 // pred_check_branch
          %413 = sbr.rel (%p411) target = $region68
        $region67: #{tpu_custom_call.1} parent=51 // pred_region
          %414 = dma.done %s407, 160
        $region68: #{tpu_custom_call.1} parent=51 // pred_fallthru
          _
        %p415 = pneg %p45
        %p416 = pneg %p42
        %s417 = sand.u32 %s29, 1
        %s418 = scalar_lea.sflag [#allocation6], %s417
        %s419 = sand.u32 %s58, 1
        %s420 = smul.addr %s419, 160
        %s421 = scalar_lea.vmem [#allocation5], %s420
        %p422 = pneg %p71
        %p423 = pneg %p68
        %p424 = scmp.lt.s32.totalorder %s29, 1
        %s425 = scalar_select %p424, %s29, 1
        %s426 = smul.addr %s425, 4
        %s427 = smul.addr %s426, 8
        %s428 = scalar_lea.vmem %s2, %s427
        %p429 = pneg %p97
        %p430 = pneg %p94
        %s431 = sand.u32 %s29, 1
        %s432 = scalar_lea.sflag [#allocation6], %s431
        %s433 = sand.u32 %s110, 1
        %s434 = smul.addr %s433, 3000
        %s435 = scalar_lea.vmem [#allocation7], %s434
        %p436 = pneg %p123
        %p437 = pneg %p120
        %p438 = scmp.lt.s32.totalorder %s29, 1
        %s439 = scalar_select %p438, %s29, 1
        %s440 = smul.addr %s439, 3
        %s441 = smul.addr %s440, 8
        %s442 = scalar_lea.vmem %s4, %s441
        %p443 = pneg %p149
        %p444 = pneg %p146
        %p445 = scmp.lt.s32.totalorder %s29, 1
        %s446 = scalar_select %p445, %s29, 1
        %s447 = smul.addr %s446, 190
        %s448 = smul.addr %s447, 4
        %s449 = scalar_lea.vmem %s5, %s448
        %p450 = pneg %p175
        %p451 = pneg %p172
        %p452 = scmp.lt.s32.totalorder %s29, 1
        %s453 = scalar_select %p452, %s29, 1
        %s454 = smul.addr %s453, 8
        %s455 = scalar_lea.vmem %s6, %s454
        %p456 = pneg %p201
        %p457 = pneg %p198
        %s458 = sand.u32 %s214, 1
        %s459 = scalar_lea.sflag [#allocation9], %s458
        %s460 = sand.u32 %s214, 1
        %s461 = smul.addr %s460, 10
        %s462 = scalar_lea.vmem [#allocation8], %s461
        %p463 = pneg %p227
        %p464 = pneg %p224
        %p465 = pneg %p253
        %p466 = pneg %p250
        %s467 = sand.u32 %s240, 1
        %s468 = scalar_lea.sflag [#allocation4], %s467
        %s469 = sand.u32 %s240, 1
        %s470 = smul.addr %s469, 10
        %s471 = scalar_lea.vmem [#allocation10], %s470
        %p472 = scmp.lt.s32.totalorder %s29, 1
        %s473 = scalar_select %p472, %s29, 1
        %s474 = smul.addr %s473, 4
        %s475 = smul.addr %s474, 8
        %s476 = scalar_lea.vmem %s2, %s475
        %p477 = scmp.lt.s32.totalorder %s29, 1
        %s478 = scalar_select %p477, %s29, 1
        %s479 = smul.addr %s478, 3
        %s480 = smul.addr %s479, 8
        %s481 = scalar_lea.vmem %s4, %s480
        %p482 = scmp.lt.s32.totalorder %s29, 1
        %s483 = scalar_select %p482, %s29, 1
        %s484 = smul.addr %s483, 190
        %s485 = smul.addr %s484, 4
        %s486 = scalar_lea.vmem %s5, %s485
        %p487 = scmp.lt.s32.totalorder %s29, 1
        %s488 = scalar_select %p487, %s29, 1
        %s489 = smul.addr %s488, 8
        %s490 = scalar_lea.vmem %s6, %s489
        %v492 = vld [vmem:[#allocation2] sm:$0x3]
        %v493 = vpack.c.bf16 %v492, %v492
        %v494 = vld [vmem:[%s476] sm:$0x1f]
        %v495 = vld [vmem:[%s476 + $0x8] sm:$0x1f]
        %v496 = vld [vmem:[%s476 + $0x10] sm:$0x1f]
        %v497 = vld [vmem:[%s476 + $0x18] sm:$0x1f]
        %v498 = vld [vmem:[%s481] sm:$0x1f]
        %v499 = vld [vmem:[%s481 + $0x8] sm:$0x1f]
        %v500 = vld [vmem:[%s481 + $0x10] sm:$0x1f]
        %v501 = vld [vmem:[%s490] sm:$0x1f]
        %v502 = vld [vmem:[%s410] sm:$0x3]
        %v503 = vld [vmem:[%s410 + $0x2] sm:$0x3]
        %v504 = vld [vmem:[%s410 + $0x4] sm:$0x3]
        %v505 = vld [vmem:[%s410 + $0x6] sm:$0x3]
        %v506 = vld [vmem:[%s410 + $0x8] sm:$0x3]
        %v507 = vld [vmem:[%s392] sm:$0xff]
        %v508 = vld [vmem:[%s392 + $0x8] sm:$0xff]
        %v509 = vld [vmem:[%s392 + $0x10] sm:$0xff]
        %v510 = vld [vmem:[%s392 + $0x18] sm:$0xff]
        %v511 = vlaneseq
        %v512 = vshrl.u32 %v511, 7
        %v513 = vsub.s32 0, %v512
        %v514 = vrot.slane %v494, %v513
        %v515 = vlaneseq
        %v516 = vshrl.u32 %v515, 7
        %v517 = vsub.s32 0, %v516
        %v518 = vrot.slane %v495, %v517
        %v519 = vlaneseq
        %v520 = vshrl.u32 %v519, 7
        %v521 = vsub.s32 0, %v520
        %v522 = vrot.slane %v496, %v521
        %v523 = vlaneseq
        %v524 = vshrl.u32 %v523, 7
        %v525 = vsub.s32 0, %v524
        %v526 = vrot.slane %v497, %v525
        %v531 = vunpack.c.l.b16 %v507
        %v532 = vunpack.c.h.b16 %v507
        %v533 = vunpack.c.l.b16 %v508
        %v534 = vunpack.c.h.b16 %v508
        %v535 = vunpack.c.l.b16 %v509
        %v536 = vunpack.c.h.b16 %v509
        %v537 = vunpack.c.l.b16 %v510
        %v538 = vunpack.c.h.b16 %v510
        %v539 = vpack.c.b16 %v535, %v531
        %v540 = vpack.c.b16 %v536, %v532
        %v541 = vpack.c.b16 %v537, %v533
        %v542 = vpack.c.b16 %v538, %v534
        %vm547 = vcmask 130048
        %v549 = vsel %vm547, %v493, 0
        %551 = vmatprep.subr.bf16.mxu0 0
        %552 = vmatpush1.bf16.msra.mxu0 0
        %553 = vmatprep.subr.bf16.mxu0 0
        %554 = vmatpush1.bf16.msra.mxu0 0
        %555 = vmatprep.subr.bf16.mxu0 0
        %556 = vmatpush1.bf16.msra.mxu0 0
        %557 = vmatprep.subr.bf16.mxu0 0
        %558 = vmatpush1.bf16.msra.mxu0 0
        %559 = vmatprep.subr.bf16.mxu0 0
        %560 = vmatpush1.bf16.msra.mxu0 0
        %561 = vmatprep.subr.bf16.mxu0 0
        %562 = vmatpush1.bf16.msra.mxu0 0
        %563 = vmatprep.subr.bf16.mxu0 0
        %564 = vmatpush1.bf16.msra.mxu0 0
        %565 = vmatprep.subr.bf16.mxu0 %v540
        %566 = vmatpush1.bf16.msra.mxu0 %v539
        %567 = vmatprep.subr.bf16.mxu0 0
        %568 = vmatpush2.bf16.msra.mxu0 0
        %569 = vmatprep.subr.bf16.mxu0 0
        %570 = vmatpush2.bf16.msra.mxu0 0
        %571 = vmatprep.subr.bf16.mxu0 0
        %572 = vmatpush2.bf16.msra.mxu0 0
        %573 = vmatprep.subr.bf16.mxu0 0
        %574 = vmatpush2.bf16.msra.mxu0 0
        %575 = vmatprep.subr.bf16.mxu0 0
        %576 = vmatpush2.bf16.msra.mxu0 0
        %577 = vmatprep.subr.bf16.mxu0 0
        %578 = vmatpush2.bf16.msra.mxu0 0
        %579 = vmatprep.subr.bf16.mxu0 0
        %580 = vmatpush2.bf16.msra.mxu0 0
        %581 = vmatprep.subr.bf16.mxu0 0
        %582 = vmatpush2.bf16.msra.mxu0 0
        %583 = vmatprep.mubr.bf16.mxu0 0
        %584 = vmatmul.mubr.bf16.gmra.mxu0 %v549
        %v585 = vpop.f32.mrf.mxu0
        %v586 = vadd.f32 %v514, %v585
        %v587 = vpop.f32.mrf.mxu0
        %v588 = vadd.f32 %v518, %v587
        %v589 = vpop.f32.mrf.mxu0
        %v590 = vpop.f32.mrf.mxu0
        %591 = vdwg.mxu0
        %592 = vmatprep.subr.bf16.mxu0 0
        %593 = vmatpush1.bf16.msra.mxu0 0
        %594 = vmatprep.subr.bf16.mxu0 0
        %595 = vmatpush1.bf16.msra.mxu0 0
        %596 = vmatprep.subr.bf16.mxu0 0
        %597 = vmatpush1.bf16.msra.mxu0 0
        %598 = vmatprep.subr.bf16.mxu0 0
        %599 = vmatpush1.bf16.msra.mxu0 0
        %600 = vmatprep.subr.bf16.mxu0 0
        %601 = vmatpush1.bf16.msra.mxu0 0
        %602 = vmatprep.subr.bf16.mxu0 0
        %603 = vmatpush1.bf16.msra.mxu0 0
        %604 = vmatprep.subr.bf16.mxu0 0
        %605 = vmatpush1.bf16.msra.mxu0 0
        %606 = vmatprep.subr.bf16.mxu0 %v542
        %607 = vmatpush1.bf16.msra.mxu0 %v541
        %608 = vmatprep.subr.bf16.mxu0 0
        %609 = vmatpush2.bf16.msra.mxu0 0
        %610 = vmatprep.subr.bf16.mxu0 0
        %611 = vmatpush2.bf16.msra.mxu0 0
        %612 = vmatprep.subr.bf16.mxu0 0
        %613 = vmatpush2.bf16.msra.mxu0 0
        %614 = vmatprep.subr.bf16.mxu0 0
        %615 = vmatpush2.bf16.msra.mxu0 0
        %616 = vmatprep.subr.bf16.mxu0 0
        %617 = vmatpush2.bf16.msra.mxu0 0
        %618 = vmatprep.subr.bf16.mxu0 0
        %619 = vmatpush2.bf16.msra.mxu0 0
        %620 = vmatprep.subr.bf16.mxu0 0
        %621 = vmatpush2.bf16.msra.mxu0 0
        %622 = vmatprep.subr.bf16.mxu0 0
        %623 = vmatpush2.bf16.msra.mxu0 0
        %624 = vmatprep.mubr.bf16.mxu0 0
        %625 = vmatmul.mubr.bf16.gmra.mxu0 %v549
        %v626 = vpop.f32.mrf.mxu0
        %v627 = vadd.f32 %v522, %v626
        %v628 = vpop.f32.mrf.mxu0
        %v629 = vadd.f32 %v526, %v628
        %v630 = vpop.f32.mrf.mxu0
        %v631 = vpop.f32.mrf.mxu0
        %632 = vdwg.mxu0
        %v633 = vmax.f32 %v586, 0.0
        %v634 = vmax.f32 %v588, 0.0
        %v635 = vmax.f32 %v627, 0.0
        %v636 = vmax.f32 %v629, 0.0
        %v637 = vpack.c.bf16 %v633, %v633
        %v638 = vpack.c.bf16 %v634, %v634
        %v639 = vpack.c.bf16 %v635, %v635
        %v640 = vpack.c.bf16 %v636, %v636
        %v641 = vld [vmem:[%s401] sm:$0xff]
        %v642 = vld [vmem:[%s401 + $0x8] sm:$0xf]
        %v643 = vld [vmem:[%s401 + $0xc] sm:$0xff]
        %v644 = vld [vmem:[%s401 + $0x14] sm:$0xf]
        %v645 = vld [vmem:[%s401 + $0x18] sm:$0xff]
        %v646 = vld [vmem:[%s401 + $0x20] sm:$0xf]
        %v647 = vld [vmem:[%s401 + $0x24] sm:$0xff]
        %v648 = vld [vmem:[%s401 + $0x2c] sm:$0xf]
        %v649 = vld [vmem:[%s401 + $0x30] sm:$0xff]
        %v650 = vld [vmem:[%s401 + $0x38] sm:$0xf]
        %v651 = vld [vmem:[%s401 + $0x3c] sm:$0xff]
        %v652 = vld [vmem:[%s401 + $0x44] sm:$0xf]
        %v653 = vld [vmem:[%s401 + $0x48] sm:$0xff]
        %v654 = vld [vmem:[%s401 + $0x50] sm:$0xf]
        %v655 = vld [vmem:[%s401 + $0x54] sm:$0xff]
        %v656 = vld [vmem:[%s401 + $0x5c] sm:$0xf]
        %v657 = vld [vmem:[%s401 + $0x60] sm:$0xff]
        %v658 = vld [vmem:[%s401 + $0x68] sm:$0xf]
        %v659 = vld [vmem:[%s401 + $0x6c] sm:$0xff]
        %v660 = vld [vmem:[%s401 + $0x74] sm:$0xf]
        %v661 = vld [vmem:[%s401 + $0x78] sm:$0xff]
        %v662 = vld [vmem:[%s401 + $0x80] sm:$0xf]
        %v663 = vld [vmem:[%s401 + $0x84] sm:$0xff]
        %v664 = vld [vmem:[%s401 + $0x8c] sm:$0xf]
        %v665 = vld [vmem:[%s401 + $0x90] sm:$0xff]
        %v666 = vld [vmem:[%s401 + $0x98] sm:$0xf]
        %v667 = vld [vmem:[%s401 + $0x9c] sm:$0xff]
        %v668 = vld [vmem:[%s401 + $0xa4] sm:$0xf]
        %v669 = vld [vmem:[%s401 + $0xa8] sm:$0xff]
        %v670 = vld [vmem:[%s401 + $0xb0] sm:$0xf]
        %v671 = vld [vmem:[%s401 + $0xb4] sm:$0xff]
        %v672 = vld [vmem:[%s401 + $0xbc] sm:$0xf]
        %v673 = vld [vmem:[%s401 + $0xc0] sm:$0xff]
        %v674 = vld [vmem:[%s401 + $0xc8] sm:$0xf]
        %v675 = vld [vmem:[%s401 + $0xcc] sm:$0xff]
        %v676 = vld [vmem:[%s401 + $0xd4] sm:$0xf]
        %v677 = vld [vmem:[%s401 + $0xd8] sm:$0xff]
        %v678 = vld [vmem:[%s401 + $0xe0] sm:$0xf]
        %v679 = vld [vmem:[%s401 + $0xe4] sm:$0xff]
        %v680 = vld [vmem:[%s401 + $0xec] sm:$0xf]
        %v681 = vld [vmem:[%s401 + $0xf0] sm:$0xff]
        %v682 = vld [vmem:[%s401 + $0xf8] sm:$0xf]
        %v683 = vld [vmem:[%s401 + $0xfc] sm:$0xff]
        %v684 = vld [vmem:[%s401 + $0x104] sm:$0xf]
        %v685 = vld [vmem:[%s401 + $0x108] sm:$0xff]
        %v686 = vld [vmem:[%s401 + $0x110] sm:$0xf]
        %v687 = vld [vmem:[%s401 + $0x114] sm:$0xff]
        %v688 = vld [vmem:[%s401 + $0x11c] sm:$0xf]
        %v689 = vld [vmem:[%s401 + $0x120] sm:$0xff]
        %v690 = vld [vmem:[%s401 + $0x128] sm:$0xf]
        %v691 = vld [vmem:[%s401 + $0x12c] sm:$0xff]
        %v692 = vld [vmem:[%s401 + $0x134] sm:$0xf]
        %v693 = vld [vmem:[%s401 + $0x138] sm:$0xff]
        %v694 = vld [vmem:[%s401 + $0x140] sm:$0xf]
        %v695 = vld [vmem:[%s401 + $0x144] sm:$0xff]
        %v696 = vld [vmem:[%s401 + $0x14c] sm:$0xf]
        %v697 = vld [vmem:[%s401 + $0x150] sm:$0xff]
        %v698 = vld [vmem:[%s401 + $0x158] sm:$0xf]
        %v699 = vld [vmem:[%s401 + $0x15c] sm:$0xff]
        %v700 = vld [vmem:[%s401 + $0x164] sm:$0xf]
        %v701 = vld [vmem:[%s401 + $0x168] sm:$0xff]
        %v702 = vld [vmem:[%s401 + $0x170] sm:$0xf]
        %v703 = vld [vmem:[%s401 + $0x174] sm:$0xff]
        %v704 = vld [vmem:[%s401 + $0x17c] sm:$0xf]
        %v705 = vld [vmem:[%s401 + $0x180] sm:$0xff]
        %v706 = vld [vmem:[%s401 + $0x188] sm:$0xf]
        %v707 = vld [vmem:[%s401 + $0x18c] sm:$0xff]
        %v708 = vld [vmem:[%s401 + $0x194] sm:$0xf]
        %v709 = vld [vmem:[%s401 + $0x198] sm:$0xff]
        %v710 = vld [vmem:[%s401 + $0x1a0] sm:$0xf]
        %v711 = vld [vmem:[%s401 + $0x1a4] sm:$0xff]
        %v712 = vld [vmem:[%s401 + $0x1ac] sm:$0xf]
        %v713 = vld [vmem:[%s401 + $0x1b0] sm:$0xff]
        %v714 = vld [vmem:[%s401 + $0x1b8] sm:$0xf]
        %v715 = vld [vmem:[%s401 + $0x1bc] sm:$0xff]
        %v716 = vld [vmem:[%s401 + $0x1c4] sm:$0xf]
        %v717 = vld [vmem:[%s401 + $0x1c8] sm:$0xff]
        %v718 = vld [vmem:[%s401 + $0x1d0] sm:$0xf]
        %v719 = vld [vmem:[%s401 + $0x1d4] sm:$0xff]
        %v720 = vld [vmem:[%s401 + $0x1dc] sm:$0xf]
        %v721 = vld [vmem:[%s401 + $0x1e0] sm:$0xff]
        %v722 = vld [vmem:[%s401 + $0x1e8] sm:$0xf]
        %v723 = vld [vmem:[%s401 + $0x1ec] sm:$0xff]
        %v724 = vld [vmem:[%s401 + $0x1f4] sm:$0xf]
        %v725 = vld [vmem:[%s401 + $0x1f8] sm:$0xff]
        %v726 = vld [vmem:[%s401 + $0x200] sm:$0xf]
        %v727 = vld [vmem:[%s401 + $0x204] sm:$0xff]
        %v728 = vld [vmem:[%s401 + $0x20c] sm:$0xf]
        %v729 = vld [vmem:[%s401 + $0x210] sm:$0xff]
        %v730 = vld [vmem:[%s401 + $0x218] sm:$0xf]
        %v731 = vld [vmem:[%s401 + $0x21c] sm:$0xff]
        %v732 = vld [vmem:[%s401 + $0x224] sm:$0xf]
        %v733 = vld [vmem:[%s401 + $0x228] sm:$0xff]
        %v734 = vld [vmem:[%s401 + $0x230] sm:$0xf]
        %v735 = vld [vmem:[%s401 + $0x234] sm:$0xff]
        %v736 = vld [vmem:[%s401 + $0x23c] sm:$0xf]
        %v737 = vld [vmem:[%s401 + $0x240] sm:$0xff]
        %v738 = vld [vmem:[%s401 + $0x248] sm:$0xf]
        %v739 = vld [vmem:[%s401 + $0x24c] sm:$0xff]
        %v740 = vld [vmem:[%s401 + $0x254] sm:$0xf]
        %v741 = vlaneseq
        %v742 = vshrl.u32 %v741, 7
        %v743 = vsub.s32 0, %v742
        %v744 = vrot.slane %v498, %v743
        %v745 = vlaneseq
        %v746 = vshrl.u32 %v745, 7
        %v747 = vsub.s32 0, %v746
        %v748 = vrot.slane %v499, %v747
        %v749 = vlaneseq
        %v750 = vshrl.u32 %v749, 7
        %v751 = vsub.s32 0, %v750
        %v752 = vrot.slane %v500, %v751
        %v853 = vunpack.c.l.b16 %v641
        %v854 = vunpack.c.h.b16 %v641
        %v855 = vunpack.c.l.b16 %v642
        %v856 = vunpack.c.l.b16 %v643
        %v857 = vunpack.c.h.b16 %v643
        %v858 = vunpack.c.l.b16 %v644
        %v859 = vunpack.c.l.b16 %v645
        %v860 = vunpack.c.h.b16 %v645
        %v861 = vunpack.c.l.b16 %v646
        %v862 = vunpack.c.l.b16 %v647
        %v863 = vunpack.c.h.b16 %v647
        %v864 = vunpack.c.l.b16 %v648
        %v865 = vunpack.c.l.b16 %v649
        %v866 = vunpack.c.h.b16 %v649
        %v867 = vunpack.c.l.b16 %v650
        %v868 = vunpack.c.l.b16 %v651
        %v869 = vunpack.c.h.b16 %v651
        %v870 = vunpack.c.l.b16 %v652
        %v871 = vunpack.c.l.b16 %v653
        %v872 = vunpack.c.h.b16 %v653
        %v873 = vunpack.c.l.b16 %v654
        %v874 = vunpack.c.l.b16 %v655
        %v875 = vunpack.c.h.b16 %v655
        %v876 = vunpack.c.l.b16 %v656
        %v877 = vunpack.c.l.b16 %v657
        %v878 = vunpack.c.h.b16 %v657
        %v879 = vunpack.c.l.b16 %v658
        %v880 = vunpack.c.l.b16 %v659
        %v881 = vunpack.c.h.b16 %v659
        %v882 = vunpack.c.l.b16 %v660
        %v883 = vunpack.c.l.b16 %v661
        %v884 = vunpack.c.h.b16 %v661
        %v885 = vunpack.c.l.b16 %v662
        %v886 = vunpack.c.l.b16 %v663
        %v887 = vunpack.c.h.b16 %v663
        %v888 = vunpack.c.l.b16 %v664
        %v889 = vunpack.c.l.b16 %v665
        %v890 = vunpack.c.h.b16 %v665
        %v891 = vunpack.c.l.b16 %v666
        %v892 = vunpack.c.l.b16 %v667
        %v893 = vunpack.c.h.b16 %v667
        %v894 = vunpack.c.l.b16 %v668
        %v895 = vunpack.c.l.b16 %v669
        %v896 = vunpack.c.h.b16 %v669
        %v897 = vunpack.c.l.b16 %v670
        %v898 = vunpack.c.l.b16 %v671
        %v899 = vunpack.c.h.b16 %v671
        %v900 = vunpack.c.l.b16 %v672
        %v901 = vunpack.c.l.b16 %v673
        %v902 = vunpack.c.h.b16 %v673
        %v903 = vunpack.c.l.b16 %v674
        %v904 = vunpack.c.l.b16 %v675
        %v905 = vunpack.c.h.b16 %v675
        %v906 = vunpack.c.l.b16 %v676
        %v907 = vunpack.c.l.b16 %v677
        %v908 = vunpack.c.h.b16 %v677
        %v909 = vunpack.c.l.b16 %v678
        %v910 = vunpack.c.l.b16 %v679
        %v911 = vunpack.c.h.b16 %v679
        %v912 = vunpack.c.l.b16 %v680
        %v913 = vunpack.c.l.b16 %v681
        %v914 = vunpack.c.h.b16 %v681
        %v915 = vunpack.c.l.b16 %v682
        %v916 = vunpack.c.l.b16 %v683
        %v917 = vunpack.c.h.b16 %v683
        %v918 = vunpack.c.l.b16 %v684
        %v919 = vunpack.c.l.b16 %v685
        %v920 = vunpack.c.h.b16 %v685
        %v921 = vunpack.c.l.b16 %v686
        %v922 = vunpack.c.l.b16 %v687
        %v923 = vunpack.c.h.b16 %v687
        %v924 = vunpack.c.l.b16 %v688
        %v925 = vunpack.c.l.b16 %v689
        %v926 = vunpack.c.h.b16 %v689
        %v927 = vunpack.c.l.b16 %v690
        %v928 = vunpack.c.l.b16 %v691
        %v929 = vunpack.c.h.b16 %v691
        %v930 = vunpack.c.l.b16 %v692
        %v931 = vunpack.c.l.b16 %v693
        %v932 = vunpack.c.h.b16 %v693
        %v933 = vunpack.c.l.b16 %v694
        %v934 = vunpack.c.l.b16 %v695
        %v935 = vunpack.c.h.b16 %v695
        %v936 = vunpack.c.l.b16 %v696
        %v937 = vunpack.c.l.b16 %v697
        %v938 = vunpack.c.h.b16 %v697
        %v939 = vunpack.c.l.b16 %v698
        %v940 = vunpack.c.l.b16 %v699
        %v941 = vunpack.c.h.b16 %v699
        %v942 = vunpack.c.l.b16 %v700
        %v943 = vunpack.c.l.b16 %v701
        %v944 = vunpack.c.h.b16 %v701
        %v945 = vunpack.c.l.b16 %v702
        %v946 = vunpack.c.l.b16 %v703
        %v947 = vunpack.c.h.b16 %v703
        %v948 = vunpack.c.l.b16 %v704
        %v949 = vunpack.c.l.b16 %v705
        %v950 = vunpack.c.h.b16 %v705
        %v951 = vunpack.c.l.b16 %v706
        %v952 = vunpack.c.l.b16 %v707
        %v953 = vunpack.c.h.b16 %v707
        %v954 = vunpack.c.l.b16 %v708
        %v955 = vunpack.c.l.b16 %v709
        %v956 = vunpack.c.h.b16 %v709
        %v957 = vunpack.c.l.b16 %v710
        %v958 = vunpack.c.l.b16 %v711
        %v959 = vunpack.c.h.b16 %v711
        %v960 = vunpack.c.l.b16 %v712
        %v961 = vunpack.c.l.b16 %v713
        %v962 = vunpack.c.h.b16 %v713
        %v963 = vunpack.c.l.b16 %v714
        %v964 = vunpack.c.l.b16 %v715
        %v965 = vunpack.c.h.b16 %v715
        %v966 = vunpack.c.l.b16 %v716
        %v967 = vunpack.c.l.b16 %v717
        %v968 = vunpack.c.h.b16 %v717
        %v969 = vunpack.c.l.b16 %v718
        %v970 = vunpack.c.l.b16 %v719
        %v971 = vunpack.c.h.b16 %v719
        %v972 = vunpack.c.l.b16 %v720
        %v973 = vunpack.c.l.b16 %v721
        %v974 = vunpack.c.h.b16 %v721
        %v975 = vunpack.c.l.b16 %v722
        %v976 = vunpack.c.l.b16 %v723
        %v977 = vunpack.c.h.b16 %v723
        %v978 = vunpack.c.l.b16 %v724
        %v979 = vunpack.c.l.b16 %v725
        %v980 = vunpack.c.h.b16 %v725
        %v981 = vunpack.c.l.b16 %v726
        %v982 = vunpack.c.l.b16 %v727
        %v983 = vunpack.c.h.b16 %v727
        %v984 = vunpack.c.l.b16 %v728
        %v985 = vunpack.c.l.b16 %v729
        %v986 = vunpack.c.h.b16 %v729
        %v987 = vunpack.c.l.b16 %v730
        %v988 = vunpack.c.l.b16 %v731
        %v989 = vunpack.c.h.b16 %v731
        %v990 = vunpack.c.l.b16 %v732
        %v991 = vunpack.c.l.b16 %v733
        %v992 = vunpack.c.h.b16 %v733
        %v993 = vunpack.c.l.b16 %v734
        %v994 = vunpack.c.l.b16 %v735
        %v995 = vunpack.c.h.b16 %v735
        %v996 = vunpack.c.l.b16 %v736
        %v997 = vunpack.c.l.b16 %v737
        %v998 = vunpack.c.h.b16 %v737
        %v999 = vunpack.c.l.b16 %v738
        %v1000 = vunpack.c.l.b16 %v739
        %v1001 = vunpack.c.h.b16 %v739
        %v1002 = vunpack.c.l.b16 %v740
        %v1003 = vpack.c.b16 %v856, %v853
        %v1004 = vpack.c.b16 %v857, %v854
        %v1005 = vpack.c.b16 %v858, %v855
        %v1006 = vpack.c.b16 %v862, %v859
        %v1007 = vpack.c.b16 %v863, %v860
        %v1008 = vpack.c.b16 %v864, %v861
        %v1009 = vpack.c.b16 %v868, %v865
        %v1010 = vpack.c.b16 %v869, %v866
        %v1011 = vpack.c.b16 %v870, %v867
        %v1012 = vpack.c.b16 %v874, %v871
        %v1013 = vpack.c.b16 %v875, %v872
        %v1014 = vpack.c.b16 %v876, %v873
        %v1015 = vpack.c.b16 %v880, %v877
        %v1016 = vpack.c.b16 %v881, %v878
        %v1017 = vpack.c.b16 %v882, %v879
        %v1018 = vpack.c.b16 %v886, %v883
        %v1019 = vpack.c.b16 %v887, %v884
        %v1020 = vpack.c.b16 %v888, %v885
        %v1021 = vpack.c.b16 %v892, %v889
        %v1022 = vpack.c.b16 %v893, %v890
        %v1023 = vpack.c.b16 %v894, %v891
        %v1024 = vpack.c.b16 %v898, %v895
        %v1025 = vpack.c.b16 %v899, %v896
        %v1026 = vpack.c.b16 %v900, %v897
        %v1027 = vpack.c.b16 %v904, %v901
        %v1028 = vpack.c.b16 %v905, %v902
        %v1029 = vpack.c.b16 %v906, %v903
        %v1030 = vpack.c.b16 %v910, %v907
        %v1031 = vpack.c.b16 %v911, %v908
        %v1032 = vpack.c.b16 %v912, %v909
        %v1033 = vpack.c.b16 %v916, %v913
        %v1034 = vpack.c.b16 %v917, %v914
        %v1035 = vpack.c.b16 %v918, %v915
        %v1036 = vpack.c.b16 %v922, %v919
        %v1037 = vpack.c.b16 %v923, %v920
        %v1038 = vpack.c.b16 %v924, %v921
        %v1039 = vpack.c.b16 %v928, %v925
        %v1040 = vpack.c.b16 %v929, %v926
        %v1041 = vpack.c.b16 %v930, %v927
        %v1042 = vpack.c.b16 %v934, %v931
        %v1043 = vpack.c.b16 %v935, %v932
        %v1044 = vpack.c.b16 %v936, %v933
        %v1045 = vpack.c.b16 %v940, %v937
        %v1046 = vpack.c.b16 %v941, %v938
        %v1047 = vpack.c.b16 %v942, %v939
        %v1048 = vpack.c.b16 %v946, %v943
        %v1049 = vpack.c.b16 %v947, %v944
        %v1050 = vpack.c.b16 %v948, %v945
        %v1051 = vpack.c.b16 %v952, %v949
        %v1052 = vpack.c.b16 %v953, %v950
        %v1053 = vpack.c.b16 %v954, %v951
        %v1054 = vpack.c.b16 %v958, %v955
        %v1055 = vpack.c.b16 %v959, %v956
        %v1056 = vpack.c.b16 %v960, %v957
        %v1057 = vpack.c.b16 %v964, %v961
        %v1058 = vpack.c.b16 %v965, %v962
        %v1059 = vpack.c.b16 %v966, %v963
        %v1060 = vpack.c.b16 %v970, %v967
        %v1061 = vpack.c.b16 %v971, %v968
        %v1062 = vpack.c.b16 %v972, %v969
        %v1063 = vpack.c.b16 %v976, %v973
        %v1064 = vpack.c.b16 %v977, %v974
        %v1065 = vpack.c.b16 %v978, %v975
        %v1066 = vpack.c.b16 %v982, %v979
        %v1067 = vpack.c.b16 %v983, %v980
        %v1068 = vpack.c.b16 %v984, %v981
        %v1069 = vpack.c.b16 %v988, %v985
        %v1070 = vpack.c.b16 %v989, %v986
        %v1071 = vpack.c.b16 %v990, %v987
        %v1072 = vpack.c.b16 %v994, %v991
        %v1073 = vpack.c.b16 %v995, %v992
        %v1074 = vpack.c.b16 %v996, %v993
        %v1075 = vpack.c.b16 %v1000, %v997
        %v1076 = vpack.c.b16 %v1001, %v998
        %v1077 = vpack.c.b16 %v1002, %v999
        %v1154 = vsel %vm547, %v640, 0
        %1156 = vmatprep.subr.bf16.mxu0 %v1025
        %1157 = vmatpush1.bf16.msra.mxu0 %v1024
        %1158 = vmatprep.subr.bf16.mxu0 %v1022
        %1159 = vmatpush1.bf16.msra.mxu0 %v1021
        %1160 = vmatprep.subr.bf16.mxu0 %v1019
        %1161 = vmatpush1.bf16.msra.mxu0 %v1018
        %1162 = vmatprep.subr.bf16.mxu0 %v1016
        %1163 = vmatpush1.bf16.msra.mxu0 %v1015
        %1164 = vmatprep.subr.bf16.mxu0 %v1013
        %1165 = vmatpush1.bf16.msra.mxu0 %v1012
        %1166 = vmatprep.subr.bf16.mxu0 %v1010
        %1167 = vmatpush1.bf16.msra.mxu0 %v1009
        %1168 = vmatprep.subr.bf16.mxu0 %v1007
        %1169 = vmatpush1.bf16.msra.mxu0 %v1006
        %1170 = vmatprep.subr.bf16.mxu0 %v1004
        %1171 = vmatpush1.bf16.msra.mxu0 %v1003
        %1172 = vmatprep.subr.bf16.mxu0 %v1049
        %1173 = vmatpush2.bf16.msra.mxu0 %v1048
        %1174 = vmatprep.subr.bf16.mxu0 %v1046
        %1175 = vmatpush2.bf16.msra.mxu0 %v1045
        %1176 = vmatprep.subr.bf16.mxu0 %v1043
        %1177 = vmatpush2.bf16.msra.mxu0 %v1042
        %1178 = vmatprep.subr.bf16.mxu0 %v1040
        %1179 = vmatpush2.bf16.msra.mxu0 %v1039
        %1180 = vmatprep.subr.bf16.mxu0 %v1037
        %1181 = vmatpush2.bf16.msra.mxu0 %v1036
        %1182 = vmatprep.subr.bf16.mxu0 %v1034
        %1183 = vmatpush2.bf16.msra.mxu0 %v1033
        %1184 = vmatprep.subr.bf16.mxu0 %v1031
        %1185 = vmatpush2.bf16.msra.mxu0 %v1030
        %1186 = vmatprep.subr.bf16.mxu0 %v1028
        %1187 = vmatpush2.bf16.msra.mxu0 %v1027
        %1188 = vmatprep.mubr.bf16.mxu0 %v638
        %1189 = vmatmul.mubr.bf16.gmra.mxu0 %v637
        %v1190 = vpop.f32.mrf.mxu0
        %v1191 = vadd.f32 %v744, %v1190
        %v1192 = vpop.f32.mrf.mxu0
        %v1193 = vadd.f32 %v748, %v1192
        %v1194 = vpop.f32.mrf.mxu0
        %v1195 = vpop.f32.mrf.mxu0
        %1196 = vdwg.mxu0
        %1197 = vmatprep.subr.bf16.mxu0 %v1073
        %1198 = vmatpush1.bf16.msra.mxu0 %v1072
        %1199 = vmatprep.subr.bf16.mxu0 %v1070
        %1200 = vmatpush1.bf16.msra.mxu0 %v1069
        %1201 = vmatprep.subr.bf16.mxu0 %v1067
        %1202 = vmatpush1.bf16.msra.mxu0 %v1066
        %1203 = vmatprep.subr.bf16.mxu0 %v1064
        %1204 = vmatpush1.bf16.msra.mxu0 %v1063
        %1205 = vmatprep.subr.bf16.mxu0 %v1061
        %1206 = vmatpush1.bf16.msra.mxu0 %v1060
        %1207 = vmatprep.subr.bf16.mxu0 %v1058
        %1208 = vmatpush1.bf16.msra.mxu0 %v1057
        %1209 = vmatprep.subr.bf16.mxu0 %v1055
        %1210 = vmatpush1.bf16.msra.mxu0 %v1054
        %1211 = vmatprep.subr.bf16.mxu0 %v1052
        %1212 = vmatpush1.bf16.msra.mxu0 %v1051
        %1213 = vmatprep.subr.bf16.mxu0 0
        %1214 = vmatpush2.bf16.msra.mxu0 0
        %1215 = vmatprep.subr.bf16.mxu0 0
        %1216 = vmatpush2.bf16.msra.mxu0 0
        %1217 = vmatprep.subr.bf16.mxu0 0
        %1218 = vmatpush2.bf16.msra.mxu0 0
        %1219 = vmatprep.subr.bf16.mxu0 0
        %1220 = vmatpush2.bf16.msra.mxu0 0
        %1221 = vmatprep.subr.bf16.mxu0 0
        %1222 = vmatpush2.bf16.msra.mxu0 0
        %1223 = vmatprep.subr.bf16.mxu0 0
        %1224 = vmatpush2.bf16.msra.mxu0 0
        %1225 = vmatprep.subr.bf16.mxu0 0
        %1226 = vmatpush2.bf16.msra.mxu0 0
        %1227 = vmatprep.subr.bf16.mxu0 %v1076
        %1228 = vmatpush2.bf16.msra.mxu0 %v1075
        %1229 = vmatprep.mubr.bf16.mxu0 %v1154
        %1230 = vmatmul.mubr.bf16.gmra.mxu0 %v639
        %v1231 = vpop.f32.mrf.mxu0
        %v1232 = vadd.f32 %v1191, %v1231
        %v1233 = vpop.f32.mrf.mxu0
        %v1234 = vadd.f32 %v1193, %v1233
        %v1235 = vpop.f32.mrf.mxu0
        %v1236 = vpop.f32.mrf.mxu0
        %1237 = vdwg.mxu0
        %1238 = vmatprep.subr.bf16.mxu0 0
        %1239 = vmatpush1.bf16.msra.mxu0 %v1026
        %1240 = vmatprep.subr.bf16.mxu0 0
        %1241 = vmatpush1.bf16.msra.mxu0 %v1023
        %1242 = vmatprep.subr.bf16.mxu0 0
        %1243 = vmatpush1.bf16.msra.mxu0 %v1020
        %1244 = vmatprep.subr.bf16.mxu0 0
        %1245 = vmatpush1.bf16.msra.mxu0 %v1017
        %1246 = vmatprep.subr.bf16.mxu0 0
        %1247 = vmatpush1.bf16.msra.mxu0 %v1014
        %1248 = vmatprep.subr.bf16.mxu0 0
        %1249 = vmatpush1.bf16.msra.mxu0 %v1011
        %1250 = vmatprep.subr.bf16.mxu0 0
        %1251 = vmatpush1.bf16.msra.mxu0 %v1008
        %1252 = vmatprep.subr.bf16.mxu0 0
        %1253 = vmatpush1.bf16.msra.mxu0 %v1005
        %1254 = vmatprep.subr.bf16.mxu0 0
        %1255 = vmatpush2.bf16.msra.mxu0 %v1050
        %1256 = vmatprep.subr.bf16.mxu0 0
        %1257 = vmatpush2.bf16.msra.mxu0 %v1047
        %1258 = vmatprep.subr.bf16.mxu0 0
        %1259 = vmatpush2.bf16.msra.mxu0 %v1044
        %1260 = vmatprep.subr.bf16.mxu0 0
        %1261 = vmatpush2.bf16.msra.mxu0 %v1041
        %1262 = vmatprep.subr.bf16.mxu0 0
        %1263 = vmatpush2.bf16.msra.mxu0 %v1038
        %1264 = vmatprep.subr.bf16.mxu0 0
        %1265 = vmatpush2.bf16.msra.mxu0 %v1035
        %1266 = vmatprep.subr.bf16.mxu0 0
        %1267 = vmatpush2.bf16.msra.mxu0 %v1032
        %1268 = vmatprep.subr.bf16.mxu0 0
        %1269 = vmatpush2.bf16.msra.mxu0 %v1029
        %1270 = vmatprep.mubr.bf16.mxu0 %v638
        %1271 = vmatmul.mubr.bf16.gmra.mxu0 %v637
        %v1272 = vpop.f32.mrf.mxu0
        %v1273 = vadd.f32 %v752, %v1272
        %v1274 = vpop.f32.mrf.mxu0
        %v1275 = vpop.f32.mrf.mxu0
        %v1276 = vpop.f32.mrf.mxu0
        %1277 = vdwg.mxu0
        %1278 = vmatprep.subr.bf16.mxu0 0
        %1279 = vmatpush1.bf16.msra.mxu0 %v1074
        %1280 = vmatprep.subr.bf16.mxu0 0
        %1281 = vmatpush1.bf16.msra.mxu0 %v1071
        %1282 = vmatprep.subr.bf16.mxu0 0
        %1283 = vmatpush1.bf16.msra.mxu0 %v1068
        %1284 = vmatprep.subr.bf16.mxu0 0
        %1285 = vmatpush1.bf16.msra.mxu0 %v1065
        %1286 = vmatprep.subr.bf16.mxu0 0
        %1287 = vmatpush1.bf16.msra.mxu0 %v1062
        %1288 = vmatprep.subr.bf16.mxu0 0
        %1289 = vmatpush1.bf16.msra.mxu0 %v1059
        %1290 = vmatprep.subr.bf16.mxu0 0
        %1291 = vmatpush1.bf16.msra.mxu0 %v1056
        %1292 = vmatprep.subr.bf16.mxu0 0
        %1293 = vmatpush1.bf16.msra.mxu0 %v1053
        %1294 = vmatprep.subr.bf16.mxu0 0
        %1295 = vmatpush2.bf16.msra.mxu0 0
        %1296 = vmatprep.subr.bf16.mxu0 0
        %1297 = vmatpush2.bf16.msra.mxu0 0
        %1298 = vmatprep.subr.bf16.mxu0 0
        %1299 = vmatpush2.bf16.msra.mxu0 0
        %1300 = vmatprep.subr.bf16.mxu0 0
        %1301 = vmatpush2.bf16.msra.mxu0 0
        %1302 = vmatprep.subr.bf16.mxu0 0
        %1303 = vmatpush2.bf16.msra.mxu0 0
        %1304 = vmatprep.subr.bf16.mxu0 0
        %1305 = vmatpush2.bf16.msra.mxu0 0
        %1306 = vmatprep.subr.bf16.mxu0 0
        %1307 = vmatpush2.bf16.msra.mxu0 0
        %1308 = vmatprep.subr.bf16.mxu0 0
        %1309 = vmatpush2.bf16.msra.mxu0 %v1077
        %1310 = vmatprep.mubr.bf16.mxu0 %v1154
        %1311 = vmatmul.mubr.bf16.gmra.mxu0 %v639
        %v1312 = vpop.f32.mrf.mxu0
        %v1313 = vadd.f32 %v1273, %v1312
        %v1314 = vpop.f32.mrf.mxu0
        %v1315 = vpop.f32.mrf.mxu0
        %v1316 = vpop.f32.mrf.mxu0
        %1317 = vdwg.mxu0
        %v1318 = vmax.f32 %v1232, 0.0
        %v1319 = vmax.f32 %v1234, 0.0
        %v1320 = vmax.f32 %v1313, 0.0
        %v1321 = vpack.c.bf16 %v1318, %v1318
        %v1322 = vpack.c.bf16 %v1319, %v1319
        %v1323 = vpack.c.bf16 %v1320, %v1320
        %v1324 = vld [vmem:[%s486] sm:$0xf]
        %v1325 = vld [vmem:[%s486 + $0x4] sm:$0xf]
        %v1326 = vld [vmem:[%s486 + $0x8] sm:$0xf]
        %v1327 = vld [vmem:[%s486 + $0xc] sm:$0xf]
        %v1328 = vld [vmem:[%s486 + $0x10] sm:$0xf]
        %v1329 = vld [vmem:[%s486 + $0x14] sm:$0xf]
        %v1330 = vld [vmem:[%s486 + $0x18] sm:$0xf]
        %v1331 = vld [vmem:[%s486 + $0x1c] sm:$0xf]
        %v1332 = vld [vmem:[%s486 + $0x20] sm:$0xf]
        %v1333 = vld [vmem:[%s486 + $0x24] sm:$0xf]
        %v1334 = vld [vmem:[%s486 + $0x28] sm:$0xf]
        %v1335 = vld [vmem:[%s486 + $0x2c] sm:$0xf]
        %v1336 = vld [vmem:[%s486 + $0x30] sm:$0xf]
        %v1337 = vld [vmem:[%s486 + $0x34] sm:$0xf]
        %v1338 = vld [vmem:[%s486 + $0x38] sm:$0xf]
        %v1339 = vld [vmem:[%s486 + $0x3c] sm:$0xf]
        %v1340 = vld [vmem:[%s486 + $0x40] sm:$0xf]
        %v1341 = vld [vmem:[%s486 + $0x44] sm:$0xf]
        %v1342 = vld [vmem:[%s486 + $0x48] sm:$0xf]
        %v1343 = vld [vmem:[%s486 + $0x4c] sm:$0xf]
        %v1344 = vld [vmem:[%s486 + $0x50] sm:$0xf]
        %v1345 = vld [vmem:[%s486 + $0x54] sm:$0xf]
        %v1346 = vld [vmem:[%s486 + $0x58] sm:$0xf]
        %v1347 = vld [vmem:[%s486 + $0x5c] sm:$0xf]
        %v1348 = vld [vmem:[%s486 + $0x60] sm:$0xf]
        %v1349 = vld [vmem:[%s486 + $0x64] sm:$0xf]
        %v1350 = vld [vmem:[%s486 + $0x68] sm:$0xf]
        %v1351 = vld [vmem:[%s486 + $0x6c] sm:$0xf]
        %v1352 = vld [vmem:[%s486 + $0x70] sm:$0xf]
        %v1353 = vld [vmem:[%s486 + $0x74] sm:$0xf]
        %v1354 = vld [vmem:[%s486 + $0x78] sm:$0xf]
        %v1355 = vld [vmem:[%s486 + $0x7c] sm:$0xf]
        %v1356 = vld [vmem:[%s486 + $0x80] sm:$0xf]
        %v1357 = vld [vmem:[%s486 + $0x84] sm:$0xf]
        %v1358 = vld [vmem:[%s486 + $0x88] sm:$0xf]
        %v1359 = vld [vmem:[%s486 + $0x8c] sm:$0xf]
        %v1360 = vld [vmem:[%s486 + $0x90] sm:$0xf]
        %v1361 = vld [vmem:[%s486 + $0x94] sm:$0x3]
        %v1362 = vlaneseq
        %v1363 = vshrl.u32 %v1362, 7
        %v1364 = vsub.s32 0, %v1363
        %v1365 = vrot.slane %v501, %v1364
        %v1404 = vunpack.c.l.b16 %v1324
        %v1405 = vunpack.c.l.b16 %v1325
        %v1406 = vunpack.c.l.b16 %v1326
        %v1407 = vunpack.c.l.b16 %v1327
        %v1408 = vunpack.c.l.b16 %v1328
        %v1409 = vunpack.c.l.b16 %v1329
        %v1410 = vunpack.c.l.b16 %v1330
        %v1411 = vunpack.c.l.b16 %v1331
        %v1412 = vunpack.c.l.b16 %v1332
        %v1413 = vunpack.c.l.b16 %v1333
        %v1414 = vunpack.c.l.b16 %v1334
        %v1415 = vunpack.c.l.b16 %v1335
        %v1416 = vunpack.c.l.b16 %v1336
        %v1417 = vunpack.c.l.b16 %v1337
        %v1418 = vunpack.c.l.b16 %v1338
        %v1419 = vunpack.c.l.b16 %v1339
        %v1420 = vunpack.c.l.b16 %v1340
        %v1421 = vunpack.c.l.b16 %v1341
        %v1422 = vunpack.c.l.b16 %v1342
        %v1423 = vunpack.c.l.b16 %v1343
        %v1424 = vunpack.c.l.b16 %v1344
        %v1425 = vunpack.c.l.b16 %v1345
        %v1426 = vunpack.c.l.b16 %v1346
        %v1427 = vunpack.c.l.b16 %v1347
        %v1428 = vunpack.c.l.b16 %v1348
        %v1429 = vunpack.c.l.b16 %v1349
        %v1430 = vunpack.c.l.b16 %v1350
        %v1431 = vunpack.c.l.b16 %v1351
        %v1432 = vunpack.c.l.b16 %v1352
        %v1433 = vunpack.c.l.b16 %v1353
        %v1434 = vunpack.c.l.b16 %v1354
        %v1435 = vunpack.c.l.b16 %v1355
        %v1436 = vunpack.c.l.b16 %v1356
        %v1437 = vunpack.c.l.b16 %v1357
        %v1438 = vunpack.c.l.b16 %v1358
        %v1439 = vunpack.c.l.b16 %v1359
        %v1440 = vunpack.c.l.b16 %v1360
        %v1441 = vunpack.c.l.b16 %v1361
        %v1442 = vpack.c.b16 %v1405, %v1404
        %v1443 = vpack.c.b16 %v1407, %v1406
        %v1444 = vpack.c.b16 %v1409, %v1408
        %v1445 = vpack.c.b16 %v1411, %v1410
        %v1446 = vpack.c.b16 %v1413, %v1412
        %v1447 = vpack.c.b16 %v1415, %v1414
        %v1448 = vpack.c.b16 %v1417, %v1416
        %v1449 = vpack.c.b16 %v1419, %v1418
        %v1450 = vpack.c.b16 %v1421, %v1420
        %v1451 = vpack.c.b16 %v1423, %v1422
        %v1452 = vpack.c.b16 %v1425, %v1424
        %v1453 = vpack.c.b16 %v1427, %v1426
        %v1454 = vpack.c.b16 %v1429, %v1428
        %v1455 = vpack.c.b16 %v1431, %v1430
        %v1456 = vpack.c.b16 %v1433, %v1432
        %v1457 = vpack.c.b16 %v1435, %v1434
        %v1458 = vpack.c.b16 %v1437, %v1436
        %v1459 = vpack.c.b16 %v1439, %v1438
        %v1460 = vpack.c.b16 %v1441, %v1440
        %vm1479 = vcmask 359424
        %v1481 = vsel %vm1479, %v1323, 0
        %vm1483 = vcmask 1045504
        %v1485 = vsel %vm1483, %v1460, 0
        %1487 = vmatprep.subr.bf16.mxu0 0
        %1488 = vmatpush1.bf16.msra.mxu0 %v1449
        %1489 = vmatprep.subr.bf16.mxu0 0
        %1490 = vmatpush1.bf16.msra.mxu0 %v1448
        %1491 = vmatprep.subr.bf16.mxu0 0
        %1492 = vmatpush1.bf16.msra.mxu0 %v1447
        %1493 = vmatprep.subr.bf16.mxu0 0
        %1494 = vmatpush1.bf16.msra.mxu0 %v1446
        %1495 = vmatprep.subr.bf16.mxu0 0
        %1496 = vmatpush1.bf16.msra.mxu0 %v1445
        %1497 = vmatprep.subr.bf16.mxu0 0
        %1498 = vmatpush1.bf16.msra.mxu0 %v1444
        %1499 = vmatprep.subr.bf16.mxu0 0
        %1500 = vmatpush1.bf16.msra.mxu0 %v1443
        %1501 = vmatprep.subr.bf16.mxu0 0
        %1502 = vmatpush1.bf16.msra.mxu0 %v1442
        %1503 = vmatprep.subr.bf16.mxu0 0
        %1504 = vmatpush2.bf16.msra.mxu0 %v1457
        %1505 = vmatprep.subr.bf16.mxu0 0
        %1506 = vmatpush2.bf16.msra.mxu0 %v1456
        %1507 = vmatprep.subr.bf16.mxu0 0
        %1508 = vmatpush2.bf16.msra.mxu0 %v1455
        %1509 = vmatprep.subr.bf16.mxu0 0
        %1510 = vmatpush2.bf16.msra.mxu0 %v1454
        %1511 = vmatprep.subr.bf16.mxu0 0
        %1512 = vmatpush2.bf16.msra.mxu0 %v1453
        %1513 = vmatprep.subr.bf16.mxu0 0
        %1514 = vmatpush2.bf16.msra.mxu0 %v1452
        %1515 = vmatprep.subr.bf16.mxu0 0
        %1516 = vmatpush2.bf16.msra.mxu0 %v1451
        %1517 = vmatprep.subr.bf16.mxu0 0
        %1518 = vmatpush2.bf16.msra.mxu0 %v1450
        %1519 = vmatprep.mubr.bf16.mxu0 %v1322
        %1520 = vmatmul.mubr.bf16.gmra.mxu0 %v1321
        %v1521 = vpop.f32.mrf.mxu0
        %v1522 = vadd.f32 %v1365, %v1521
        %v1523 = vpop.f32.mrf.mxu0
        %v1524 = vpop.f32.mrf.mxu0
        %v1525 = vpop.f32.mrf.mxu0
        %1526 = vdwg.mxu0
        %1527 = vmatprep.subr.bf16.mxu0 0
        %1528 = vmatpush1.bf16.msra.mxu0 0
        %1529 = vmatprep.subr.bf16.mxu0 0
        %1530 = vmatpush1.bf16.msra.mxu0 0
        %1531 = vmatprep.subr.bf16.mxu0 0
        %1532 = vmatpush1.bf16.msra.mxu0 0
        %1533 = vmatprep.subr.bf16.mxu0 0
        %1534 = vmatpush1.bf16.msra.mxu0 0
        %1535 = vmatprep.subr.bf16.mxu0 0
        %1536 = vmatpush1.bf16.msra.mxu0 0
        %1537 = vmatprep.subr.bf16.mxu0 0
        %1538 = vmatpush1.bf16.msra.mxu0 %v1485
        %1539 = vmatprep.subr.bf16.mxu0 0
        %1540 = vmatpush1.bf16.msra.mxu0 %v1459
        %1541 = vmatprep.subr.bf16.mxu0 0
        %1542 = vmatpush1.bf16.msra.mxu0 %v1458
        %1543 = vmatprep.subr.bf16.mxu0 0
        %1544 = vmatpush2.bf16.msra.mxu0 0
        %1545 = vmatprep.subr.bf16.mxu0 0
        %1546 = vmatpush2.bf16.msra.mxu0 0
        %1547 = vmatprep.subr.bf16.mxu0 0
        %1548 = vmatpush2.bf16.msra.mxu0 0
        %1549 = vmatprep.subr.bf16.mxu0 0
        %1550 = vmatpush2.bf16.msra.mxu0 0
        %1551 = vmatprep.subr.bf16.mxu0 0
        %1552 = vmatpush2.bf16.msra.mxu0 0
        %1553 = vmatprep.subr.bf16.mxu0 0
        %1554 = vmatpush2.bf16.msra.mxu0 0
        %1555 = vmatprep.subr.bf16.mxu0 0
        %1556 = vmatpush2.bf16.msra.mxu0 0
        %1557 = vmatprep.subr.bf16.mxu0 0
        %1558 = vmatpush2.bf16.msra.mxu0 0
        %1559 = vmatprep.mubr.bf16.mxu0 0
        %1560 = vmatmul.mubr.bf16.gmra.mxu0 %v1481
        %v1561 = vpop.f32.mrf.mxu0
        %v1562 = vadd.f32 %v1522, %v1561
        %v1563 = vpop.f32.mrf.mxu0
        %v1564 = vpop.f32.mrf.mxu0
        %v1565 = vpop.f32.mrf.mxu0
        %1566 = vdwg.mxu0
        %v1567 = vtanh.pop %v1562
        %v1568 = vadd.f32 %v1567, 1.0
        %v1569 = vmul.f32 %v1568, 11.0
        %v1570 = vadd.f32 %v1569, -20.0
        %v1571 = vmul.f32 %v1570, 1.442695
        %v1572 = vpow.pop %v1571
        %1574 = vrot.lane.b32.xlu0 %v502, 8
        %v1575 = vpop.permute.xlu0 %1574
        %v1577 = vmul.f32 %v1572, %v1575
        %1579 = vrot.lane.b32.xlu0 %v1577, 120
        %v1580 = vpop.permute.xlu0 %1579
        %v1582 = vadd.f32 %v1562, %v1580
        %v1583 = vtanh.pop %v1582
        %vm1584 = vcmask 58368
        %1585 = vst.msk [vmem:[%s471] sm:$0x3] %vm1584, %v1583
        %s1586 = scalar_lea.vmem %s392, 32 [#allocation5]
        %v1587 = vld [vmem:[%s1586] sm:$0xff]
        %v1588 = vld [vmem:[%s1586 + $0x8] sm:$0xff]
        %v1589 = vld [vmem:[%s1586 + $0x10] sm:$0xff]
        %v1590 = vld [vmem:[%s1586 + $0x18] sm:$0xff]
        %v1591 = vlaneseq
        %v1592 = vshrl.u32 %v1591, 7
        %v1593 = vsub.s32 1, %v1592
        %v1594 = vrot.slane %v494, %v1593
        %v1595 = vlaneseq
        %v1596 = vshrl.u32 %v1595, 7
        %v1597 = vsub.s32 1, %v1596
        %v1598 = vrot.slane %v495, %v1597
        %v1599 = vlaneseq
        %v1600 = vshrl.u32 %v1599, 7
        %v1601 = vsub.s32 1, %v1600
        %v1602 = vrot.slane %v496, %v1601
        %v1603 = vlaneseq
        %v1604 = vshrl.u32 %v1603, 7
        %v1605 = vsub.s32 1, %v1604
        %v1606 = vrot.slane %v497, %v1605
        %v1611 = vunpack.c.l.b16 %v1587
        %v1612 = vunpack.c.h.b16 %v1587
        %v1613 = vunpack.c.l.b16 %v1588
        %v1614 = vunpack.c.h.b16 %v1588
        %v1615 = vunpack.c.l.b16 %v1589
        %v1616 = vunpack.c.h.b16 %v1589
        %v1617 = vunpack.c.l.b16 %v1590
        %v1618 = vunpack.c.h.b16 %v1590
        %v1619 = vpack.c.b16 %v1615, %v1611
        %v1620 = vpack.c.b16 %v1616, %v1612
        %v1621 = vpack.c.b16 %v1617, %v1613
        %v1622 = vpack.c.b16 %v1618, %v1614
        %1627 = vmatprep.subr.bf16.mxu0 0
        %1628 = vmatpush1.bf16.msra.mxu0 0
        %1629 = vmatprep.subr.bf16.mxu0 0
        %1630 = vmatpush1.bf16.msra.mxu0 0
        %1631 = vmatprep.subr.bf16.mxu0 0
        %1632 = vmatpush1.bf16.msra.mxu0 0
        %1633 = vmatprep.subr.bf16.mxu0 0
        %1634 = vmatpush1.bf16.msra.mxu0 0
        %1635 = vmatprep.subr.bf16.mxu0 0
        %1636 = vmatpush1.bf16.msra.mxu0 0
        %1637 = vmatprep.subr.bf16.mxu0 0
        %1638 = vmatpush1.bf16.msra.mxu0 0
        %1639 = vmatprep.subr.bf16.mxu0 0
        %1640 = vmatpush1.bf16.msra.mxu0 0
        %1641 = vmatprep.subr.bf16.mxu0 %v1620
        %1642 = vmatpush1.bf16.msra.mxu0 %v1619
        %1643 = vmatprep.subr.bf16.mxu0 0
        %1644 = vmatpush2.bf16.msra.mxu0 0
        %1645 = vmatprep.subr.bf16.mxu0 0
        %1646 = vmatpush2.bf16.msra.mxu0 0
        %1647 = vmatprep.subr.bf16.mxu0 0
        %1648 = vmatpush2.bf16.msra.mxu0 0
        %1649 = vmatprep.subr.bf16.mxu0 0
        %1650 = vmatpush2.bf16.msra.mxu0 0
        %1651 = vmatprep.subr.bf16.mxu0 0
        %1652 = vmatpush2.bf16.msra.mxu0 0
        %1653 = vmatprep.subr.bf16.mxu0 0
        %1654 = vmatpush2.bf16.msra.mxu0 0
        %1655 = vmatprep.subr.bf16.mxu0 0
        %1656 = vmatpush2.bf16.msra.mxu0 0
        %1657 = vmatprep.subr.bf16.mxu0 0
        %1658 = vmatpush2.bf16.msra.mxu0 0
        %1659 = vmatprep.mubr.bf16.mxu0 0
        %1660 = vmatmul.mubr.bf16.gmra.mxu0 %v549
        %v1661 = vpop.f32.mrf.mxu0
        %v1662 = vadd.f32 %v1594, %v1661
        %v1663 = vpop.f32.mrf.mxu0
        %v1664 = vadd.f32 %v1598, %v1663
        %v1665 = vpop.f32.mrf.mxu0
        %v1666 = vpop.f32.mrf.mxu0
        %1667 = vdwg.mxu0
        %1668 = vmatprep.subr.bf16.mxu0 0
        %1669 = vmatpush1.bf16.msra.mxu0 0
        %1670 = vmatprep.subr.bf16.mxu0 0
        %1671 = vmatpush1.bf16.msra.mxu0 0
        %1672 = vmatprep.subr.bf16.mxu0 0
        %1673 = vmatpush1.bf16.msra.mxu0 0
        %1674 = vmatprep.subr.bf16.mxu0 0
        %1675 = vmatpush1.bf16.msra.mxu0 0
        %1676 = vmatprep.subr.bf16.mxu0 0
        %1677 = vmatpush1.bf16.msra.mxu0 0
        %1678 = vmatprep.subr.bf16.mxu0 0
        %1679 = vmatpush1.bf16.msra.mxu0 0
        %1680 = vmatprep.subr.bf16.mxu0 0
        %1681 = vmatpush1.bf16.msra.mxu0 0
        %1682 = vmatprep.subr.bf16.mxu0 %v1622
        %1683 = vmatpush1.bf16.msra.mxu0 %v1621
        %1684 = vmatprep.subr.bf16.mxu0 0
        %1685 = vmatpush2.bf16.msra.mxu0 0
        %1686 = vmatprep.subr.bf16.mxu0 0
        %1687 = vmatpush2.bf16.msra.mxu0 0
        %1688 = vmatprep.subr.bf16.mxu0 0
        %1689 = vmatpush2.bf16.msra.mxu0 0
        %1690 = vmatprep.subr.bf16.mxu0 0
        %1691 = vmatpush2.bf16.msra.mxu0 0
        %1692 = vmatprep.subr.bf16.mxu0 0
        %1693 = vmatpush2.bf16.msra.mxu0 0
        %1694 = vmatprep.subr.bf16.mxu0 0
        %1695 = vmatpush2.bf16.msra.mxu0 0
        %1696 = vmatprep.subr.bf16.mxu0 0
        %1697 = vmatpush2.bf16.msra.mxu0 0
        %1698 = vmatprep.subr.bf16.mxu0 0
        %1699 = vmatpush2.bf16.msra.mxu0 0
        %1700 = vmatprep.mubr.bf16.mxu0 0
        %1701 = vmatmul.mubr.bf16.gmra.mxu0 %v549
        %v1702 = vpop.f32.mrf.mxu0
        %v1703 = vadd.f32 %v1602, %v1702
        %v1704 = vpop.f32.mrf.mxu0
        %v1705 = vadd.f32 %v1606, %v1704
        %v1706 = vpop.f32.mrf.mxu0
        %v1707 = vpop.f32.mrf.mxu0
        %1708 = vdwg.mxu0
        %v1709 = vmax.f32 %v1662, 0.0
        %v1710 = vmax.f32 %v1664, 0.0
        %v1711 = vmax.f32 %v1703, 0.0
        %v1712 = vmax.f32 %v1705, 0.0
        %v1713 = vpack.c.bf16 %v1709, %v1709
        %v1714 = vpack.c.bf16 %v1710, %v1710
        %v1715 = vpack.c.bf16 %v1711, %v1711
        %v1716 = vpack.c.bf16 %v1712, %v1712
        %s1717 = scalar_lea.vmem %s401, 600 [#allocation7]
        %v1718 = vld [vmem:[%s1717] sm:$0xff]
        %v1719 = vld [vmem:[%s1717 + $0x8] sm:$0xf]
        %v1720 = vld [vmem:[%s1717 + $0xc] sm:$0xff]
        %v1721 = vld [vmem:[%s1717 + $0x14] sm:$0xf]
        %v1722 = vld [vmem:[%s1717 + $0x18] sm:$0xff]
        %v1723 = vld [vmem:[%s1717 + $0x20] sm:$0xf]
        %v1724 = vld [vmem:[%s1717 + $0x24] sm:$0xff]
        %v1725 = vld [vmem:[%s1717 + $0x2c] sm:$0xf]
        %v1726 = vld [vmem:[%s1717 + $0x30] sm:$0xff]
        %v1727 = vld [vmem:[%s1717 + $0x38] sm:$0xf]
        %v1728 = vld [vmem:[%s1717 + $0x3c] sm:$0xff]
        %v1729 = vld [vmem:[%s1717 + $0x44] sm:$0xf]
        %v1730 = vld [vmem:[%s1717 + $0x48] sm:$0xff]
        %v1731 = vld [vmem:[%s1717 + $0x50] sm:$0xf]
        %v1732 = vld [vmem:[%s1717 + $0x54] sm:$0xff]
        %v1733 = vld [vmem:[%s1717 + $0x5c] sm:$0xf]
        %v1734 = vld [vmem:[%s1717 + $0x60] sm:$0xff]
        %v1735 = vld [vmem:[%s1717 + $0x68] sm:$0xf]
        %v1736 = vld [vmem:[%s1717 + $0x6c] sm:$0xff]
        %v1737 = vld [vmem:[%s1717 + $0x74] sm:$0xf]
        %v1738 = vld [vmem:[%s1717 + $0x78] sm:$0xff]
        %v1739 = vld [vmem:[%s1717 + $0x80] sm:$0xf]
        %v1740 = vld [vmem:[%s1717 + $0x84] sm:$0xff]
        %v1741 = vld [vmem:[%s1717 + $0x8c] sm:$0xf]
        %v1742 = vld [vmem:[%s1717 + $0x90] sm:$0xff]
        %v1743 = vld [vmem:[%s1717 + $0x98] sm:$0xf]
        %v1744 = vld [vmem:[%s1717 + $0x9c] sm:$0xff]
        %v1745 = vld [vmem:[%s1717 + $0xa4] sm:$0xf]
        %v1746 = vld [vmem:[%s1717 + $0xa8] sm:$0xff]
        %v1747 = vld [vmem:[%s1717 + $0xb0] sm:$0xf]
        %v1748 = vld [vmem:[%s1717 + $0xb4] sm:$0xff]
        %v1749 = vld [vmem:[%s1717 + $0xbc] sm:$0xf]
        %v1750 = vld [vmem:[%s1717 + $0xc0] sm:$0xff]
        %v1751 = vld [vmem:[%s1717 + $0xc8] sm:$0xf]
        %v1752 = vld [vmem:[%s1717 + $0xcc] sm:$0xff]
        %v1753 = vld [vmem:[%s1717 + $0xd4] sm:$0xf]
        %v1754 = vld [vmem:[%s1717 + $0xd8] sm:$0xff]
        %v1755 = vld [vmem:[%s1717 + $0xe0] sm:$0xf]
        %v1756 = vld [vmem:[%s1717 + $0xe4] sm:$0xff]
        %v1757 = vld [vmem:[%s1717 + $0xec] sm:$0xf]
        %v1758 = vld [vmem:[%s1717 + $0xf0] sm:$0xff]
        %v1759 = vld [vmem:[%s1717 + $0xf8] sm:$0xf]
        %v1760 = vld [vmem:[%s1717 + $0xfc] sm:$0xff]
        %v1761 = vld [vmem:[%s1717 + $0x104] sm:$0xf]
        %v1762 = vld [vmem:[%s1717 + $0x108] sm:$0xff]
        %v1763 = vld [vmem:[%s1717 + $0x110] sm:$0xf]
        %v1764 = vld [vmem:[%s1717 + $0x114] sm:$0xff]
        %v1765 = vld [vmem:[%s1717 + $0x11c] sm:$0xf]
        %v1766 = vld [vmem:[%s1717 + $0x120] sm:$0xff]
        %v1767 = vld [vmem:[%s1717 + $0x128] sm:$0xf]
        %v1768 = vld [vmem:[%s1717 + $0x12c] sm:$0xff]
        %v1769 = vld [vmem:[%s1717 + $0x134] sm:$0xf]
        %v1770 = vld [vmem:[%s1717 + $0x138] sm:$0xff]
        %v1771 = vld [vmem:[%s1717 + $0x140] sm:$0xf]
        %v1772 = vld [vmem:[%s1717 + $0x144] sm:$0xff]
        %v1773 = vld [vmem:[%s1717 + $0x14c] sm:$0xf]
        %v1774 = vld [vmem:[%s1717 + $0x150] sm:$0xff]
        %v1775 = vld [vmem:[%s1717 + $0x158] sm:$0xf]
        %v1776 = vld [vmem:[%s1717 + $0x15c] sm:$0xff]
        %v1777 = vld [vmem:[%s1717 + $0x164] sm:$0xf]
        %v1778 = vld [vmem:[%s1717 + $0x168] sm:$0xff]
        %v1779 = vld [vmem:[%s1717 + $0x170] sm:$0xf]
        %v1780 = vld [vmem:[%s1717 + $0x174] sm:$0xff]
        %v1781 = vld [vmem:[%s1717 + $0x17c] sm:$0xf]
        %v1782 = vld [vmem:[%s1717 + $0x180] sm:$0xff]
        %v1783 = vld [vmem:[%s1717 + $0x188] sm:$0xf]
        %v1784 = vld [vmem:[%s1717 + $0x18c] sm:$0xff]
        %v1785 = vld [vmem:[%s1717 + $0x194] sm:$0xf]
        %v1786 = vld [vmem:[%s1717 + $0x198] sm:$0xff]
        %v1787 = vld [vmem:[%s1717 + $0x1a0] sm:$0xf]
        %v1788 = vld [vmem:[%s1717 + $0x1a4] sm:$0xff]
        %v1789 = vld [vmem:[%s1717 + $0x1ac] sm:$0xf]
        %v1790 = vld [vmem:[%s1717 + $0x1b0] sm:$0xff]
        %v1791 = vld [vmem:[%s1717 + $0x1b8] sm:$0xf]
        %v1792 = vld [vmem:[%s1717 + $0x1bc] sm:$0xff]
        %v1793 = vld [vmem:[%s1717 + $0x1c4] sm:$0xf]
        %v1794 = vld [vmem:[%s1717 + $0x1c8] sm:$0xff]
        %v1795 = vld [vmem:[%s1717 + $0x1d0] sm:$0xf]
        %v1796 = vld [vmem:[%s1717 + $0x1d4] sm:$0xff]
        %v1797 = vld [vmem:[%s1717 + $0x1dc] sm:$0xf]
        %v1798 = vld [vmem:[%s1717 + $0x1e0] sm:$0xff]
        %v1799 = vld [vmem:[%s1717 + $0x1e8] sm:$0xf]
        %v1800 = vld [vmem:[%s1717 + $0x1ec] sm:$0xff]
        %v1801 = vld [vmem:[%s1717 + $0x1f4] sm:$0xf]
        %v1802 = vld [vmem:[%s1717 + $0x1f8] sm:$0xff]
        %v1803 = vld [vmem:[%s1717 + $0x200] sm:$0xf]
        %v1804 = vld [vmem:[%s1717 + $0x204] sm:$0xff]
        %v1805 = vld [vmem:[%s1717 + $0x20c] sm:$0xf]
        %v1806 = vld [vmem:[%s1717 + $0x210] sm:$0xff]
        %v1807 = vld [vmem:[%s1717 + $0x218] sm:$0xf]
        %v1808 = vld [vmem:[%s1717 + $0x21c] sm:$0xff]
        %v1809 = vld [vmem:[%s1717 + $0x224] sm:$0xf]
        %v1810 = vld [vmem:[%s1717 + $0x228] sm:$0xff]
        %v1811 = vld [vmem:[%s1717 + $0x230] sm:$0xf]
        %v1812 = vld [vmem:[%s1717 + $0x234] sm:$0xff]
        %v1813 = vld [vmem:[%s1717 + $0x23c] sm:$0xf]
        %v1814 = vld [vmem:[%s1717 + $0x240] sm:$0xff]
        %v1815 = vld [vmem:[%s1717 + $0x248] sm:$0xf]
        %v1816 = vld [vmem:[%s1717 + $0x24c] sm:$0xff]
        %v1817 = vld [vmem:[%s1717 + $0x254] sm:$0xf]
        %v1818 = vlaneseq
        %v1819 = vshrl.u32 %v1818, 7
        %v1820 = vsub.s32 1, %v1819
        %v1821 = vrot.slane %v498, %v1820
        %v1822 = vlaneseq
        %v1823 = vshrl.u32 %v1822, 7
        %v1824 = vsub.s32 1, %v1823
        %v1825 = vrot.slane %v499, %v1824
        %v1826 = vlaneseq
        %v1827 = vshrl.u32 %v1826, 7
        %v1828 = vsub.s32 1, %v1827
        %v1829 = vrot.slane %v500, %v1828
        %v1930 = vunpack.c.l.b16 %v1718
        %v1931 = vunpack.c.h.b16 %v1718
        %v1932 = vunpack.c.l.b16 %v1719
        %v1933 = vunpack.c.l.b16 %v1720
        %v1934 = vunpack.c.h.b16 %v1720
        %v1935 = vunpack.c.l.b16 %v1721
        %v1936 = vunpack.c.l.b16 %v1722
        %v1937 = vunpack.c.h.b16 %v1722
        %v1938 = vunpack.c.l.b16 %v1723
        %v1939 = vunpack.c.l.b16 %v1724
        %v1940 = vunpack.c.h.b16 %v1724
        %v1941 = vunpack.c.l.b16 %v1725
        %v1942 = vunpack.c.l.b16 %v1726
        %v1943 = vunpack.c.h.b16 %v1726
        %v1944 = vunpack.c.l.b16 %v1727
        %v1945 = vunpack.c.l.b16 %v1728
        %v1946 = vunpack.c.h.b16 %v1728
        %v1947 = vunpack.c.l.b16 %v1729
        %v1948 = vunpack.c.l.b16 %v1730
        %v1949 = vunpack.c.h.b16 %v1730
        %v1950 = vunpack.c.l.b16 %v1731
        %v1951 = vunpack.c.l.b16 %v1732
        %v1952 = vunpack.c.h.b16 %v1732
        %v1953 = vunpack.c.l.b16 %v1733
        %v1954 = vunpack.c.l.b16 %v1734
        %v1955 = vunpack.c.h.b16 %v1734
        %v1956 = vunpack.c.l.b16 %v1735
        %v1957 = vunpack.c.l.b16 %v1736
        %v1958 = vunpack.c.h.b16 %v1736
        %v1959 = vunpack.c.l.b16 %v1737
        %v1960 = vunpack.c.l.b16 %v1738
        %v1961 = vunpack.c.h.b16 %v1738
        %v1962 = vunpack.c.l.b16 %v1739
        %v1963 = vunpack.c.l.b16 %v1740
        %v1964 = vunpack.c.h.b16 %v1740
        %v1965 = vunpack.c.l.b16 %v1741
        %v1966 = vunpack.c.l.b16 %v1742
        %v1967 = vunpack.c.h.b16 %v1742
        %v1968 = vunpack.c.l.b16 %v1743
        %v1969 = vunpack.c.l.b16 %v1744
        %v1970 = vunpack.c.h.b16 %v1744
        %v1971 = vunpack.c.l.b16 %v1745
        %v1972 = vunpack.c.l.b16 %v1746
        %v1973 = vunpack.c.h.b16 %v1746
        %v1974 = vunpack.c.l.b16 %v1747
        %v1975 = vunpack.c.l.b16 %v1748
        %v1976 = vunpack.c.h.b16 %v1748
        %v1977 = vunpack.c.l.b16 %v1749
        %v1978 = vunpack.c.l.b16 %v1750
        %v1979 = vunpack.c.h.b16 %v1750
        %v1980 = vunpack.c.l.b16 %v1751
        %v1981 = vunpack.c.l.b16 %v1752
        %v1982 = vunpack.c.h.b16 %v1752
        %v1983 = vunpack.c.l.b16 %v1753
        %v1984 = vunpack.c.l.b16 %v1754
        %v1985 = vunpack.c.h.b16 %v1754
        %v1986 = vunpack.c.l.b16 %v1755
        %v1987 = vunpack.c.l.b16 %v1756
        %v1988 = vunpack.c.h.b16 %v1756
        %v1989 = vunpack.c.l.b16 %v1757
        %v1990 = vunpack.c.l.b16 %v1758
        %v1991 = vunpack.c.h.b16 %v1758
        %v1992 = vunpack.c.l.b16 %v1759
        %v1993 = vunpack.c.l.b16 %v1760
        %v1994 = vunpack.c.h.b16 %v1760
        %v1995 = vunpack.c.l.b16 %v1761
        %v1996 = vunpack.c.l.b16 %v1762
        %v1997 = vunpack.c.h.b16 %v1762
        %v1998 = vunpack.c.l.b16 %v1763
        %v1999 = vunpack.c.l.b16 %v1764
        %v2000 = vunpack.c.h.b16 %v1764
        %v2001 = vunpack.c.l.b16 %v1765
        %v2002 = vunpack.c.l.b16 %v1766
        %v2003 = vunpack.c.h.b16 %v1766
        %v2004 = vunpack.c.l.b16 %v1767
        %v2005 = vunpack.c.l.b16 %v1768
        %v2006 = vunpack.c.h.b16 %v1768
        %v2007 = vunpack.c.l.b16 %v1769
        %v2008 = vunpack.c.l.b16 %v1770
        %v2009 = vunpack.c.h.b16 %v1770
        %v2010 = vunpack.c.l.b16 %v1771
        %v2011 = vunpack.c.l.b16 %v1772
        %v2012 = vunpack.c.h.b16 %v1772
        %v2013 = vunpack.c.l.b16 %v1773
        %v2014 = vunpack.c.l.b16 %v1774
        %v2015 = vunpack.c.h.b16 %v1774
        %v2016 = vunpack.c.l.b16 %v1775
        %v2017 = vunpack.c.l.b16 %v1776
        %v2018 = vunpack.c.h.b16 %v1776
        %v2019 = vunpack.c.l.b16 %v1777
        %v2020 = vunpack.c.l.b16 %v1778
        %v2021 = vunpack.c.h.b16 %v1778
        %v2022 = vunpack.c.l.b16 %v1779
        %v2023 = vunpack.c.l.b16 %v1780
        %v2024 = vunpack.c.h.b16 %v1780
        %v2025 = vunpack.c.l.b16 %v1781
        %v2026 = vunpack.c.l.b16 %v1782
        %v2027 = vunpack.c.h.b16 %v1782
        %v2028 = vunpack.c.l.b16 %v1783
        %v2029 = vunpack.c.l.b16 %v1784
        %v2030 = vunpack.c.h.b16 %v1784
        %v2031 = vunpack.c.l.b16 %v1785
        %v2032 = vunpack.c.l.b16 %v1786
        %v2033 = vunpack.c.h.b16 %v1786
        %v2034 = vunpack.c.l.b16 %v1787
        %v2035 = vunpack.c.l.b16 %v1788
        %v2036 = vunpack.c.h.b16 %v1788
        %v2037 = vunpack.c.l.b16 %v1789
        %v2038 = vunpack.c.l.b16 %v1790
        %v2039 = vunpack.c.h.b16 %v1790
        %v2040 = vunpack.c.l.b16 %v1791
        %v2041 = vunpack.c.l.b16 %v1792
        %v2042 = vunpack.c.h.b16 %v1792
        %v2043 = vunpack.c.l.b16 %v1793
        %v2044 = vunpack.c.l.b16 %v1794
        %v2045 = vunpack.c.h.b16 %v1794
        %v2046 = vunpack.c.l.b16 %v1795
        %v2047 = vunpack.c.l.b16 %v1796
        %v2048 = vunpack.c.h.b16 %v1796
        %v2049 = vunpack.c.l.b16 %v1797
        %v2050 = vunpack.c.l.b16 %v1798
        %v2051 = vunpack.c.h.b16 %v1798
        %v2052 = vunpack.c.l.b16 %v1799
        %v2053 = vunpack.c.l.b16 %v1800
        %v2054 = vunpack.c.h.b16 %v1800
        %v2055 = vunpack.c.l.b16 %v1801
        %v2056 = vunpack.c.l.b16 %v1802
        %v2057 = vunpack.c.h.b16 %v1802
        %v2058 = vunpack.c.l.b16 %v1803
        %v2059 = vunpack.c.l.b16 %v1804
        %v2060 = vunpack.c.h.b16 %v1804
        %v2061 = vunpack.c.l.b16 %v1805
        %v2062 = vunpack.c.l.b16 %v1806
        %v2063 = vunpack.c.h.b16 %v1806
        %v2064 = vunpack.c.l.b16 %v1807
        %v2065 = vunpack.c.l.b16 %v1808
        %v2066 = vunpack.c.h.b16 %v1808
        %v2067 = vunpack.c.l.b16 %v1809
        %v2068 = vunpack.c.l.b16 %v1810
        %v2069 = vunpack.c.h.b16 %v1810
        %v2070 = vunpack.c.l.b16 %v1811
        %v2071 = vunpack.c.l.b16 %v1812
        %v2072 = vunpack.c.h.b16 %v1812
        %v2073 = vunpack.c.l.b16 %v1813
        %v2074 = vunpack.c.l.b16 %v1814
        %v2075 = vunpack.c.h.b16 %v1814
        %v2076 = vunpack.c.l.b16 %v1815
        %v2077 = vunpack.c.l.b16 %v1816
        %v2078 = vunpack.c.h.b16 %v1816
        %v2079 = vunpack.c.l.b16 %v1817
        %v2080 = vpack.c.b16 %v1933, %v1930
        %v2081 = vpack.c.b16 %v1934, %v1931
        %v2082 = vpack.c.b16 %v1935, %v1932
        %v2083 = vpack.c.b16 %v1939, %v1936
        %v2084 = vpack.c.b16 %v1940, %v1937
        %v2085 = vpack.c.b16 %v1941, %v1938
        %v2086 = vpack.c.b16 %v1945, %v1942
        %v2087 = vpack.c.b16 %v1946, %v1943
        %v2088 = vpack.c.b16 %v1947, %v1944
        %v2089 = vpack.c.b16 %v1951, %v1948
        %v2090 = vpack.c.b16 %v1952, %v1949
        %v2091 = vpack.c.b16 %v1953, %v1950
        %v2092 = vpack.c.b16 %v1957, %v1954
        %v2093 = vpack.c.b16 %v1958, %v1955
        %v2094 = vpack.c.b16 %v1959, %v1956
        %v2095 = vpack.c.b16 %v1963, %v1960
        %v2096 = vpack.c.b16 %v1964, %v1961
        %v2097 = vpack.c.b16 %v1965, %v1962
        %v2098 = vpack.c.b16 %v1969, %v1966
        %v2099 = vpack.c.b16 %v1970, %v1967
        %v2100 = vpack.c.b16 %v1971, %v1968
        %v2101 = vpack.c.b16 %v1975, %v1972
        %v2102 = vpack.c.b16 %v1976, %v1973
        %v2103 = vpack.c.b16 %v1977, %v1974
        %v2104 = vpack.c.b16 %v1981, %v1978
        %v2105 = vpack.c.b16 %v1982, %v1979
        %v2106 = vpack.c.b16 %v1983, %v1980
        %v2107 = vpack.c.b16 %v1987, %v1984
        %v2108 = vpack.c.b16 %v1988, %v1985
        %v2109 = vpack.c.b16 %v1989, %v1986
        %v2110 = vpack.c.b16 %v1993, %v1990
        %v2111 = vpack.c.b16 %v1994, %v1991
        %v2112 = vpack.c.b16 %v1995, %v1992
        %v2113 = vpack.c.b16 %v1999, %v1996
        %v2114 = vpack.c.b16 %v2000, %v1997
        %v2115 = vpack.c.b16 %v2001, %v1998
        %v2116 = vpack.c.b16 %v2005, %v2002
        %v2117 = vpack.c.b16 %v2006, %v2003
        %v2118 = vpack.c.b16 %v2007, %v2004
        %v2119 = vpack.c.b16 %v2011, %v2008
        %v2120 = vpack.c.b16 %v2012, %v2009
        %v2121 = vpack.c.b16 %v2013, %v2010
        %v2122 = vpack.c.b16 %v2017, %v2014
        %v2123 = vpack.c.b16 %v2018, %v2015
        %v2124 = vpack.c.b16 %v2019, %v2016
        %v2125 = vpack.c.b16 %v2023, %v2020
        %v2126 = vpack.c.b16 %v2024, %v2021
        %v2127 = vpack.c.b16 %v2025, %v2022
        %v2128 = vpack.c.b16 %v2029, %v2026
        %v2129 = vpack.c.b16 %v2030, %v2027
        %v2130 = vpack.c.b16 %v2031, %v2028
        %v2131 = vpack.c.b16 %v2035, %v2032
        %v2132 = vpack.c.b16 %v2036, %v2033
        %v2133 = vpack.c.b16 %v2037, %v2034
        %v2134 = vpack.c.b16 %v2041, %v2038
        %v2135 = vpack.c.b16 %v2042, %v2039
        %v2136 = vpack.c.b16 %v2043, %v2040
        %v2137 = vpack.c.b16 %v2047, %v2044
        %v2138 = vpack.c.b16 %v2048, %v2045
        %v2139 = vpack.c.b16 %v2049, %v2046
        %v2140 = vpack.c.b16 %v2053, %v2050
        %v2141 = vpack.c.b16 %v2054, %v2051
        %v2142 = vpack.c.b16 %v2055, %v2052
        %v2143 = vpack.c.b16 %v2059, %v2056
        %v2144 = vpack.c.b16 %v2060, %v2057
        %v2145 = vpack.c.b16 %v2061, %v2058
        %v2146 = vpack.c.b16 %v2065, %v2062
        %v2147 = vpack.c.b16 %v2066, %v2063
        %v2148 = vpack.c.b16 %v2067, %v2064
        %v2149 = vpack.c.b16 %v2071, %v2068
        %v2150 = vpack.c.b16 %v2072, %v2069
        %v2151 = vpack.c.b16 %v2073, %v2070
        %v2152 = vpack.c.b16 %v2077, %v2074
        %v2153 = vpack.c.b16 %v2078, %v2075
        %v2154 = vpack.c.b16 %v2079, %v2076
        %v2231 = vsel %vm547, %v1716, 0
        %2233 = vmatprep.subr.bf16.mxu0 %v2102
        %2234 = vmatpush1.bf16.msra.mxu0 %v2101
        %2235 = vmatprep.subr.bf16.mxu0 %v2099
        %2236 = vmatpush1.bf16.msra.mxu0 %v2098
        %2237 = vmatprep.subr.bf16.mxu0 %v2096
        %2238 = vmatpush1.bf16.msra.mxu0 %v2095
        %2239 = vmatprep.subr.bf16.mxu0 %v2093
        %2240 = vmatpush1.bf16.msra.mxu0 %v2092
        %2241 = vmatprep.subr.bf16.mxu0 %v2090
        %2242 = vmatpush1.bf16.msra.mxu0 %v2089
        %2243 = vmatprep.subr.bf16.mxu0 %v2087
        %2244 = vmatpush1.bf16.msra.mxu0 %v2086
        %2245 = vmatprep.subr.bf16.mxu0 %v2084
        %2246 = vmatpush1.bf16.msra.mxu0 %v2083
        %2247 = vmatprep.subr.bf16.mxu0 %v2081
        %2248 = vmatpush1.bf16.msra.mxu0 %v2080
        %2249 = vmatprep.subr.bf16.mxu0 %v2126
        %2250 = vmatpush2.bf16.msra.mxu0 %v2125
        %2251 = vmatprep.subr.bf16.mxu0 %v2123
        %2252 = vmatpush2.bf16.msra.mxu0 %v2122
        %2253 = vmatprep.subr.bf16.mxu0 %v2120
        %2254 = vmatpush2.bf16.msra.mxu0 %v2119
        %2255 = vmatprep.subr.bf16.mxu0 %v2117
        %2256 = vmatpush2.bf16.msra.mxu0 %v2116
        %2257 = vmatprep.subr.bf16.mxu0 %v2114
        %2258 = vmatpush2.bf16.msra.mxu0 %v2113
        %2259 = vmatprep.subr.bf16.mxu0 %v2111
        %2260 = vmatpush2.bf16.msra.mxu0 %v2110
        %2261 = vmatprep.subr.bf16.mxu0 %v2108
        %2262 = vmatpush2.bf16.msra.mxu0 %v2107
        %2263 = vmatprep.subr.bf16.mxu0 %v2105
        %2264 = vmatpush2.bf16.msra.mxu0 %v2104
        %2265 = vmatprep.mubr.bf16.mxu0 %v1714
        %2266 = vmatmul.mubr.bf16.gmra.mxu0 %v1713
        %v2267 = vpop.f32.mrf.mxu0
        %v2268 = vadd.f32 %v1821, %v2267
        %v2269 = vpop.f32.mrf.mxu0
        %v2270 = vadd.f32 %v1825, %v2269
        %v2271 = vpop.f32.mrf.mxu0
        %v2272 = vpop.f32.mrf.mxu0
        %2273 = vdwg.mxu0
        %2274 = vmatprep.subr.bf16.mxu0 %v2150
        %2275 = vmatpush1.bf16.msra.mxu0 %v2149
        %2276 = vmatprep.subr.bf16.mxu0 %v2147
        %2277 = vmatpush1.bf16.msra.mxu0 %v2146
        %2278 = vmatprep.subr.bf16.mxu0 %v2144
        %2279 = vmatpush1.bf16.msra.mxu0 %v2143
        %2280 = vmatprep.subr.bf16.mxu0 %v2141
        %2281 = vmatpush1.bf16.msra.mxu0 %v2140
        %2282 = vmatprep.subr.bf16.mxu0 %v2138
        %2283 = vmatpush1.bf16.msra.mxu0 %v2137
        %2284 = vmatprep.subr.bf16.mxu0 %v2135
        %2285 = vmatpush1.bf16.msra.mxu0 %v2134
        %2286 = vmatprep.subr.bf16.mxu0 %v2132
        %2287 = vmatpush1.bf16.msra.mxu0 %v2131
        %2288 = vmatprep.subr.bf16.mxu0 %v2129
        %2289 = vmatpush1.bf16.msra.mxu0 %v2128
        %2290 = vmatprep.subr.bf16.mxu0 0
        %2291 = vmatpush2.bf16.msra.mxu0 0
        %2292 = vmatprep.subr.bf16.mxu0 0
        %2293 = vmatpush2.bf16.msra.mxu0 0
        %2294 = vmatprep.subr.bf16.mxu0 0
        %2295 = vmatpush2.bf16.msra.mxu0 0
        %2296 = vmatprep.subr.bf16.mxu0 0
        %2297 = vmatpush2.bf16.msra.mxu0 0
        %2298 = vmatprep.subr.bf16.mxu0 0
        %2299 = vmatpush2.bf16.msra.mxu0 0
        %2300 = vmatprep.subr.bf16.mxu0 0
        %2301 = vmatpush2.bf16.msra.mxu0 0
        %2302 = vmatprep.subr.bf16.mxu0 0
        %2303 = vmatpush2.bf16.msra.mxu0 0
        %2304 = vmatprep.subr.bf16.mxu0 %v2153
        %2305 = vmatpush2.bf16.msra.mxu0 %v2152
        %2306 = vmatprep.mubr.bf16.mxu0 %v2231
        %2307 = vmatmul.mubr.bf16.gmra.mxu0 %v1715
        %v2308 = vpop.f32.mrf.mxu0
        %v2309 = vadd.f32 %v2268, %v2308
        %v2310 = vpop.f32.mrf.mxu0
        %v2311 = vadd.f32 %v2270, %v2310
        %v2312 = vpop.f32.mrf.mxu0
        %v2313 = vpop.f32.mrf.mxu0
        %2314 = vdwg.mxu0
        %2315 = vmatprep.subr.bf16.mxu0 0
        %2316 = vmatpush1.bf16.msra.mxu0 %v2103
        %2317 = vmatprep.subr.bf16.mxu0 0
        %2318 = vmatpush1.bf16.msra.mxu0 %v2100
        %2319 = vmatprep.subr.bf16.mxu0 0
        %2320 = vmatpush1.bf16.msra.mxu0 %v2097
        %2321 = vmatprep.subr.bf16.mxu0 0
        %2322 = vmatpush1.bf16.msra.mxu0 %v2094
        %2323 = vmatprep.subr.bf16.mxu0 0
        %2324 = vmatpush1.bf16.msra.mxu0 %v2091
        %2325 = vmatprep.subr.bf16.mxu0 0
        %2326 = vmatpush1.bf16.msra.mxu0 %v2088
        %2327 = vmatprep.subr.bf16.mxu0 0
        %2328 = vmatpush1.bf16.msra.mxu0 %v2085
        %2329 = vmatprep.subr.bf16.mxu0 0
        %2330 = vmatpush1.bf16.msra.mxu0 %v2082
        %2331 = vmatprep.subr.bf16.mxu0 0
        %2332 = vmatpush2.bf16.msra.mxu0 %v2127
        %2333 = vmatprep.subr.bf16.mxu0 0
        %2334 = vmatpush2.bf16.msra.mxu0 %v2124
        %2335 = vmatprep.subr.bf16.mxu0 0
        %2336 = vmatpush2.bf16.msra.mxu0 %v2121
        %2337 = vmatprep.subr.bf16.mxu0 0
        %2338 = vmatpush2.bf16.msra.mxu0 %v2118
        %2339 = vmatprep.subr.bf16.mxu0 0
        %2340 = vmatpush2.bf16.msra.mxu0 %v2115
        %2341 = vmatprep.subr.bf16.mxu0 0
        %2342 = vmatpush2.bf16.msra.mxu0 %v2112
        %2343 = vmatprep.subr.bf16.mxu0 0
        %2344 = vmatpush2.bf16.msra.mxu0 %v2109
        %2345 = vmatprep.subr.bf16.mxu0 0
        %2346 = vmatpush2.bf16.msra.mxu0 %v2106
        %2347 = vmatprep.mubr.bf16.mxu0 %v1714
        %2348 = vmatmul.mubr.bf16.gmra.mxu0 %v1713
        %v2349 = vpop.f32.mrf.mxu0
        %v2350 = vadd.f32 %v1829, %v2349
        %v2351 = vpop.f32.mrf.mxu0
        %v2352 = vpop.f32.mrf.mxu0
        %v2353 = vpop.f32.mrf.mxu0
        %2354 = vdwg.mxu0
        %2355 = vmatprep.subr.bf16.mxu0 0
        %2356 = vmatpush1.bf16.msra.mxu0 %v2151
        %2357 = vmatprep.subr.bf16.mxu0 0
        %2358 = vmatpush1.bf16.msra.mxu0 %v2148
        %2359 = vmatprep.subr.bf16.mxu0 0
        %2360 = vmatpush1.bf16.msra.mxu0 %v2145
        %2361 = vmatprep.subr.bf16.mxu0 0
        %2362 = vmatpush1.bf16.msra.mxu0 %v2142
        %2363 = vmatprep.subr.bf16.mxu0 0
        %2364 = vmatpush1.bf16.msra.mxu0 %v2139
        %2365 = vmatprep.subr.bf16.mxu0 0
        %2366 = vmatpush1.bf16.msra.mxu0 %v2136
        %2367 = vmatprep.subr.bf16.mxu0 0
        %2368 = vmatpush1.bf16.msra.mxu0 %v2133
        %2369 = vmatprep.subr.bf16.mxu0 0
        %2370 = vmatpush1.bf16.msra.mxu0 %v2130
        %2371 = vmatprep.subr.bf16.mxu0 0
        %2372 = vmatpush2.bf16.msra.mxu0 0
        %2373 = vmatprep.subr.bf16.mxu0 0
        %2374 = vmatpush2.bf16.msra.mxu0 0
        %2375 = vmatprep.subr.bf16.mxu0 0
        %2376 = vmatpush2.bf16.msra.mxu0 0
        %2377 = vmatprep.subr.bf16.mxu0 0
        %2378 = vmatpush2.bf16.msra.mxu0 0
        %2379 = vmatprep.subr.bf16.mxu0 0
        %2380 = vmatpush2.bf16.msra.mxu0 0
        %2381 = vmatprep.subr.bf16.mxu0 0
        %2382 = vmatpush2.bf16.msra.mxu0 0
        %2383 = vmatprep.subr.bf16.mxu0 0
        %2384 = vmatpush2.bf16.msra.mxu0 0
        %2385 = vmatprep.subr.bf16.mxu0 0
        %2386 = vmatpush2.bf16.msra.mxu0 %v2154
        %2387 = vmatprep.mubr.bf16.mxu0 %v2231
        %2388 = vmatmul.mubr.bf16.gmra.mxu0 %v1715
        %v2389 = vpop.f32.mrf.mxu0
        %v2390 = vadd.f32 %v2350, %v2389
        %v2391 = vpop.f32.mrf.mxu0
        %v2392 = vpop.f32.mrf.mxu0
        %v2393 = vpop.f32.mrf.mxu0
        %2394 = vdwg.mxu0
        %v2395 = vmax.f32 %v2309, 0.0
        %v2396 = vmax.f32 %v2311, 0.0
        %v2397 = vmax.f32 %v2390, 0.0
        %v2398 = vpack.c.bf16 %v2395, %v2395
        %v2399 = vpack.c.bf16 %v2396, %v2396
        %v2400 = vpack.c.bf16 %v2397, %v2397
        %s2401 = scalar_lea.vmem %s486, 152
        %v2402 = vld [vmem:[%s2401] sm:$0xf]
        %v2403 = vld [vmem:[%s2401 + $0x4] sm:$0xf]
        %v2404 = vld [vmem:[%s2401 + $0x8] sm:$0xf]
        %v2405 = vld [vmem:[%s2401 + $0xc] sm:$0xf]
        %v2406 = vld [vmem:[%s2401 + $0x10] sm:$0xf]
        %v2407 = vld [vmem:[%s2401 + $0x14] sm:$0xf]
        %v2408 = vld [vmem:[%s2401 + $0x18] sm:$0xf]
        %v2409 = vld [vmem:[%s2401 + $0x1c] sm:$0xf]
        %v2410 = vld [vmem:[%s2401 + $0x20] sm:$0xf]
        %v2411 = vld [vmem:[%s2401 + $0x24] sm:$0xf]
        %v2412 = vld [vmem:[%s2401 + $0x28] sm:$0xf]
        %v2413 = vld [vmem:[%s2401 + $0x2c] sm:$0xf]
        %v2414 = vld [vmem:[%s2401 + $0x30] sm:$0xf]
        %v2415 = vld [vmem:[%s2401 + $0x34] sm:$0xf]
        %v2416 = vld [vmem:[%s2401 + $0x38] sm:$0xf]
        %v2417 = vld [vmem:[%s2401 + $0x3c] sm:$0xf]
        %v2418 = vld [vmem:[%s2401 + $0x40] sm:$0xf]
        %v2419 = vld [vmem:[%s2401 + $0x44] sm:$0xf]
        %v2420 = vld [vmem:[%s2401 + $0x48] sm:$0xf]
        %v2421 = vld [vmem:[%s2401 + $0x4c] sm:$0xf]
        %v2422 = vld [vmem:[%s2401 + $0x50] sm:$0xf]
        %v2423 = vld [vmem:[%s2401 + $0x54] sm:$0xf]
        %v2424 = vld [vmem:[%s2401 + $0x58] sm:$0xf]
        %v2425 = vld [vmem:[%s2401 + $0x5c] sm:$0xf]
        %v2426 = vld [vmem:[%s2401 + $0x60] sm:$0xf]
        %v2427 = vld [vmem:[%s2401 + $0x64] sm:$0xf]
        %v2428 = vld [vmem:[%s2401 + $0x68] sm:$0xf]
        %v2429 = vld [vmem:[%s2401 + $0x6c] sm:$0xf]
        %v2430 = vld [vmem:[%s2401 + $0x70] sm:$0xf]
        %v2431 = vld [vmem:[%s2401 + $0x74] sm:$0xf]
        %v2432 = vld [vmem:[%s2401 + $0x78] sm:$0xf]
        %v2433 = vld [vmem:[%s2401 + $0x7c] sm:$0xf]
        %v2434 = vld [vmem:[%s2401 + $0x80] sm:$0xf]
        %v2435 = vld [vmem:[%s2401 + $0x84] sm:$0xf]
        %v2436 = vld [vmem:[%s2401 + $0x88] sm:$0xf]
        %v2437 = vld [vmem:[%s2401 + $0x8c] sm:$0xf]
        %v2438 = vld [vmem:[%s2401 + $0x90] sm:$0xf]
        %v2439 = vld [vmem:[%s2401 + $0x94] sm:$0x3]
        %v2440 = vlaneseq
        %v2441 = vshrl.u32 %v2440, 7
        %v2442 = vsub.s32 1, %v2441
        %v2443 = vrot.slane %v501, %v2442
        %v2482 = vunpack.c.l.b16 %v2402
        %v2483 = vunpack.c.l.b16 %v2403
        %v2484 = vunpack.c.l.b16 %v2404
        %v2485 = vunpack.c.l.b16 %v2405
        %v2486 = vunpack.c.l.b16 %v2406
        %v2487 = vunpack.c.l.b16 %v2407
        %v2488 = vunpack.c.l.b16 %v2408
        %v2489 = vunpack.c.l.b16 %v2409
        %v2490 = vunpack.c.l.b16 %v2410
        %v2491 = vunpack.c.l.b16 %v2411
        %v2492 = vunpack.c.l.b16 %v2412
        %v2493 = vunpack.c.l.b16 %v2413
        %v2494 = vunpack.c.l.b16 %v2414
        %v2495 = vunpack.c.l.b16 %v2415
        %v2496 = vunpack.c.l.b16 %v2416
        %v2497 = vunpack.c.l.b16 %v2417
        %v2498 = vunpack.c.l.b16 %v2418
        %v2499 = vunpack.c.l.b16 %v2419
        %v2500 = vunpack.c.l.b16 %v2420
        %v2501 = vunpack.c.l.b16 %v2421
        %v2502 = vunpack.c.l.b16 %v2422
        %v2503 = vunpack.c.l.b16 %v2423
        %v2504 = vunpack.c.l.b16 %v2424
        %v2505 = vunpack.c.l.b16 %v2425
        %v2506 = vunpack.c.l.b16 %v2426
        %v2507 = vunpack.c.l.b16 %v2427
        %v2508 = vunpack.c.l.b16 %v2428
        %v2509 = vunpack.c.l.b16 %v2429
        %v2510 = vunpack.c.l.b16 %v2430
        %v2511 = vunpack.c.l.b16 %v2431
        %v2512 = vunpack.c.l.b16 %v2432
        %v2513 = vunpack.c.l.b16 %v2433
        %v2514 = vunpack.c.l.b16 %v2434
        %v2515 = vunpack.c.l.b16 %v2435
        %v2516 = vunpack.c.l.b16 %v2436
        %v2517 = vunpack.c.l.b16 %v2437
        %v2518 = vunpack.c.l.b16 %v2438
        %v2519 = vunpack.c.l.b16 %v2439
        %v2520 = vpack.c.b16 %v2483, %v2482
        %v2521 = vpack.c.b16 %v2485, %v2484
        %v2522 = vpack.c.b16 %v2487, %v2486
        %v2523 = vpack.c.b16 %v2489, %v2488
        %v2524 = vpack.c.b16 %v2491, %v2490
        %v2525 = vpack.c.b16 %v2493, %v2492
        %v2526 = vpack.c.b16 %v2495, %v2494
        %v2527 = vpack.c.b16 %v2497, %v2496
        %v2528 = vpack.c.b16 %v2499, %v2498
        %v2529 = vpack.c.b16 %v2501, %v2500
        %v2530 = vpack.c.b16 %v2503, %v2502
        %v2531 = vpack.c.b16 %v2505, %v2504
        %v2532 = vpack.c.b16 %v2507, %v2506
        %v2533 = vpack.c.b16 %v2509, %v2508
        %v2534 = vpack.c.b16 %v2511, %v2510
        %v2535 = vpack.c.b16 %v2513, %v2512
        %v2536 = vpack.c.b16 %v2515, %v2514
        %v2537 = vpack.c.b16 %v2517, %v2516
        %v2538 = vpack.c.b16 %v2519, %v2518
        %v2558 = vsel %vm1479, %v2400, 0
        %v2561 = vsel %vm1483, %v2538, 0
        %2563 = vmatprep.subr.bf16.mxu0 0
        %2564 = vmatpush1.bf16.msra.mxu0 %v2527
        %2565 = vmatprep.subr.bf16.mxu0 0
        %2566 = vmatpush1.bf16.msra.mxu0 %v2526
        %2567 = vmatprep.subr.bf16.mxu0 0
        %2568 = vmatpush1.bf16.msra.mxu0 %v2525
        %2569 = vmatprep.subr.bf16.mxu0 0
        %2570 = vmatpush1.bf16.msra.mxu0 %v2524
        %2571 = vmatprep.subr.bf16.mxu0 0
        %2572 = vmatpush1.bf16.msra.mxu0 %v2523
        %2573 = vmatprep.subr.bf16.mxu0 0
        %2574 = vmatpush1.bf16.msra.mxu0 %v2522
        %2575 = vmatprep.subr.bf16.mxu0 0
        %2576 = vmatpush1.bf16.msra.mxu0 %v2521
        %2577 = vmatprep.subr.bf16.mxu0 0
        %2578 = vmatpush1.bf16.msra.mxu0 %v2520
        %2579 = vmatprep.subr.bf16.mxu0 0
        %2580 = vmatpush2.bf16.msra.mxu0 %v2535
        %2581 = vmatprep.subr.bf16.mxu0 0
        %2582 = vmatpush2.bf16.msra.mxu0 %v2534
        %2583 = vmatprep.subr.bf16.mxu0 0
        %2584 = vmatpush2.bf16.msra.mxu0 %v2533
        %2585 = vmatprep.subr.bf16.mxu0 0
        %2586 = vmatpush2.bf16.msra.mxu0 %v2532
        %2587 = vmatprep.subr.bf16.mxu0 0
        %2588 = vmatpush2.bf16.msra.mxu0 %v2531
        %2589 = vmatprep.subr.bf16.mxu0 0
        %2590 = vmatpush2.bf16.msra.mxu0 %v2530
        %2591 = vmatprep.subr.bf16.mxu0 0
        %2592 = vmatpush2.bf16.msra.mxu0 %v2529
        %2593 = vmatprep.subr.bf16.mxu0 0
        %2594 = vmatpush2.bf16.msra.mxu0 %v2528
        %2595 = vmatprep.mubr.bf16.mxu0 %v2399
        %2596 = vmatmul.mubr.bf16.gmra.mxu0 %v2398
        %v2597 = vpop.f32.mrf.mxu0
        %v2598 = vadd.f32 %v2443, %v2597
        %v2599 = vpop.f32.mrf.mxu0
        %v2600 = vpop.f32.mrf.mxu0
        %v2601 = vpop.f32.mrf.mxu0
        %2602 = vdwg.mxu0
        %2603 = vmatprep.subr.bf16.mxu0 0
        %2604 = vmatpush1.bf16.msra.mxu0 0
        %2605 = vmatprep.subr.bf16.mxu0 0
        %2606 = vmatpush1.bf16.msra.mxu0 0
        %2607 = vmatprep.subr.bf16.mxu0 0
        %2608 = vmatpush1.bf16.msra.mxu0 0
        %2609 = vmatprep.subr.bf16.mxu0 0
        %2610 = vmatpush1.bf16.msra.mxu0 0
        %2611 = vmatprep.subr.bf16.mxu0 0
        %2612 = vmatpush1.bf16.msra.mxu0 0
        %2613 = vmatprep.subr.bf16.mxu0 0
        %2614 = vmatpush1.bf16.msra.mxu0 %v2561
        %2615 = vmatprep.subr.bf16.mxu0 0
        %2616 = vmatpush1.bf16.msra.mxu0 %v2537
        %2617 = vmatprep.subr.bf16.mxu0 0
        %2618 = vmatpush1.bf16.msra.mxu0 %v2536
        %2619 = vmatprep.subr.bf16.mxu0 0
        %2620 = vmatpush2.bf16.msra.mxu0 0
        %2621 = vmatprep.subr.bf16.mxu0 0
        %2622 = vmatpush2.bf16.msra.mxu0 0
        %2623 = vmatprep.subr.bf16.mxu0 0
        %2624 = vmatpush2.bf16.msra.mxu0 0
        %2625 = vmatprep.subr.bf16.mxu0 0
        %2626 = vmatpush2.bf16.msra.mxu0 0
        %2627 = vmatprep.subr.bf16.mxu0 0
        %2628 = vmatpush2.bf16.msra.mxu0 0
        %2629 = vmatprep.subr.bf16.mxu0 0
        %2630 = vmatpush2.bf16.msra.mxu0 0
        %2631 = vmatprep.subr.bf16.mxu0 0
        %2632 = vmatpush2.bf16.msra.mxu0 0
        %2633 = vmatprep.subr.bf16.mxu0 0
        %2634 = vmatpush2.bf16.msra.mxu0 0
        %2635 = vmatprep.mubr.bf16.mxu0 0
        %2636 = vmatmul.mubr.bf16.gmra.mxu0 %v2558
        %v2637 = vpop.f32.mrf.mxu0
        %v2638 = vadd.f32 %v2598, %v2637
        %v2639 = vpop.f32.mrf.mxu0
        %v2640 = vpop.f32.mrf.mxu0
        %v2641 = vpop.f32.mrf.mxu0
        %2642 = vdwg.mxu0
        %v2643 = vtanh.pop %v2638
        %v2644 = vadd.f32 %v2643, 1.0
        %v2645 = vmul.f32 %v2644, 11.0
        %v2646 = vadd.f32 %v2645, -20.0
        %v2647 = vmul.f32 %v2646, 1.442695
        %v2648 = vpow.pop %v2647
        %2650 = vrot.lane.b32.xlu0 %v503, 8
        %v2651 = vpop.permute.xlu0 %2650
        %v2653 = vmul.f32 %v2648, %v2651
        %2655 = vrot.lane.b32.xlu0 %v2653, 120
        %v2656 = vpop.permute.xlu0 %2655
        %v2658 = vadd.f32 %v2638, %v2656
        %v2659 = vtanh.pop %v2658
        %s2660 = scalar_lea.vmem %s471, 2 [#allocation10]
        %2661 = vst.msk [vmem:[%s2660] sm:$0x3] %vm1584, %v2659
        %s2662 = scalar_lea.vmem %s392, 64 [#allocation5]
        %v2663 = vld [vmem:[%s2662] sm:$0xff]
        %v2664 = vld [vmem:[%s2662 + $0x8] sm:$0xff]
        %v2665 = vld [vmem:[%s2662 + $0x10] sm:$0xff]
        %v2666 = vld [vmem:[%s2662 + $0x18] sm:$0xff]
        %v2667 = vlaneseq
        %v2668 = vshrl.u32 %v2667, 7
        %v2669 = vsub.s32 2, %v2668
        %v2670 = vrot.slane %v494, %v2669
        %v2671 = vlaneseq
        %v2672 = vshrl.u32 %v2671, 7
        %v2673 = vsub.s32 2, %v2672
        %v2674 = vrot.slane %v495, %v2673
        %v2675 = vlaneseq
        %v2676 = vshrl.u32 %v2675, 7
        %v2677 = vsub.s32 2, %v2676
        %v2678 = vrot.slane %v496, %v2677
        %v2679 = vlaneseq
        %v2680 = vshrl.u32 %v2679, 7
        %v2681 = vsub.s32 2, %v2680
        %v2682 = vrot.slane %v497, %v2681
        %v2687 = vunpack.c.l.b16 %v2663
        %v2688 = vunpack.c.h.b16 %v2663
        %v2689 = vunpack.c.l.b16 %v2664
        %v2690 = vunpack.c.h.b16 %v2664
        %v2691 = vunpack.c.l.b16 %v2665
        %v2692 = vunpack.c.h.b16 %v2665
        %v2693 = vunpack.c.l.b16 %v2666
        %v2694 = vunpack.c.h.b16 %v2666
        %v2695 = vpack.c.b16 %v2691, %v2687
        %v2696 = vpack.c.b16 %v2692, %v2688
        %v2697 = vpack.c.b16 %v2693, %v2689
        %v2698 = vpack.c.b16 %v2694, %v2690
        %2703 = vmatprep.subr.bf16.mxu0 0
        %2704 = vmatpush1.bf16.msra.mxu0 0
        %2705 = vmatprep.subr.bf16.mxu0 0
        %2706 = vmatpush1.bf16.msra.mxu0 0
        %2707 = vmatprep.subr.bf16.mxu0 0
        %2708 = vmatpush1.bf16.msra.mxu0 0
        %2709 = vmatprep.subr.bf16.mxu0 0
        %2710 = vmatpush1.bf16.msra.mxu0 0
        %2711 = vmatprep.subr.bf16.mxu0 0
        %2712 = vmatpush1.bf16.msra.mxu0 0
        %2713 = vmatprep.subr.bf16.mxu0 0
        %2714 = vmatpush1.bf16.msra.mxu0 0
        %2715 = vmatprep.subr.bf16.mxu0 0
        %2716 = vmatpush1.bf16.msra.mxu0 0
        %2717 = vmatprep.subr.bf16.mxu0 %v2696
        %2718 = vmatpush1.bf16.msra.mxu0 %v2695
        %2719 = vmatprep.subr.bf16.mxu0 0
        %2720 = vmatpush2.bf16.msra.mxu0 0
        %2721 = vmatprep.subr.bf16.mxu0 0
        %2722 = vmatpush2.bf16.msra.mxu0 0
        %2723 = vmatprep.subr.bf16.mxu0 0
        %2724 = vmatpush2.bf16.msra.mxu0 0
        %2725 = vmatprep.subr.bf16.mxu0 0
        %2726 = vmatpush2.bf16.msra.mxu0 0
        %2727 = vmatprep.subr.bf16.mxu0 0
        %2728 = vmatpush2.bf16.msra.mxu0 0
        %2729 = vmatprep.subr.bf16.mxu0 0
        %2730 = vmatpush2.bf16.msra.mxu0 0
        %2731 = vmatprep.subr.bf16.mxu0 0
        %2732 = vmatpush2.bf16.msra.mxu0 0
        %2733 = vmatprep.subr.bf16.mxu0 0
        %2734 = vmatpush2.bf16.msra.mxu0 0
        %2735 = vmatprep.mubr.bf16.mxu0 0
        %2736 = vmatmul.mubr.bf16.gmra.mxu0 %v549
        %v2737 = vpop.f32.mrf.mxu0
        %v2738 = vadd.f32 %v2670, %v2737
        %v2739 = vpop.f32.mrf.mxu0
        %v2740 = vadd.f32 %v2674, %v2739
        %v2741 = vpop.f32.mrf.mxu0
        %v2742 = vpop.f32.mrf.mxu0
        %2743 = vdwg.mxu0
        %2744 = vmatprep.subr.bf16.mxu0 0
        %2745 = vmatpush1.bf16.msra.mxu0 0
        %2746 = vmatprep.subr.bf16.mxu0 0
        %2747 = vmatpush1.bf16.msra.mxu0 0
        %2748 = vmatprep.subr.bf16.mxu0 0
        %2749 = vmatpush1.bf16.msra.mxu0 0
        %2750 = vmatprep.subr.bf16.mxu0 0
        %2751 = vmatpush1.bf16.msra.mxu0 0
        %2752 = vmatprep.subr.bf16.mxu0 0
        %2753 = vmatpush1.bf16.msra.mxu0 0
        %2754 = vmatprep.subr.bf16.mxu0 0
        %2755 = vmatpush1.bf16.msra.mxu0 0
        %2756 = vmatprep.subr.bf16.mxu0 0
        %2757 = vmatpush1.bf16.msra.mxu0 0
        %2758 = vmatprep.subr.bf16.mxu0 %v2698
        %2759 = vmatpush1.bf16.msra.mxu0 %v2697
        %2760 = vmatprep.subr.bf16.mxu0 0
        %2761 = vmatpush2.bf16.msra.mxu0 0
        %2762 = vmatprep.subr.bf16.mxu0 0
        %2763 = vmatpush2.bf16.msra.mxu0 0
        %2764 = vmatprep.subr.bf16.mxu0 0
        %2765 = vmatpush2.bf16.msra.mxu0 0
        %2766 = vmatprep.subr.bf16.mxu0 0
        %2767 = vmatpush2.bf16.msra.mxu0 0
        %2768 = vmatprep.subr.bf16.mxu0 0
        %2769 = vmatpush2.bf16.msra.mxu0 0
        %2770 = vmatprep.subr.bf16.mxu0 0
        %2771 = vmatpush2.bf16.msra.mxu0 0
        %2772 = vmatprep.subr.bf16.mxu0 0
        %2773 = vmatpush2.bf16.msra.mxu0 0
        %2774 = vmatprep.subr.bf16.mxu0 0
        %2775 = vmatpush2.bf16.msra.mxu0 0
        %2776 = vmatprep.mubr.bf16.mxu0 0
        %2777 = vmatmul.mubr.bf16.gmra.mxu0 %v549
        %v2778 = vpop.f32.mrf.mxu0
        %v2779 = vadd.f32 %v2678, %v2778
        %v2780 = vpop.f32.mrf.mxu0
        %v2781 = vadd.f32 %v2682, %v2780
        %v2782 = vpop.f32.mrf.mxu0
        %v2783 = vpop.f32.mrf.mxu0
        %2784 = vdwg.mxu0
        %v2785 = vmax.f32 %v2738, 0.0
        %v2786 = vmax.f32 %v2740, 0.0
        %v2787 = vmax.f32 %v2779, 0.0
        %v2788 = vmax.f32 %v2781, 0.0
        %v2789 = vpack.c.bf16 %v2785, %v2785
        %v2790 = vpack.c.bf16 %v2786, %v2786
        %v2791 = vpack.c.bf16 %v2787, %v2787
        %v2792 = vpack.c.bf16 %v2788, %v2788
        %s2793 = scalar_lea.vmem %s401, 1200 [#allocation7]
        %v2794 = vld [vmem:[%s2793] sm:$0xff]
        %v2795 = vld [vmem:[%s2793 + $0x8] sm:$0xf]
        %v2796 = vld [vmem:[%s2793 + $0xc] sm:$0xff]
        %v2797 = vld [vmem:[%s2793 + $0x14] sm:$0xf]
        %v2798 = vld [vmem:[%s2793 + $0x18] sm:$0xff]
        %v2799 = vld [vmem:[%s2793 + $0x20] sm:$0xf]
        %v2800 = vld [vmem:[%s2793 + $0x24] sm:$0xff]
        %v2801 = vld [vmem:[%s2793 + $0x2c] sm:$0xf]
        %v2802 = vld [vmem:[%s2793 + $0x30] sm:$0xff]
        %v2803 = vld [vmem:[%s2793 + $0x38] sm:$0xf]
        %v2804 = vld [vmem:[%s2793 + $0x3c] sm:$0xff]
        %v2805 = vld [vmem:[%s2793 + $0x44] sm:$0xf]
        %v2806 = vld [vmem:[%s2793 + $0x48] sm:$0xff]
        %v2807 = vld [vmem:[%s2793 + $0x50] sm:$0xf]
        %v2808 = vld [vmem:[%s2793 + $0x54] sm:$0xff]
        %v2809 = vld [vmem:[%s2793 + $0x5c] sm:$0xf]
        %v2810 = vld [vmem:[%s2793 + $0x60] sm:$0xff]
        %v2811 = vld [vmem:[%s2793 + $0x68] sm:$0xf]
        %v2812 = vld [vmem:[%s2793 + $0x6c] sm:$0xff]
        %v2813 = vld [vmem:[%s2793 + $0x74] sm:$0xf]
        %v2814 = vld [vmem:[%s2793 + $0x78] sm:$0xff]
        %v2815 = vld [vmem:[%s2793 + $0x80] sm:$0xf]
        %v2816 = vld [vmem:[%s2793 + $0x84] sm:$0xff]
        %v2817 = vld [vmem:[%s2793 + $0x8c] sm:$0xf]
        %v2818 = vld [vmem:[%s2793 + $0x90] sm:$0xff]
        %v2819 = vld [vmem:[%s2793 + $0x98] sm:$0xf]
        %v2820 = vld [vmem:[%s2793 + $0x9c] sm:$0xff]
        %v2821 = vld [vmem:[%s2793 + $0xa4] sm:$0xf]
        %v2822 = vld [vmem:[%s2793 + $0xa8] sm:$0xff]
        %v2823 = vld [vmem:[%s2793 + $0xb0] sm:$0xf]
        %v2824 = vld [vmem:[%s2793 + $0xb4] sm:$0xff]
        %v2825 = vld [vmem:[%s2793 + $0xbc] sm:$0xf]
        %v2826 = vld [vmem:[%s2793 + $0xc0] sm:$0xff]
        %v2827 = vld [vmem:[%s2793 + $0xc8] sm:$0xf]
        %v2828 = vld [vmem:[%s2793 + $0xcc] sm:$0xff]
        %v2829 = vld [vmem:[%s2793 + $0xd4] sm:$0xf]
        %v2830 = vld [vmem:[%s2793 + $0xd8] sm:$0xff]
        %v2831 = vld [vmem:[%s2793 + $0xe0] sm:$0xf]
        %v2832 = vld [vmem:[%s2793 + $0xe4] sm:$0xff]
        %v2833 = vld [vmem:[%s2793 + $0xec] sm:$0xf]
        %v2834 = vld [vmem:[%s2793 + $0xf0] sm:$0xff]
        %v2835 = vld [vmem:[%s2793 + $0xf8] sm:$0xf]
        %v2836 = vld [vmem:[%s2793 + $0xfc] sm:$0xff]
        %v2837 = vld [vmem:[%s2793 + $0x104] sm:$0xf]
        %v2838 = vld [vmem:[%s2793 + $0x108] sm:$0xff]
        %v2839 = vld [vmem:[%s2793 + $0x110] sm:$0xf]
        %v2840 = vld [vmem:[%s2793 + $0x114] sm:$0xff]
        %v2841 = vld [vmem:[%s2793 + $0x11c] sm:$0xf]
        %v2842 = vld [vmem:[%s2793 + $0x120] sm:$0xff]
        %v2843 = vld [vmem:[%s2793 + $0x128] sm:$0xf]
        %v2844 = vld [vmem:[%s2793 + $0x12c] sm:$0xff]
        %v2845 = vld [vmem:[%s2793 + $0x134] sm:$0xf]
        %v2846 = vld [vmem:[%s2793 + $0x138] sm:$0xff]
        %v2847 = vld [vmem:[%s2793 + $0x140] sm:$0xf]
        %v2848 = vld [vmem:[%s2793 + $0x144] sm:$0xff]
        %v2849 = vld [vmem:[%s2793 + $0x14c] sm:$0xf]
        %v2850 = vld [vmem:[%s2793 + $0x150] sm:$0xff]
        %v2851 = vld [vmem:[%s2793 + $0x158] sm:$0xf]
        %v2852 = vld [vmem:[%s2793 + $0x15c] sm:$0xff]
        %v2853 = vld [vmem:[%s2793 + $0x164] sm:$0xf]
        %v2854 = vld [vmem:[%s2793 + $0x168] sm:$0xff]
        %v2855 = vld [vmem:[%s2793 + $0x170] sm:$0xf]
        %v2856 = vld [vmem:[%s2793 + $0x174] sm:$0xff]
        %v2857 = vld [vmem:[%s2793 + $0x17c] sm:$0xf]
        %v2858 = vld [vmem:[%s2793 + $0x180] sm:$0xff]
        %v2859 = vld [vmem:[%s2793 + $0x188] sm:$0xf]
        %v2860 = vld [vmem:[%s2793 + $0x18c] sm:$0xff]
        %v2861 = vld [vmem:[%s2793 + $0x194] sm:$0xf]
        %v2862 = vld [vmem:[%s2793 + $0x198] sm:$0xff]
        %v2863 = vld [vmem:[%s2793 + $0x1a0] sm:$0xf]
        %v2864 = vld [vmem:[%s2793 + $0x1a4] sm:$0xff]
        %v2865 = vld [vmem:[%s2793 + $0x1ac] sm:$0xf]
        %v2866 = vld [vmem:[%s2793 + $0x1b0] sm:$0xff]
        %v2867 = vld [vmem:[%s2793 + $0x1b8] sm:$0xf]
        %v2868 = vld [vmem:[%s2793 + $0x1bc] sm:$0xff]
        %v2869 = vld [vmem:[%s2793 + $0x1c4] sm:$0xf]
        %v2870 = vld [vmem:[%s2793 + $0x1c8] sm:$0xff]
        %v2871 = vld [vmem:[%s2793 + $0x1d0] sm:$0xf]
        %v2872 = vld [vmem:[%s2793 + $0x1d4] sm:$0xff]
        %v2873 = vld [vmem:[%s2793 + $0x1dc] sm:$0xf]
        %v2874 = vld [vmem:[%s2793 + $0x1e0] sm:$0xff]
        %v2875 = vld [vmem:[%s2793 + $0x1e8] sm:$0xf]
        %v2876 = vld [vmem:[%s2793 + $0x1ec] sm:$0xff]
        %v2877 = vld [vmem:[%s2793 + $0x1f4] sm:$0xf]
        %v2878 = vld [vmem:[%s2793 + $0x1f8] sm:$0xff]
        %v2879 = vld [vmem:[%s2793 + $0x200] sm:$0xf]
        %v2880 = vld [vmem:[%s2793 + $0x204] sm:$0xff]
        %v2881 = vld [vmem:[%s2793 + $0x20c] sm:$0xf]
        %v2882 = vld [vmem:[%s2793 + $0x210] sm:$0xff]
        %v2883 = vld [vmem:[%s2793 + $0x218] sm:$0xf]
        %v2884 = vld [vmem:[%s2793 + $0x21c] sm:$0xff]
        %v2885 = vld [vmem:[%s2793 + $0x224] sm:$0xf]
        %v2886 = vld [vmem:[%s2793 + $0x228] sm:$0xff]
        %v2887 = vld [vmem:[%s2793 + $0x230] sm:$0xf]
        %v2888 = vld [vmem:[%s2793 + $0x234] sm:$0xff]
        %v2889 = vld [vmem:[%s2793 + $0x23c] sm:$0xf]
        %v2890 = vld [vmem:[%s2793 + $0x240] sm:$0xff]
        %v2891 = vld [vmem:[%s2793 + $0x248] sm:$0xf]
        %v2892 = vld [vmem:[%s2793 + $0x24c] sm:$0xff]
        %v2893 = vld [vmem:[%s2793 + $0x254] sm:$0xf]
        %v2894 = vlaneseq
        %v2895 = vshrl.u32 %v2894, 7
        %v2896 = vsub.s32 2, %v2895
        %v2897 = vrot.slane %v498, %v2896
        %v2898 = vlaneseq
        %v2899 = vshrl.u32 %v2898, 7
        %v2900 = vsub.s32 2, %v2899
        %v2901 = vrot.slane %v499, %v2900
        %v2902 = vlaneseq
        %v2903 = vshrl.u32 %v2902, 7
        %v2904 = vsub.s32 2, %v2903
        %v2905 = vrot.slane %v500, %v2904
        %v3006 = vunpack.c.l.b16 %v2794
        %v3007 = vunpack.c.h.b16 %v2794
        %v3008 = vunpack.c.l.b16 %v2795
        %v3009 = vunpack.c.l.b16 %v2796
        %v3010 = vunpack.c.h.b16 %v2796
        %v3011 = vunpack.c.l.b16 %v2797
        %v3012 = vunpack.c.l.b16 %v2798
        %v3013 = vunpack.c.h.b16 %v2798
        %v3014 = vunpack.c.l.b16 %v2799
        %v3015 = vunpack.c.l.b16 %v2800
        %v3016 = vunpack.c.h.b16 %v2800
        %v3017 = vunpack.c.l.b16 %v2801
        %v3018 = vunpack.c.l.b16 %v2802
        %v3019 = vunpack.c.h.b16 %v2802
        %v3020 = vunpack.c.l.b16 %v2803
        %v3021 = vunpack.c.l.b16 %v2804
        %v3022 = vunpack.c.h.b16 %v2804
        %v3023 = vunpack.c.l.b16 %v2805
        %v3024 = vunpack.c.l.b16 %v2806
        %v3025 = vunpack.c.h.b16 %v2806
        %v3026 = vunpack.c.l.b16 %v2807
        %v3027 = vunpack.c.l.b16 %v2808
        %v3028 = vunpack.c.h.b16 %v2808
        %v3029 = vunpack.c.l.b16 %v2809
        %v3030 = vunpack.c.l.b16 %v2810
        %v3031 = vunpack.c.h.b16 %v2810
        %v3032 = vunpack.c.l.b16 %v2811
        %v3033 = vunpack.c.l.b16 %v2812
        %v3034 = vunpack.c.h.b16 %v2812
        %v3035 = vunpack.c.l.b16 %v2813
        %v3036 = vunpack.c.l.b16 %v2814
        %v3037 = vunpack.c.h.b16 %v2814
        %v3038 = vunpack.c.l.b16 %v2815
        %v3039 = vunpack.c.l.b16 %v2816
        %v3040 = vunpack.c.h.b16 %v2816
        %v3041 = vunpack.c.l.b16 %v2817
        %v3042 = vunpack.c.l.b16 %v2818
        %v3043 = vunpack.c.h.b16 %v2818
        %v3044 = vunpack.c.l.b16 %v2819
        %v3045 = vunpack.c.l.b16 %v2820
        %v3046 = vunpack.c.h.b16 %v2820
        %v3047 = vunpack.c.l.b16 %v2821
        %v3048 = vunpack.c.l.b16 %v2822
        %v3049 = vunpack.c.h.b16 %v2822
        %v3050 = vunpack.c.l.b16 %v2823
        %v3051 = vunpack.c.l.b16 %v2824
        %v3052 = vunpack.c.h.b16 %v2824
        %v3053 = vunpack.c.l.b16 %v2825
        %v3054 = vunpack.c.l.b16 %v2826
        %v3055 = vunpack.c.h.b16 %v2826
        %v3056 = vunpack.c.l.b16 %v2827
        %v3057 = vunpack.c.l.b16 %v2828
        %v3058 = vunpack.c.h.b16 %v2828
        %v3059 = vunpack.c.l.b16 %v2829
        %v3060 = vunpack.c.l.b16 %v2830
        %v3061 = vunpack.c.h.b16 %v2830
        %v3062 = vunpack.c.l.b16 %v2831
        %v3063 = vunpack.c.l.b16 %v2832
        %v3064 = vunpack.c.h.b16 %v2832
        %v3065 = vunpack.c.l.b16 %v2833
        %v3066 = vunpack.c.l.b16 %v2834
        %v3067 = vunpack.c.h.b16 %v2834
        %v3068 = vunpack.c.l.b16 %v2835
        %v3069 = vunpack.c.l.b16 %v2836
        %v3070 = vunpack.c.h.b16 %v2836
        %v3071 = vunpack.c.l.b16 %v2837
        %v3072 = vunpack.c.l.b16 %v2838
        %v3073 = vunpack.c.h.b16 %v2838
        %v3074 = vunpack.c.l.b16 %v2839
        %v3075 = vunpack.c.l.b16 %v2840
        %v3076 = vunpack.c.h.b16 %v2840
        %v3077 = vunpack.c.l.b16 %v2841
        %v3078 = vunpack.c.l.b16 %v2842
        %v3079 = vunpack.c.h.b16 %v2842
        %v3080 = vunpack.c.l.b16 %v2843
        %v3081 = vunpack.c.l.b16 %v2844
        %v3082 = vunpack.c.h.b16 %v2844
        %v3083 = vunpack.c.l.b16 %v2845
        %v3084 = vunpack.c.l.b16 %v2846
        %v3085 = vunpack.c.h.b16 %v2846
        %v3086 = vunpack.c.l.b16 %v2847
        %v3087 = vunpack.c.l.b16 %v2848
        %v3088 = vunpack.c.h.b16 %v2848
        %v3089 = vunpack.c.l.b16 %v2849
        %v3090 = vunpack.c.l.b16 %v2850
        %v3091 = vunpack.c.h.b16 %v2850
        %v3092 = vunpack.c.l.b16 %v2851
        %v3093 = vunpack.c.l.b16 %v2852
        %v3094 = vunpack.c.h.b16 %v2852
        %v3095 = vunpack.c.l.b16 %v2853
        %v3096 = vunpack.c.l.b16 %v2854
        %v3097 = vunpack.c.h.b16 %v2854
        %v3098 = vunpack.c.l.b16 %v2855
        %v3099 = vunpack.c.l.b16 %v2856
        %v3100 = vunpack.c.h.b16 %v2856
        %v3101 = vunpack.c.l.b16 %v2857
        %v3102 = vunpack.c.l.b16 %v2858
        %v3103 = vunpack.c.h.b16 %v2858
        %v3104 = vunpack.c.l.b16 %v2859
        %v3105 = vunpack.c.l.b16 %v2860
        %v3106 = vunpack.c.h.b16 %v2860
        %v3107 = vunpack.c.l.b16 %v2861
        %v3108 = vunpack.c.l.b16 %v2862
        %v3109 = vunpack.c.h.b16 %v2862
        %v3110 = vunpack.c.l.b16 %v2863
        %v3111 = vunpack.c.l.b16 %v2864
        %v3112 = vunpack.c.h.b16 %v2864
        %v3113 = vunpack.c.l.b16 %v2865
        %v3114 = vunpack.c.l.b16 %v2866
        %v3115 = vunpack.c.h.b16 %v2866
        %v3116 = vunpack.c.l.b16 %v2867
        %v3117 = vunpack.c.l.b16 %v2868
        %v3118 = vunpack.c.h.b16 %v2868
        %v3119 = vunpack.c.l.b16 %v2869
        %v3120 = vunpack.c.l.b16 %v2870
        %v3121 = vunpack.c.h.b16 %v2870
        %v3122 = vunpack.c.l.b16 %v2871
        %v3123 = vunpack.c.l.b16 %v2872
        %v3124 = vunpack.c.h.b16 %v2872
        %v3125 = vunpack.c.l.b16 %v2873
        %v3126 = vunpack.c.l.b16 %v2874
        %v3127 = vunpack.c.h.b16 %v2874
        %v3128 = vunpack.c.l.b16 %v2875
        %v3129 = vunpack.c.l.b16 %v2876
        %v3130 = vunpack.c.h.b16 %v2876
        %v3131 = vunpack.c.l.b16 %v2877
        %v3132 = vunpack.c.l.b16 %v2878
        %v3133 = vunpack.c.h.b16 %v2878
        %v3134 = vunpack.c.l.b16 %v2879
        %v3135 = vunpack.c.l.b16 %v2880
        %v3136 = vunpack.c.h.b16 %v2880
        %v3137 = vunpack.c.l.b16 %v2881
        %v3138 = vunpack.c.l.b16 %v2882
        %v3139 = vunpack.c.h.b16 %v2882
        %v3140 = vunpack.c.l.b16 %v2883
        %v3141 = vunpack.c.l.b16 %v2884
        %v3142 = vunpack.c.h.b16 %v2884
        %v3143 = vunpack.c.l.b16 %v2885
        %v3144 = vunpack.c.l.b16 %v2886
        %v3145 = vunpack.c.h.b16 %v2886
        %v3146 = vunpack.c.l.b16 %v2887
        %v3147 = vunpack.c.l.b16 %v2888
        %v3148 = vunpack.c.h.b16 %v2888
        %v3149 = vunpack.c.l.b16 %v2889
        %v3150 = vunpack.c.l.b16 %v2890
        %v3151 = vunpack.c.h.b16 %v2890
        %v3152 = vunpack.c.l.b16 %v2891
        %v3153 = vunpack.c.l.b16 %v2892
        %v3154 = vunpack.c.h.b16 %v2892
        %v3155 = vunpack.c.l.b16 %v2893
        %v3156 = vpack.c.b16 %v3009, %v3006
        %v3157 = vpack.c.b16 %v3010, %v3007
        %v3158 = vpack.c.b16 %v3011, %v3008
        %v3159 = vpack.c.b16 %v3015, %v3012
        %v3160 = vpack.c.b16 %v3016, %v3013
        %v3161 = vpack.c.b16 %v3017, %v3014
        %v3162 = vpack.c.b16 %v3021, %v3018
        %v3163 = vpack.c.b16 %v3022, %v3019
        %v3164 = vpack.c.b16 %v3023, %v3020
        %v3165 = vpack.c.b16 %v3027, %v3024
        %v3166 = vpack.c.b16 %v3028, %v3025
        %v3167 = vpack.c.b16 %v3029, %v3026
        %v3168 = vpack.c.b16 %v3033, %v3030
        %v3169 = vpack.c.b16 %v3034, %v3031
        %v3170 = vpack.c.b16 %v3035, %v3032
        %v3171 = vpack.c.b16 %v3039, %v3036
        %v3172 = vpack.c.b16 %v3040, %v3037
        %v3173 = vpack.c.b16 %v3041, %v3038
        %v3174 = vpack.c.b16 %v3045, %v3042
        %v3175 = vpack.c.b16 %v3046, %v3043
        %v3176 = vpack.c.b16 %v3047, %v3044
        %v3177 = vpack.c.b16 %v3051, %v3048
        %v3178 = vpack.c.b16 %v3052, %v3049
        %v3179 = vpack.c.b16 %v3053, %v3050
        %v3180 = vpack.c.b16 %v3057, %v3054
        %v3181 = vpack.c.b16 %v3058, %v3055
        %v3182 = vpack.c.b16 %v3059, %v3056
        %v3183 = vpack.c.b16 %v3063, %v3060
        %v3184 = vpack.c.b16 %v3064, %v3061
        %v3185 = vpack.c.b16 %v3065, %v3062
        %v3186 = vpack.c.b16 %v3069, %v3066
        %v3187 = vpack.c.b16 %v3070, %v3067
        %v3188 = vpack.c.b16 %v3071, %v3068
        %v3189 = vpack.c.b16 %v3075, %v3072
        %v3190 = vpack.c.b16 %v3076, %v3073
        %v3191 = vpack.c.b16 %v3077, %v3074
        %v3192 = vpack.c.b16 %v3081, %v3078
        %v3193 = vpack.c.b16 %v3082, %v3079
        %v3194 = vpack.c.b16 %v3083, %v3080
        %v3195 = vpack.c.b16 %v3087, %v3084
        %v3196 = vpack.c.b16 %v3088, %v3085
        %v3197 = vpack.c.b16 %v3089, %v3086
        %v3198 = vpack.c.b16 %v3093, %v3090
        %v3199 = vpack.c.b16 %v3094, %v3091
        %v3200 = vpack.c.b16 %v3095, %v3092
        %v3201 = vpack.c.b16 %v3099, %v3096
        %v3202 = vpack.c.b16 %v3100, %v3097
        %v3203 = vpack.c.b16 %v3101, %v3098
        %v3204 = vpack.c.b16 %v3105, %v3102
        %v3205 = vpack.c.b16 %v3106, %v3103
        %v3206 = vpack.c.b16 %v3107, %v3104
        %v3207 = vpack.c.b16 %v3111, %v3108
        %v3208 = vpack.c.b16 %v3112, %v3109
        %v3209 = vpack.c.b16 %v3113, %v3110
        %v3210 = vpack.c.b16 %v3117, %v3114
        %v3211 = vpack.c.b16 %v3118, %v3115
        %v3212 = vpack.c.b16 %v3119, %v3116
        %v3213 = vpack.c.b16 %v3123, %v3120
        %v3214 = vpack.c.b16 %v3124, %v3121
        %v3215 = vpack.c.b16 %v3125, %v3122
        %v3216 = vpack.c.b16 %v3129, %v3126
        %v3217 = vpack.c.b16 %v3130, %v3127
        %v3218 = vpack.c.b16 %v3131, %v3128
        %v3219 = vpack.c.b16 %v3135, %v3132
        %v3220 = vpack.c.b16 %v3136, %v3133
        %v3221 = vpack.c.b16 %v3137, %v3134
        %v3222 = vpack.c.b16 %v3141, %v3138
        %v3223 = vpack.c.b16 %v3142, %v3139
        %v3224 = vpack.c.b16 %v3143, %v3140
        %v3225 = vpack.c.b16 %v3147, %v3144
        %v3226 = vpack.c.b16 %v3148, %v3145
        %v3227 = vpack.c.b16 %v3149, %v3146
        %v3228 = vpack.c.b16 %v3153, %v3150
        %v3229 = vpack.c.b16 %v3154, %v3151
        %v3230 = vpack.c.b16 %v3155, %v3152
        %v3307 = vsel %vm547, %v2792, 0
        %3309 = vmatprep.subr.bf16.mxu0 %v3178
        %3310 = vmatpush1.bf16.msra.mxu0 %v3177
        %3311 = vmatprep.subr.bf16.mxu0 %v3175
        %3312 = vmatpush1.bf16.msra.mxu0 %v3174
        %3313 = vmatprep.subr.bf16.mxu0 %v3172
        %3314 = vmatpush1.bf16.msra.mxu0 %v3171
        %3315 = vmatprep.subr.bf16.mxu0 %v3169
        %3316 = vmatpush1.bf16.msra.mxu0 %v3168
        %3317 = vmatprep.subr.bf16.mxu0 %v3166
        %3318 = vmatpush1.bf16.msra.mxu0 %v3165
        %3319 = vmatprep.subr.bf16.mxu0 %v3163
        %3320 = vmatpush1.bf16.msra.mxu0 %v3162
        %3321 = vmatprep.subr.bf16.mxu0 %v3160
        %3322 = vmatpush1.bf16.msra.mxu0 %v3159
        %3323 = vmatprep.subr.bf16.mxu0 %v3157
        %3324 = vmatpush1.bf16.msra.mxu0 %v3156
        %3325 = vmatprep.subr.bf16.mxu0 %v3202
        %3326 = vmatpush2.bf16.msra.mxu0 %v3201
        %3327 = vmatprep.subr.bf16.mxu0 %v3199
        %3328 = vmatpush2.bf16.msra.mxu0 %v3198
        %3329 = vmatprep.subr.bf16.mxu0 %v3196
        %3330 = vmatpush2.bf16.msra.mxu0 %v3195
        %3331 = vmatprep.subr.bf16.mxu0 %v3193
        %3332 = vmatpush2.bf16.msra.mxu0 %v3192
        %3333 = vmatprep.subr.bf16.mxu0 %v3190
        %3334 = vmatpush2.bf16.msra.mxu0 %v3189
        %3335 = vmatprep.subr.bf16.mxu0 %v3187
        %3336 = vmatpush2.bf16.msra.mxu0 %v3186
        %3337 = vmatprep.subr.bf16.mxu0 %v3184
        %3338 = vmatpush2.bf16.msra.mxu0 %v3183
        %3339 = vmatprep.subr.bf16.mxu0 %v3181
        %3340 = vmatpush2.bf16.msra.mxu0 %v3180
        %3341 = vmatprep.mubr.bf16.mxu0 %v2790
        %3342 = vmatmul.mubr.bf16.gmra.mxu0 %v2789
        %v3343 = vpop.f32.mrf.mxu0
        %v3344 = vadd.f32 %v2897, %v3343
        %v3345 = vpop.f32.mrf.mxu0
        %v3346 = vadd.f32 %v2901, %v3345
        %v3347 = vpop.f32.mrf.mxu0
        %v3348 = vpop.f32.mrf.mxu0
        %3349 = vdwg.mxu0
        %3350 = vmatprep.subr.bf16.mxu0 %v3226
        %3351 = vmatpush1.bf16.msra.mxu0 %v3225
        %3352 = vmatprep.subr.bf16.mxu0 %v3223
        %3353 = vmatpush1.bf16.msra.mxu0 %v3222
        %3354 = vmatprep.subr.bf16.mxu0 %v3220
        %3355 = vmatpush1.bf16.msra.mxu0 %v3219
        %3356 = vmatprep.subr.bf16.mxu0 %v3217
        %3357 = vmatpush1.bf16.msra.mxu0 %v3216
        %3358 = vmatprep.subr.bf16.mxu0 %v3214
        %3359 = vmatpush1.bf16.msra.mxu0 %v3213
        %3360 = vmatprep.subr.bf16.mxu0 %v3211
        %3361 = vmatpush1.bf16.msra.mxu0 %v3210
        %3362 = vmatprep.subr.bf16.mxu0 %v3208
        %3363 = vmatpush1.bf16.msra.mxu0 %v3207
        %3364 = vmatprep.subr.bf16.mxu0 %v3205
        %3365 = vmatpush1.bf16.msra.mxu0 %v3204
        %3366 = vmatprep.subr.bf16.mxu0 0
        %3367 = vmatpush2.bf16.msra.mxu0 0
        %3368 = vmatprep.subr.bf16.mxu0 0
        %3369 = vmatpush2.bf16.msra.mxu0 0
        %3370 = vmatprep.subr.bf16.mxu0 0
        %3371 = vmatpush2.bf16.msra.mxu0 0
        %3372 = vmatprep.subr.bf16.mxu0 0
        %3373 = vmatpush2.bf16.msra.mxu0 0
        %3374 = vmatprep.subr.bf16.mxu0 0
        %3375 = vmatpush2.bf16.msra.mxu0 0
        %3376 = vmatprep.subr.bf16.mxu0 0
        %3377 = vmatpush2.bf16.msra.mxu0 0
        %3378 = vmatprep.subr.bf16.mxu0 0
        %3379 = vmatpush2.bf16.msra.mxu0 0
        %3380 = vmatprep.subr.bf16.mxu0 %v3229
        %3381 = vmatpush2.bf16.msra.mxu0 %v3228
        %3382 = vmatprep.mubr.bf16.mxu0 %v3307
        %3383 = vmatmul.mubr.bf16.gmra.mxu0 %v2791
        %v3384 = vpop.f32.mrf.mxu0
        %v3385 = vadd.f32 %v3344, %v3384
        %v3386 = vpop.f32.mrf.mxu0
        %v3387 = vadd.f32 %v3346, %v3386
        %v3388 = vpop.f32.mrf.mxu0
        %v3389 = vpop.f32.mrf.mxu0
        %3390 = vdwg.mxu0
        %3391 = vmatprep.subr.bf16.mxu0 0
        %3392 = vmatpush1.bf16.msra.mxu0 %v3179
        %3393 = vmatprep.subr.bf16.mxu0 0
        %3394 = vmatpush1.bf16.msra.mxu0 %v3176
        %3395 = vmatprep.subr.bf16.mxu0 0
        %3396 = vmatpush1.bf16.msra.mxu0 %v3173
        %3397 = vmatprep.subr.bf16.mxu0 0
        %3398 = vmatpush1.bf16.msra.mxu0 %v3170
        %3399 = vmatprep.subr.bf16.mxu0 0
        %3400 = vmatpush1.bf16.msra.mxu0 %v3167
        %3401 = vmatprep.subr.bf16.mxu0 0
        %3402 = vmatpush1.bf16.msra.mxu0 %v3164
        %3403 = vmatprep.subr.bf16.mxu0 0
        %3404 = vmatpush1.bf16.msra.mxu0 %v3161
        %3405 = vmatprep.subr.bf16.mxu0 0
        %3406 = vmatpush1.bf16.msra.mxu0 %v3158
        %3407 = vmatprep.subr.bf16.mxu0 0
        %3408 = vmatpush2.bf16.msra.mxu0 %v3203
        %3409 = vmatprep.subr.bf16.mxu0 0
        %3410 = vmatpush2.bf16.msra.mxu0 %v3200
        %3411 = vmatprep.subr.bf16.mxu0 0
        %3412 = vmatpush2.bf16.msra.mxu0 %v3197
        %3413 = vmatprep.subr.bf16.mxu0 0
        %3414 = vmatpush2.bf16.msra.mxu0 %v3194
        %3415 = vmatprep.subr.bf16.mxu0 0
        %3416 = vmatpush2.bf16.msra.mxu0 %v3191
        %3417 = vmatprep.subr.bf16.mxu0 0
        %3418 = vmatpush2.bf16.msra.mxu0 %v3188
        %3419 = vmatprep.subr.bf16.mxu0 0
        %3420 = vmatpush2.bf16.msra.mxu0 %v3185
        %3421 = vmatprep.subr.bf16.mxu0 0
        %3422 = vmatpush2.bf16.msra.mxu0 %v3182
        %3423 = vmatprep.mubr.bf16.mxu0 %v2790
        %3424 = vmatmul.mubr.bf16.gmra.mxu0 %v2789
        %v3425 = vpop.f32.mrf.mxu0
        %v3426 = vadd.f32 %v2905, %v3425
        %v3427 = vpop.f32.mrf.mxu0
        %v3428 = vpop.f32.mrf.mxu0
        %v3429 = vpop.f32.mrf.mxu0
        %3430 = vdwg.mxu0
        %3431 = vmatprep.subr.bf16.mxu0 0
        %3432 = vmatpush1.bf16.msra.mxu0 %v3227
        %3433 = vmatprep.subr.bf16.mxu0 0
        %3434 = vmatpush1.bf16.msra.mxu0 %v3224
        %3435 = vmatprep.subr.bf16.mxu0 0
        %3436 = vmatpush1.bf16.msra.mxu0 %v3221
        %3437 = vmatprep.subr.bf16.mxu0 0
        %3438 = vmatpush1.bf16.msra.mxu0 %v3218
        %3439 = vmatprep.subr.bf16.mxu0 0
        %3440 = vmatpush1.bf16.msra.mxu0 %v3215
        %3441 = vmatprep.subr.bf16.mxu0 0
        %3442 = vmatpush1.bf16.msra.mxu0 %v3212
        %3443 = vmatprep.subr.bf16.mxu0 0
        %3444 = vmatpush1.bf16.msra.mxu0 %v3209
        %3445 = vmatprep.subr.bf16.mxu0 0
        %3446 = vmatpush1.bf16.msra.mxu0 %v3206
        %3447 = vmatprep.subr.bf16.mxu0 0
        %3448 = vmatpush2.bf16.msra.mxu0 0
        %3449 = vmatprep.subr.bf16.mxu0 0
        %3450 = vmatpush2.bf16.msra.mxu0 0
        %3451 = vmatprep.subr.bf16.mxu0 0
        %3452 = vmatpush2.bf16.msra.mxu0 0
        %3453 = vmatprep.subr.bf16.mxu0 0
        %3454 = vmatpush2.bf16.msra.mxu0 0
        %3455 = vmatprep.subr.bf16.mxu0 0
        %3456 = vmatpush2.bf16.msra.mxu0 0
        %3457 = vmatprep.subr.bf16.mxu0 0
        %3458 = vmatpush2.bf16.msra.mxu0 0
        %3459 = vmatprep.subr.bf16.mxu0 0
        %3460 = vmatpush2.bf16.msra.mxu0 0
        %3461 = vmatprep.subr.bf16.mxu0 0
        %3462 = vmatpush2.bf16.msra.mxu0 %v3230
        %3463 = vmatprep.mubr.bf16.mxu0 %v3307
        %3464 = vmatmul.mubr.bf16.gmra.mxu0 %v2791
        %v3465 = vpop.f32.mrf.mxu0
        %v3466 = vadd.f32 %v3426, %v3465
        %v3467 = vpop.f32.mrf.mxu0
        %v3468 = vpop.f32.mrf.mxu0
        %v3469 = vpop.f32.mrf.mxu0
        %3470 = vdwg.mxu0
        %v3471 = vmax.f32 %v3385, 0.0
        %v3472 = vmax.f32 %v3387, 0.0
        %v3473 = vmax.f32 %v3466, 0.0
        %v3474 = vpack.c.bf16 %v3471, %v3471
        %v3475 = vpack.c.bf16 %v3472, %v3472
        %v3476 = vpack.c.bf16 %v3473, %v3473
        %s3477 = scalar_lea.vmem %s486, 304
        %v3478 = vld [vmem:[%s3477] sm:$0xf]
        %v3479 = vld [vmem:[%s3477 + $0x4] sm:$0xf]
        %v3480 = vld [vmem:[%s3477 + $0x8] sm:$0xf]
        %v3481 = vld [vmem:[%s3477 + $0xc] sm:$0xf]
        %v3482 = vld [vmem:[%s3477 + $0x10] sm:$0xf]
        %v3483 = vld [vmem:[%s3477 + $0x14] sm:$0xf]
        %v3484 = vld [vmem:[%s3477 + $0x18] sm:$0xf]
        %v3485 = vld [vmem:[%s3477 + $0x1c] sm:$0xf]
        %v3486 = vld [vmem:[%s3477 + $0x20] sm:$0xf]
        %v3487 = vld [vmem:[%s3477 + $0x24] sm:$0xf]
        %v3488 = vld [vmem:[%s3477 + $0x28] sm:$0xf]
        %v3489 = vld [vmem:[%s3477 + $0x2c] sm:$0xf]
        %v3490 = vld [vmem:[%s3477 + $0x30] sm:$0xf]
        %v3491 = vld [vmem:[%s3477 + $0x34] sm:$0xf]
        %v3492 = vld [vmem:[%s3477 + $0x38] sm:$0xf]
        %v3493 = vld [vmem:[%s3477 + $0x3c] sm:$0xf]
        %v3494 = vld [vmem:[%s3477 + $0x40] sm:$0xf]
        %v3495 = vld [vmem:[%s3477 + $0x44] sm:$0xf]
        %v3496 = vld [vmem:[%s3477 + $0x48] sm:$0xf]
        %v3497 = vld [vmem:[%s3477 + $0x4c] sm:$0xf]
        %v3498 = vld [vmem:[%s3477 + $0x50] sm:$0xf]
        %v3499 = vld [vmem:[%s3477 + $0x54] sm:$0xf]
        %v3500 = vld [vmem:[%s3477 + $0x58] sm:$0xf]
        %v3501 = vld [vmem:[%s3477 + $0x5c] sm:$0xf]
        %v3502 = vld [vmem:[%s3477 + $0x60] sm:$0xf]
        %v3503 = vld [vmem:[%s3477 + $0x64] sm:$0xf]
        %v3504 = vld [vmem:[%s3477 + $0x68] sm:$0xf]
        %v3505 = vld [vmem:[%s3477 + $0x6c] sm:$0xf]
        %v3506 = vld [vmem:[%s3477 + $0x70] sm:$0xf]
        %v3507 = vld [vmem:[%s3477 + $0x74] sm:$0xf]
        %v3508 = vld [vmem:[%s3477 + $0x78] sm:$0xf]
        %v3509 = vld [vmem:[%s3477 + $0x7c] sm:$0xf]
        %v3510 = vld [vmem:[%s3477 + $0x80] sm:$0xf]
        %v3511 = vld [vmem:[%s3477 + $0x84] sm:$0xf]
        %v3512 = vld [vmem:[%s3477 + $0x88] sm:$0xf]
        %v3513 = vld [vmem:[%s3477 + $0x8c] sm:$0xf]
        %v3514 = vld [vmem:[%s3477 + $0x90] sm:$0xf]
        %v3515 = vld [vmem:[%s3477 + $0x94] sm:$0x3]
        %v3516 = vlaneseq
        %v3517 = vshrl.u32 %v3516, 7
        %v3518 = vsub.s32 2, %v3517
        %v3519 = vrot.slane %v501, %v3518
        %v3558 = vunpack.c.l.b16 %v3478
        %v3559 = vunpack.c.l.b16 %v3479
        %v3560 = vunpack.c.l.b16 %v3480
        %v3561 = vunpack.c.l.b16 %v3481
        %v3562 = vunpack.c.l.b16 %v3482
        %v3563 = vunpack.c.l.b16 %v3483
        %v3564 = vunpack.c.l.b16 %v3484
        %v3565 = vunpack.c.l.b16 %v3485
        %v3566 = vunpack.c.l.b16 %v3486
        %v3567 = vunpack.c.l.b16 %v3487
        %v3568 = vunpack.c.l.b16 %v3488
        %v3569 = vunpack.c.l.b16 %v3489
        %v3570 = vunpack.c.l.b16 %v3490
        %v3571 = vunpack.c.l.b16 %v3491
        %v3572 = vunpack.c.l.b16 %v3492
        %v3573 = vunpack.c.l.b16 %v3493
        %v3574 = vunpack.c.l.b16 %v3494
        %v3575 = vunpack.c.l.b16 %v3495
        %v3576 = vunpack.c.l.b16 %v3496
        %v3577 = vunpack.c.l.b16 %v3497
        %v3578 = vunpack.c.l.b16 %v3498
        %v3579 = vunpack.c.l.b16 %v3499
        %v3580 = vunpack.c.l.b16 %v3500
        %v3581 = vunpack.c.l.b16 %v3501
        %v3582 = vunpack.c.l.b16 %v3502
        %v3583 = vunpack.c.l.b16 %v3503
        %v3584 = vunpack.c.l.b16 %v3504
        %v3585 = vunpack.c.l.b16 %v3505
        %v3586 = vunpack.c.l.b16 %v3506
        %v3587 = vunpack.c.l.b16 %v3507
        %v3588 = vunpack.c.l.b16 %v3508
        %v3589 = vunpack.c.l.b16 %v3509
        %v3590 = vunpack.c.l.b16 %v3510
        %v3591 = vunpack.c.l.b16 %v3511
        %v3592 = vunpack.c.l.b16 %v3512
        %v3593 = vunpack.c.l.b16 %v3513
        %v3594 = vunpack.c.l.b16 %v3514
        %v3595 = vunpack.c.l.b16 %v3515
        %v3596 = vpack.c.b16 %v3559, %v3558
        %v3597 = vpack.c.b16 %v3561, %v3560
        %v3598 = vpack.c.b16 %v3563, %v3562
        %v3599 = vpack.c.b16 %v3565, %v3564
        %v3600 = vpack.c.b16 %v3567, %v3566
        %v3601 = vpack.c.b16 %v3569, %v3568
        %v3602 = vpack.c.b16 %v3571, %v3570
        %v3603 = vpack.c.b16 %v3573, %v3572
        %v3604 = vpack.c.b16 %v3575, %v3574
        %v3605 = vpack.c.b16 %v3577, %v3576
        %v3606 = vpack.c.b16 %v3579, %v3578
        %v3607 = vpack.c.b16 %v3581, %v3580
        %v3608 = vpack.c.b16 %v3583, %v3582
        %v3609 = vpack.c.b16 %v3585, %v3584
        %v3610 = vpack.c.b16 %v3587, %v3586
        %v3611 = vpack.c.b16 %v3589, %v3588
        %v3612 = vpack.c.b16 %v3591, %v3590
        %v3613 = vpack.c.b16 %v3593, %v3592
        %v3614 = vpack.c.b16 %v3595, %v3594
        %v3634 = vsel %vm1479, %v3476, 0
        %v3637 = vsel %vm1483, %v3614, 0
        %3639 = vmatprep.subr.bf16.mxu0 0
        %3640 = vmatpush1.bf16.msra.mxu0 %v3603
        %3641 = vmatprep.subr.bf16.mxu0 0
        %3642 = vmatpush1.bf16.msra.mxu0 %v3602
        %3643 = vmatprep.subr.bf16.mxu0 0
        %3644 = vmatpush1.bf16.msra.mxu0 %v3601
        %3645 = vmatprep.subr.bf16.mxu0 0
        %3646 = vmatpush1.bf16.msra.mxu0 %v3600
        %3647 = vmatprep.subr.bf16.mxu0 0
        %3648 = vmatpush1.bf16.msra.mxu0 %v3599
        %3649 = vmatprep.subr.bf16.mxu0 0
        %3650 = vmatpush1.bf16.msra.mxu0 %v3598
        %3651 = vmatprep.subr.bf16.mxu0 0
        %3652 = vmatpush1.bf16.msra.mxu0 %v3597
        %3653 = vmatprep.subr.bf16.mxu0 0
        %3654 = vmatpush1.bf16.msra.mxu0 %v3596
        %3655 = vmatprep.subr.bf16.mxu0 0
        %3656 = vmatpush2.bf16.msra.mxu0 %v3611
        %3657 = vmatprep.subr.bf16.mxu0 0
        %3658 = vmatpush2.bf16.msra.mxu0 %v3610
        %3659 = vmatprep.subr.bf16.mxu0 0
        %3660 = vmatpush2.bf16.msra.mxu0 %v3609
        %3661 = vmatprep.subr.bf16.mxu0 0
        %3662 = vmatpush2.bf16.msra.mxu0 %v3608
        %3663 = vmatprep.subr.bf16.mxu0 0
        %3664 = vmatpush2.bf16.msra.mxu0 %v3607
        %3665 = vmatprep.subr.bf16.mxu0 0
        %3666 = vmatpush2.bf16.msra.mxu0 %v3606
        %3667 = vmatprep.subr.bf16.mxu0 0
        %3668 = vmatpush2.bf16.msra.mxu0 %v3605
        %3669 = vmatprep.subr.bf16.mxu0 0
        %3670 = vmatpush2.bf16.msra.mxu0 %v3604
        %3671 = vmatprep.mubr.bf16.mxu0 %v3475
        %3672 = vmatmul.mubr.bf16.gmra.mxu0 %v3474
        %v3673 = vpop.f32.mrf.mxu0
        %v3674 = vadd.f32 %v3519, %v3673
        %v3675 = vpop.f32.mrf.mxu0
        %v3676 = vpop.f32.mrf.mxu0
        %v3677 = vpop.f32.mrf.mxu0
        %3678 = vdwg.mxu0
        %3679 = vmatprep.subr.bf16.mxu0 0
        %3680 = vmatpush1.bf16.msra.mxu0 0
        %3681 = vmatprep.subr.bf16.mxu0 0
        %3682 = vmatpush1.bf16.msra.mxu0 0
        %3683 = vmatprep.subr.bf16.mxu0 0
        %3684 = vmatpush1.bf16.msra.mxu0 0
        %3685 = vmatprep.subr.bf16.mxu0 0
        %3686 = vmatpush1.bf16.msra.mxu0 0
        %3687 = vmatprep.subr.bf16.mxu0 0
        %3688 = vmatpush1.bf16.msra.mxu0 0
        %3689 = vmatprep.subr.bf16.mxu0 0
        %3690 = vmatpush1.bf16.msra.mxu0 %v3637
        %3691 = vmatprep.subr.bf16.mxu0 0
        %3692 = vmatpush1.bf16.msra.mxu0 %v3613
        %3693 = vmatprep.subr.bf16.mxu0 0
        %3694 = vmatpush1.bf16.msra.mxu0 %v3612
        %3695 = vmatprep.subr.bf16.mxu0 0
        %3696 = vmatpush2.bf16.msra.mxu0 0
        %3697 = vmatprep.subr.bf16.mxu0 0
        %3698 = vmatpush2.bf16.msra.mxu0 0
        %3699 = vmatprep.subr.bf16.mxu0 0
        %3700 = vmatpush2.bf16.msra.mxu0 0
        %3701 = vmatprep.subr.bf16.mxu0 0
        %3702 = vmatpush2.bf16.msra.mxu0 0
        %3703 = vmatprep.subr.bf16.mxu0 0
        %3704 = vmatpush2.bf16.msra.mxu0 0
        %3705 = vmatprep.subr.bf16.mxu0 0
        %3706 = vmatpush2.bf16.msra.mxu0 0
        %3707 = vmatprep.subr.bf16.mxu0 0
        %3708 = vmatpush2.bf16.msra.mxu0 0
        %3709 = vmatprep.subr.bf16.mxu0 0
        %3710 = vmatpush2.bf16.msra.mxu0 0
        %3711 = vmatprep.mubr.bf16.mxu0 0
        %3712 = vmatmul.mubr.bf16.gmra.mxu0 %v3634
        %v3713 = vpop.f32.mrf.mxu0
        %v3714 = vadd.f32 %v3674, %v3713
        %v3715 = vpop.f32.mrf.mxu0
        %v3716 = vpop.f32.mrf.mxu0
        %v3717 = vpop.f32.mrf.mxu0
        %3718 = vdwg.mxu0
        %v3719 = vtanh.pop %v3714
        %v3720 = vadd.f32 %v3719, 1.0
        %v3721 = vmul.f32 %v3720, 11.0
        %v3722 = vadd.f32 %v3721, -20.0
        %v3723 = vmul.f32 %v3722, 1.442695
        %v3724 = vpow.pop %v3723
        %3726 = vrot.lane.b32.xlu0 %v504, 8
        %v3727 = vpop.permute.xlu0 %3726
        %v3729 = vmul.f32 %v3724, %v3727
        %3731 = vrot.lane.b32.xlu0 %v3729, 120
        %v3732 = vpop.permute.xlu0 %3731
        %v3734 = vadd.f32 %v3714, %v3732
        %v3735 = vtanh.pop %v3734
        %s3736 = scalar_lea.vmem %s471, 4 [#allocation10]
        %3737 = vst.msk [vmem:[%s3736] sm:$0x3] %vm1584, %v3735
        %s3738 = scalar_lea.vmem %s392, 96 [#allocation5]
        %v3739 = vld [vmem:[%s3738] sm:$0xff]
        %v3740 = vld [vmem:[%s3738 + $0x8] sm:$0xff]
        %v3741 = vld [vmem:[%s3738 + $0x10] sm:$0xff]
        %v3742 = vld [vmem:[%s3738 + $0x18] sm:$0xff]
        %v3743 = vlaneseq
        %v3744 = vshrl.u32 %v3743, 7
        %v3745 = vsub.s32 3, %v3744
        %v3746 = vrot.slane %v494, %v3745
        %v3747 = vlaneseq
        %v3748 = vshrl.u32 %v3747, 7
        %v3749 = vsub.s32 3, %v3748
        %v3750 = vrot.slane %v495, %v3749
        %v3751 = vlaneseq
        %v3752 = vshrl.u32 %v3751, 7
        %v3753 = vsub.s32 3, %v3752
        %v3754 = vrot.slane %v496, %v3753
        %v3755 = vlaneseq
        %v3756 = vshrl.u32 %v3755, 7
        %v3757 = vsub.s32 3, %v3756
        %v3758 = vrot.slane %v497, %v3757
        %v3763 = vunpack.c.l.b16 %v3739
        %v3764 = vunpack.c.h.b16 %v3739
        %v3765 = vunpack.c.l.b16 %v3740
        %v3766 = vunpack.c.h.b16 %v3740
        %v3767 = vunpack.c.l.b16 %v3741
        %v3768 = vunpack.c.h.b16 %v3741
        %v3769 = vunpack.c.l.b16 %v3742
        %v3770 = vunpack.c.h.b16 %v3742
        %v3771 = vpack.c.b16 %v3767, %v3763
        %v3772 = vpack.c.b16 %v3768, %v3764
        %v3773 = vpack.c.b16 %v3769, %v3765
        %v3774 = vpack.c.b16 %v3770, %v3766
        %3779 = vmatprep.subr.bf16.mxu0 0
        %3780 = vmatpush1.bf16.msra.mxu0 0
        %3781 = vmatprep.subr.bf16.mxu0 0
        %3782 = vmatpush1.bf16.msra.mxu0 0
        %3783 = vmatprep.subr.bf16.mxu0 0
        %3784 = vmatpush1.bf16.msra.mxu0 0
        %3785 = vmatprep.subr.bf16.mxu0 0
        %3786 = vmatpush1.bf16.msra.mxu0 0
        %3787 = vmatprep.subr.bf16.mxu0 0
        %3788 = vmatpush1.bf16.msra.mxu0 0
        %3789 = vmatprep.subr.bf16.mxu0 0
        %3790 = vmatpush1.bf16.msra.mxu0 0
        %3791 = vmatprep.subr.bf16.mxu0 0
        %3792 = vmatpush1.bf16.msra.mxu0 0
        %3793 = vmatprep.subr.bf16.mxu0 %v3772
        %3794 = vmatpush1.bf16.msra.mxu0 %v3771
        %3795 = vmatprep.subr.bf16.mxu0 0
        %3796 = vmatpush2.bf16.msra.mxu0 0
        %3797 = vmatprep.subr.bf16.mxu0 0
        %3798 = vmatpush2.bf16.msra.mxu0 0
        %3799 = vmatprep.subr.bf16.mxu0 0
        %3800 = vmatpush2.bf16.msra.mxu0 0
        %3801 = vmatprep.subr.bf16.mxu0 0
        %3802 = vmatpush2.bf16.msra.mxu0 0
        %3803 = vmatprep.subr.bf16.mxu0 0
        %3804 = vmatpush2.bf16.msra.mxu0 0
        %3805 = vmatprep.subr.bf16.mxu0 0
        %3806 = vmatpush2.bf16.msra.mxu0 0
        %3807 = vmatprep.subr.bf16.mxu0 0
        %3808 = vmatpush2.bf16.msra.mxu0 0
        %3809 = vmatprep.subr.bf16.mxu0 0
        %3810 = vmatpush2.bf16.msra.mxu0 0
        %3811 = vmatprep.mubr.bf16.mxu0 0
        %3812 = vmatmul.mubr.bf16.gmra.mxu0 %v549
        %v3813 = vpop.f32.mrf.mxu0
        %v3814 = vadd.f32 %v3746, %v3813
        %v3815 = vpop.f32.mrf.mxu0
        %v3816 = vadd.f32 %v3750, %v3815
        %v3817 = vpop.f32.mrf.mxu0
        %v3818 = vpop.f32.mrf.mxu0
        %3819 = vdwg.mxu0
        %3820 = vmatprep.subr.bf16.mxu0 0
        %3821 = vmatpush1.bf16.msra.mxu0 0
        %3822 = vmatprep.subr.bf16.mxu0 0
        %3823 = vmatpush1.bf16.msra.mxu0 0
        %3824 = vmatprep.subr.bf16.mxu0 0
        %3825 = vmatpush1.bf16.msra.mxu0 0
        %3826 = vmatprep.subr.bf16.mxu0 0
        %3827 = vmatpush1.bf16.msra.mxu0 0
        %3828 = vmatprep.subr.bf16.mxu0 0
        %3829 = vmatpush1.bf16.msra.mxu0 0
        %3830 = vmatprep.subr.bf16.mxu0 0
        %3831 = vmatpush1.bf16.msra.mxu0 0
        %3832 = vmatprep.subr.bf16.mxu0 0
        %3833 = vmatpush1.bf16.msra.mxu0 0
        %3834 = vmatprep.subr.bf16.mxu0 %v3774
        %3835 = vmatpush1.bf16.msra.mxu0 %v3773
        %3836 = vmatprep.subr.bf16.mxu0 0
        %3837 = vmatpush2.bf16.msra.mxu0 0
        %3838 = vmatprep.subr.bf16.mxu0 0
        %3839 = vmatpush2.bf16.msra.mxu0 0
        %3840 = vmatprep.subr.bf16.mxu0 0
        %3841 = vmatpush2.bf16.msra.mxu0 0
        %3842 = vmatprep.subr.bf16.mxu0 0
        %3843 = vmatpush2.bf16.msra.mxu0 0
        %3844 = vmatprep.subr.bf16.mxu0 0
        %3845 = vmatpush2.bf16.msra.mxu0 0
        %3846 = vmatprep.subr.bf16.mxu0 0
        %3847 = vmatpush2.bf16.msra.mxu0 0
        %3848 = vmatprep.subr.bf16.mxu0 0
        %3849 = vmatpush2.bf16.msra.mxu0 0
        %3850 = vmatprep.subr.bf16.mxu0 0
        %3851 = vmatpush2.bf16.msra.mxu0 0
        %3852 = vmatprep.mubr.bf16.mxu0 0
        %3853 = vmatmul.mubr.bf16.gmra.mxu0 %v549
        %v3854 = vpop.f32.mrf.mxu0
        %v3855 = vadd.f32 %v3754, %v3854
        %v3856 = vpop.f32.mrf.mxu0
        %v3857 = vadd.f32 %v3758, %v3856
        %v3858 = vpop.f32.mrf.mxu0
        %v3859 = vpop.f32.mrf.mxu0
        %3860 = vdwg.mxu0
        %v3861 = vmax.f32 %v3814, 0.0
        %v3862 = vmax.f32 %v3816, 0.0
        %v3863 = vmax.f32 %v3855, 0.0
        %v3864 = vmax.f32 %v3857, 0.0
        %v3865 = vpack.c.bf16 %v3861, %v3861
        %v3866 = vpack.c.bf16 %v3862, %v3862
        %v3867 = vpack.c.bf16 %v3863, %v3863
        %v3868 = vpack.c.bf16 %v3864, %v3864
        %s3869 = scalar_lea.vmem %s401, 1800 [#allocation7]
        %v3870 = vld [vmem:[%s3869] sm:$0xff]
        %v3871 = vld [vmem:[%s3869 + $0x8] sm:$0xf]
        %v3872 = vld [vmem:[%s3869 + $0xc] sm:$0xff]
        %v3873 = vld [vmem:[%s3869 + $0x14] sm:$0xf]
        %v3874 = vld [vmem:[%s3869 + $0x18] sm:$0xff]
        %v3875 = vld [vmem:[%s3869 + $0x20] sm:$0xf]
        %v3876 = vld [vmem:[%s3869 + $0x24] sm:$0xff]
        %v3877 = vld [vmem:[%s3869 + $0x2c] sm:$0xf]
        %v3878 = vld [vmem:[%s3869 + $0x30] sm:$0xff]
        %v3879 = vld [vmem:[%s3869 + $0x38] sm:$0xf]
        %v3880 = vld [vmem:[%s3869 + $0x3c] sm:$0xff]
        %v3881 = vld [vmem:[%s3869 + $0x44] sm:$0xf]
        %v3882 = vld [vmem:[%s3869 + $0x48] sm:$0xff]
        %v3883 = vld [vmem:[%s3869 + $0x50] sm:$0xf]
        %v3884 = vld [vmem:[%s3869 + $0x54] sm:$0xff]
        %v3885 = vld [vmem:[%s3869 + $0x5c] sm:$0xf]
        %v3886 = vld [vmem:[%s3869 + $0x60] sm:$0xff]
        %v3887 = vld [vmem:[%s3869 + $0x68] sm:$0xf]
        %v3888 = vld [vmem:[%s3869 + $0x6c] sm:$0xff]
        %v3889 = vld [vmem:[%s3869 + $0x74] sm:$0xf]
        %v3890 = vld [vmem:[%s3869 + $0x78] sm:$0xff]
        %v3891 = vld [vmem:[%s3869 + $0x80] sm:$0xf]
        %v3892 = vld [vmem:[%s3869 + $0x84] sm:$0xff]
        %v3893 = vld [vmem:[%s3869 + $0x8c] sm:$0xf]
        %v3894 = vld [vmem:[%s3869 + $0x90] sm:$0xff]
        %v3895 = vld [vmem:[%s3869 + $0x98] sm:$0xf]
        %v3896 = vld [vmem:[%s3869 + $0x9c] sm:$0xff]
        %v3897 = vld [vmem:[%s3869 + $0xa4] sm:$0xf]
        %v3898 = vld [vmem:[%s3869 + $0xa8] sm:$0xff]
        %v3899 = vld [vmem:[%s3869 + $0xb0] sm:$0xf]
        %v3900 = vld [vmem:[%s3869 + $0xb4] sm:$0xff]
        %v3901 = vld [vmem:[%s3869 + $0xbc] sm:$0xf]
        %v3902 = vld [vmem:[%s3869 + $0xc0] sm:$0xff]
        %v3903 = vld [vmem:[%s3869 + $0xc8] sm:$0xf]
        %v3904 = vld [vmem:[%s3869 + $0xcc] sm:$0xff]
        %v3905 = vld [vmem:[%s3869 + $0xd4] sm:$0xf]
        %v3906 = vld [vmem:[%s3869 + $0xd8] sm:$0xff]
        %v3907 = vld [vmem:[%s3869 + $0xe0] sm:$0xf]
        %v3908 = vld [vmem:[%s3869 + $0xe4] sm:$0xff]
        %v3909 = vld [vmem:[%s3869 + $0xec] sm:$0xf]
        %v3910 = vld [vmem:[%s3869 + $0xf0] sm:$0xff]
        %v3911 = vld [vmem:[%s3869 + $0xf8] sm:$0xf]
        %v3912 = vld [vmem:[%s3869 + $0xfc] sm:$0xff]
        %v3913 = vld [vmem:[%s3869 + $0x104] sm:$0xf]
        %v3914 = vld [vmem:[%s3869 + $0x108] sm:$0xff]
        %v3915 = vld [vmem:[%s3869 + $0x110] sm:$0xf]
        %v3916 = vld [vmem:[%s3869 + $0x114] sm:$0xff]
        %v3917 = vld [vmem:[%s3869 + $0x11c] sm:$0xf]
        %v3918 = vld [vmem:[%s3869 + $0x120] sm:$0xff]
        %v3919 = vld [vmem:[%s3869 + $0x128] sm:$0xf]
        %v3920 = vld [vmem:[%s3869 + $0x12c] sm:$0xff]
        %v3921 = vld [vmem:[%s3869 + $0x134] sm:$0xf]
        %v3922 = vld [vmem:[%s3869 + $0x138] sm:$0xff]
        %v3923 = vld [vmem:[%s3869 + $0x140] sm:$0xf]
        %v3924 = vld [vmem:[%s3869 + $0x144] sm:$0xff]
        %v3925 = vld [vmem:[%s3869 + $0x14c] sm:$0xf]
        %v3926 = vld [vmem:[%s3869 + $0x150] sm:$0xff]
        %v3927 = vld [vmem:[%s3869 + $0x158] sm:$0xf]
        %v3928 = vld [vmem:[%s3869 + $0x15c] sm:$0xff]
        %v3929 = vld [vmem:[%s3869 + $0x164] sm:$0xf]
        %v3930 = vld [vmem:[%s3869 + $0x168] sm:$0xff]
        %v3931 = vld [vmem:[%s3869 + $0x170] sm:$0xf]
        %v3932 = vld [vmem:[%s3869 + $0x174] sm:$0xff]
        %v3933 = vld [vmem:[%s3869 + $0x17c] sm:$0xf]
        %v3934 = vld [vmem:[%s3869 + $0x180] sm:$0xff]
        %v3935 = vld [vmem:[%s3869 + $0x188] sm:$0xf]
        %v3936 = vld [vmem:[%s3869 + $0x18c] sm:$0xff]
        %v3937 = vld [vmem:[%s3869 + $0x194] sm:$0xf]
        %v3938 = vld [vmem:[%s3869 + $0x198] sm:$0xff]
        %v3939 = vld [vmem:[%s3869 + $0x1a0] sm:$0xf]
        %v3940 = vld [vmem:[%s3869 + $0x1a4] sm:$0xff]
        %v3941 = vld [vmem:[%s3869 + $0x1ac] sm:$0xf]
        %v3942 = vld [vmem:[%s3869 + $0x1b0] sm:$0xff]
        %v3943 = vld [vmem:[%s3869 + $0x1b8] sm:$0xf]
        %v3944 = vld [vmem:[%s3869 + $0x1bc] sm:$0xff]
        %v3945 = vld [vmem:[%s3869 + $0x1c4] sm:$0xf]
        %v3946 = vld [vmem:[%s3869 + $0x1c8] sm:$0xff]
        %v3947 = vld [vmem:[%s3869 + $0x1d0] sm:$0xf]
        %v3948 = vld [vmem:[%s3869 + $0x1d4] sm:$0xff]
        %v3949 = vld [vmem:[%s3869 + $0x1dc] sm:$0xf]
        %v3950 = vld [vmem:[%s3869 + $0x1e0] sm:$0xff]
        %v3951 = vld [vmem:[%s3869 + $0x1e8] sm:$0xf]
        %v3952 = vld [vmem:[%s3869 + $0x1ec] sm:$0xff]
        %v3953 = vld [vmem:[%s3869 + $0x1f4] sm:$0xf]
        %v3954 = vld [vmem:[%s3869 + $0x1f8] sm:$0xff]
        %v3955 = vld [vmem:[%s3869 + $0x200] sm:$0xf]
        %v3956 = vld [vmem:[%s3869 + $0x204] sm:$0xff]
        %v3957 = vld [vmem:[%s3869 + $0x20c] sm:$0xf]
        %v3958 = vld [vmem:[%s3869 + $0x210] sm:$0xff]
        %v3959 = vld [vmem:[%s3869 + $0x218] sm:$0xf]
        %v3960 = vld [vmem:[%s3869 + $0x21c] sm:$0xff]
        %v3961 = vld [vmem:[%s3869 + $0x224] sm:$0xf]
        %v3962 = vld [vmem:[%s3869 + $0x228] sm:$0xff]
        %v3963 = vld [vmem:[%s3869 + $0x230] sm:$0xf]
        %v3964 = vld [vmem:[%s3869 + $0x234] sm:$0xff]
        %v3965 = vld [vmem:[%s3869 + $0x23c] sm:$0xf]
        %v3966 = vld [vmem:[%s3869 + $0x240] sm:$0xff]
        %v3967 = vld [vmem:[%s3869 + $0x248] sm:$0xf]
        %v3968 = vld [vmem:[%s3869 + $0x24c] sm:$0xff]
        %v3969 = vld [vmem:[%s3869 + $0x254] sm:$0xf]
        %v3970 = vlaneseq
        %v3971 = vshrl.u32 %v3970, 7
        %v3972 = vsub.s32 3, %v3971
        %v3973 = vrot.slane %v498, %v3972
        %v3974 = vlaneseq
        %v3975 = vshrl.u32 %v3974, 7
        %v3976 = vsub.s32 3, %v3975
        %v3977 = vrot.slane %v499, %v3976
        %v3978 = vlaneseq
        %v3979 = vshrl.u32 %v3978, 7
        %v3980 = vsub.s32 3, %v3979
        %v3981 = vrot.slane %v500, %v3980
        %v4082 = vunpack.c.l.b16 %v3870
        %v4083 = vunpack.c.h.b16 %v3870
        %v4084 = vunpack.c.l.b16 %v3871
        %v4085 = vunpack.c.l.b16 %v3872
        %v4086 = vunpack.c.h.b16 %v3872
        %v4087 = vunpack.c.l.b16 %v3873
        %v4088 = vunpack.c.l.b16 %v3874
        %v4089 = vunpack.c.h.b16 %v3874
        %v4090 = vunpack.c.l.b16 %v3875
        %v4091 = vunpack.c.l.b16 %v3876
        %v4092 = vunpack.c.h.b16 %v3876
        %v4093 = vunpack.c.l.b16 %v3877
        %v4094 = vunpack.c.l.b16 %v3878
        %v4095 = vunpack.c.h.b16 %v3878
        %v4096 = vunpack.c.l.b16 %v3879
        %v4097 = vunpack.c.l.b16 %v3880
        %v4098 = vunpack.c.h.b16 %v3880
        %v4099 = vunpack.c.l.b16 %v3881
        %v4100 = vunpack.c.l.b16 %v3882
        %v4101 = vunpack.c.h.b16 %v3882
        %v4102 = vunpack.c.l.b16 %v3883
        %v4103 = vunpack.c.l.b16 %v3884
        %v4104 = vunpack.c.h.b16 %v3884
        %v4105 = vunpack.c.l.b16 %v3885
        %v4106 = vunpack.c.l.b16 %v3886
        %v4107 = vunpack.c.h.b16 %v3886
        %v4108 = vunpack.c.l.b16 %v3887
        %v4109 = vunpack.c.l.b16 %v3888
        %v4110 = vunpack.c.h.b16 %v3888
        %v4111 = vunpack.c.l.b16 %v3889
        %v4112 = vunpack.c.l.b16 %v3890
        %v4113 = vunpack.c.h.b16 %v3890
        %v4114 = vunpack.c.l.b16 %v3891
        %v4115 = vunpack.c.l.b16 %v3892
        %v4116 = vunpack.c.h.b16 %v3892
        %v4117 = vunpack.c.l.b16 %v3893
        %v4118 = vunpack.c.l.b16 %v3894
        %v4119 = vunpack.c.h.b16 %v3894
        %v4120 = vunpack.c.l.b16 %v3895
        %v4121 = vunpack.c.l.b16 %v3896
        %v4122 = vunpack.c.h.b16 %v3896
        %v4123 = vunpack.c.l.b16 %v3897
        %v4124 = vunpack.c.l.b16 %v3898
        %v4125 = vunpack.c.h.b16 %v3898
        %v4126 = vunpack.c.l.b16 %v3899
        %v4127 = vunpack.c.l.b16 %v3900
        %v4128 = vunpack.c.h.b16 %v3900
        %v4129 = vunpack.c.l.b16 %v3901
        %v4130 = vunpack.c.l.b16 %v3902
        %v4131 = vunpack.c.h.b16 %v3902
        %v4132 = vunpack.c.l.b16 %v3903
        %v4133 = vunpack.c.l.b16 %v3904
        %v4134 = vunpack.c.h.b16 %v3904
        %v4135 = vunpack.c.l.b16 %v3905
        %v4136 = vunpack.c.l.b16 %v3906
        %v4137 = vunpack.c.h.b16 %v3906
        %v4138 = vunpack.c.l.b16 %v3907
        %v4139 = vunpack.c.l.b16 %v3908
        %v4140 = vunpack.c.h.b16 %v3908
        %v4141 = vunpack.c.l.b16 %v3909
        %v4142 = vunpack.c.l.b16 %v3910
        %v4143 = vunpack.c.h.b16 %v3910
        %v4144 = vunpack.c.l.b16 %v3911
        %v4145 = vunpack.c.l.b16 %v3912
        %v4146 = vunpack.c.h.b16 %v3912
        %v4147 = vunpack.c.l.b16 %v3913
        %v4148 = vunpack.c.l.b16 %v3914
        %v4149 = vunpack.c.h.b16 %v3914
        %v4150 = vunpack.c.l.b16 %v3915
        %v4151 = vunpack.c.l.b16 %v3916
        %v4152 = vunpack.c.h.b16 %v3916
        %v4153 = vunpack.c.l.b16 %v3917
        %v4154 = vunpack.c.l.b16 %v3918
        %v4155 = vunpack.c.h.b16 %v3918
        %v4156 = vunpack.c.l.b16 %v3919
        %v4157 = vunpack.c.l.b16 %v3920
        %v4158 = vunpack.c.h.b16 %v3920
        %v4159 = vunpack.c.l.b16 %v3921
        %v4160 = vunpack.c.l.b16 %v3922
        %v4161 = vunpack.c.h.b16 %v3922
        %v4162 = vunpack.c.l.b16 %v3923
        %v4163 = vunpack.c.l.b16 %v3924
        %v4164 = vunpack.c.h.b16 %v3924
        %v4165 = vunpack.c.l.b16 %v3925
        %v4166 = vunpack.c.l.b16 %v3926
        %v4167 = vunpack.c.h.b16 %v3926
        %v4168 = vunpack.c.l.b16 %v3927
        %v4169 = vunpack.c.l.b16 %v3928
        %v4170 = vunpack.c.h.b16 %v3928
        %v4171 = vunpack.c.l.b16 %v3929
        %v4172 = vunpack.c.l.b16 %v3930
        %v4173 = vunpack.c.h.b16 %v3930
        %v4174 = vunpack.c.l.b16 %v3931
        %v4175 = vunpack.c.l.b16 %v3932
        %v4176 = vunpack.c.h.b16 %v3932
        %v4177 = vunpack.c.l.b16 %v3933
        %v4178 = vunpack.c.l.b16 %v3934
        %v4179 = vunpack.c.h.b16 %v3934
        %v4180 = vunpack.c.l.b16 %v3935
        %v4181 = vunpack.c.l.b16 %v3936
        %v4182 = vunpack.c.h.b16 %v3936
        %v4183 = vunpack.c.l.b16 %v3937
        %v4184 = vunpack.c.l.b16 %v3938
        %v4185 = vunpack.c.h.b16 %v3938
        %v4186 = vunpack.c.l.b16 %v3939
        %v4187 = vunpack.c.l.b16 %v3940
        %v4188 = vunpack.c.h.b16 %v3940
        %v4189 = vunpack.c.l.b16 %v3941
        %v4190 = vunpack.c.l.b16 %v3942
        %v4191 = vunpack.c.h.b16 %v3942
        %v4192 = vunpack.c.l.b16 %v3943
        %v4193 = vunpack.c.l.b16 %v3944
        %v4194 = vunpack.c.h.b16 %v3944
        %v4195 = vunpack.c.l.b16 %v3945
        %v4196 = vunpack.c.l.b16 %v3946
        %v4197 = vunpack.c.h.b16 %v3946
        %v4198 = vunpack.c.l.b16 %v3947
        %v4199 = vunpack.c.l.b16 %v3948
        %v4200 = vunpack.c.h.b16 %v3948
        %v4201 = vunpack.c.l.b16 %v3949
        %v4202 = vunpack.c.l.b16 %v3950
        %v4203 = vunpack.c.h.b16 %v3950
        %v4204 = vunpack.c.l.b16 %v3951
        %v4205 = vunpack.c.l.b16 %v3952
        %v4206 = vunpack.c.h.b16 %v3952
        %v4207 = vunpack.c.l.b16 %v3953
        %v4208 = vunpack.c.l.b16 %v3954
        %v4209 = vunpack.c.h.b16 %v3954
        %v4210 = vunpack.c.l.b16 %v3955
        %v4211 = vunpack.c.l.b16 %v3956
        %v4212 = vunpack.c.h.b16 %v3956
        %v4213 = vunpack.c.l.b16 %v3957
        %v4214 = vunpack.c.l.b16 %v3958
        %v4215 = vunpack.c.h.b16 %v3958
        %v4216 = vunpack.c.l.b16 %v3959
        %v4217 = vunpack.c.l.b16 %v3960
        %v4218 = vunpack.c.h.b16 %v3960
        %v4219 = vunpack.c.l.b16 %v3961
        %v4220 = vunpack.c.l.b16 %v3962
        %v4221 = vunpack.c.h.b16 %v3962
        %v4222 = vunpack.c.l.b16 %v3963
        %v4223 = vunpack.c.l.b16 %v3964
        %v4224 = vunpack.c.h.b16 %v3964
        %v4225 = vunpack.c.l.b16 %v3965
        %v4226 = vunpack.c.l.b16 %v3966
        %v4227 = vunpack.c.h.b16 %v3966
        %v4228 = vunpack.c.l.b16 %v3967
        %v4229 = vunpack.c.l.b16 %v3968
        %v4230 = vunpack.c.h.b16 %v3968
        %v4231 = vunpack.c.l.b16 %v3969
        %v4232 = vpack.c.b16 %v4085, %v4082
        %v4233 = vpack.c.b16 %v4086, %v4083
        %v4234 = vpack.c.b16 %v4087, %v4084
        %v4235 = vpack.c.b16 %v4091, %v4088
        %v4236 = vpack.c.b16 %v4092, %v4089
        %v4237 = vpack.c.b16 %v4093, %v4090
        %v4238 = vpack.c.b16 %v4097, %v4094
        %v4239 = vpack.c.b16 %v4098, %v4095
        %v4240 = vpack.c.b16 %v4099, %v4096
        %v4241 = vpack.c.b16 %v4103, %v4100
        %v4242 = vpack.c.b16 %v4104, %v4101
        %v4243 = vpack.c.b16 %v4105, %v4102
        %v4244 = vpack.c.b16 %v4109, %v4106
        %v4245 = vpack.c.b16 %v4110, %v4107
        %v4246 = vpack.c.b16 %v4111, %v4108
        %v4247 = vpack.c.b16 %v4115, %v4112
        %v4248 = vpack.c.b16 %v4116, %v4113
        %v4249 = vpack.c.b16 %v4117, %v4114
        %v4250 = vpack.c.b16 %v4121, %v4118
        %v4251 = vpack.c.b16 %v4122, %v4119
        %v4252 = vpack.c.b16 %v4123, %v4120
        %v4253 = vpack.c.b16 %v4127, %v4124
        %v4254 = vpack.c.b16 %v4128, %v4125
        %v4255 = vpack.c.b16 %v4129, %v4126
        %v4256 = vpack.c.b16 %v4133, %v4130
        %v4257 = vpack.c.b16 %v4134, %v4131
        %v4258 = vpack.c.b16 %v4135, %v4132
        %v4259 = vpack.c.b16 %v4139, %v4136
        %v4260 = vpack.c.b16 %v4140, %v4137
        %v4261 = vpack.c.b16 %v4141, %v4138
        %v4262 = vpack.c.b16 %v4145, %v4142
        %v4263 = vpack.c.b16 %v4146, %v4143
        %v4264 = vpack.c.b16 %v4147, %v4144
        %v4265 = vpack.c.b16 %v4151, %v4148
        %v4266 = vpack.c.b16 %v4152, %v4149
        %v4267 = vpack.c.b16 %v4153, %v4150
        %v4268 = vpack.c.b16 %v4157, %v4154
        %v4269 = vpack.c.b16 %v4158, %v4155
        %v4270 = vpack.c.b16 %v4159, %v4156
        %v4271 = vpack.c.b16 %v4163, %v4160
        %v4272 = vpack.c.b16 %v4164, %v4161
        %v4273 = vpack.c.b16 %v4165, %v4162
        %v4274 = vpack.c.b16 %v4169, %v4166
        %v4275 = vpack.c.b16 %v4170, %v4167
        %v4276 = vpack.c.b16 %v4171, %v4168
        %v4277 = vpack.c.b16 %v4175, %v4172
        %v4278 = vpack.c.b16 %v4176, %v4173
        %v4279 = vpack.c.b16 %v4177, %v4174
        %v4280 = vpack.c.b16 %v4181, %v4178
        %v4281 = vpack.c.b16 %v4182, %v4179
        %v4282 = vpack.c.b16 %v4183, %v4180
        %v4283 = vpack.c.b16 %v4187, %v4184
        %v4284 = vpack.c.b16 %v4188, %v4185
        %v4285 = vpack.c.b16 %v4189, %v4186
        %v4286 = vpack.c.b16 %v4193, %v4190
        %v4287 = vpack.c.b16 %v4194, %v4191
        %v4288 = vpack.c.b16 %v4195, %v4192
        %v4289 = vpack.c.b16 %v4199, %v4196
        %v4290 = vpack.c.b16 %v4200, %v4197
        %v4291 = vpack.c.b16 %v4201, %v4198
        %v4292 = vpack.c.b16 %v4205, %v4202
        %v4293 = vpack.c.b16 %v4206, %v4203
        %v4294 = vpack.c.b16 %v4207, %v4204
        %v4295 = vpack.c.b16 %v4211, %v4208
        %v4296 = vpack.c.b16 %v4212, %v4209
        %v4297 = vpack.c.b16 %v4213, %v4210
        %v4298 = vpack.c.b16 %v4217, %v4214
        %v4299 = vpack.c.b16 %v4218, %v4215
        %v4300 = vpack.c.b16 %v4219, %v4216
        %v4301 = vpack.c.b16 %v4223, %v4220
        %v4302 = vpack.c.b16 %v4224, %v4221
        %v4303 = vpack.c.b16 %v4225, %v4222
        %v4304 = vpack.c.b16 %v4229, %v4226
        %v4305 = vpack.c.b16 %v4230, %v4227
        %v4306 = vpack.c.b16 %v4231, %v4228
        %v4383 = vsel %vm547, %v3868, 0
        %4385 = vmatprep.subr.bf16.mxu0 %v4254
        %4386 = vmatpush1.bf16.msra.mxu0 %v4253
        %4387 = vmatprep.subr.bf16.mxu0 %v4251
        %4388 = vmatpush1.bf16.msra.mxu0 %v4250
        %4389 = vmatprep.subr.bf16.mxu0 %v4248
        %4390 = vmatpush1.bf16.msra.mxu0 %v4247
        %4391 = vmatprep.subr.bf16.mxu0 %v4245
        %4392 = vmatpush1.bf16.msra.mxu0 %v4244
        %4393 = vmatprep.subr.bf16.mxu0 %v4242
        %4394 = vmatpush1.bf16.msra.mxu0 %v4241
        %4395 = vmatprep.subr.bf16.mxu0 %v4239
        %4396 = vmatpush1.bf16.msra.mxu0 %v4238
        %4397 = vmatprep.subr.bf16.mxu0 %v4236
        %4398 = vmatpush1.bf16.msra.mxu0 %v4235
        %4399 = vmatprep.subr.bf16.mxu0 %v4233
        %4400 = vmatpush1.bf16.msra.mxu0 %v4232
        %4401 = vmatprep.subr.bf16.mxu0 %v4278
        %4402 = vmatpush2.bf16.msra.mxu0 %v4277
        %4403 = vmatprep.subr.bf16.mxu0 %v4275
        %4404 = vmatpush2.bf16.msra.mxu0 %v4274
        %4405 = vmatprep.subr.bf16.mxu0 %v4272
        %4406 = vmatpush2.bf16.msra.mxu0 %v4271
        %4407 = vmatprep.subr.bf16.mxu0 %v4269
        %4408 = vmatpush2.bf16.msra.mxu0 %v4268
        %4409 = vmatprep.subr.bf16.mxu0 %v4266
        %4410 = vmatpush2.bf16.msra.mxu0 %v4265
        %4411 = vmatprep.subr.bf16.mxu0 %v4263
        %4412 = vmatpush2.bf16.msra.mxu0 %v4262
        %4413 = vmatprep.subr.bf16.mxu0 %v4260
        %4414 = vmatpush2.bf16.msra.mxu0 %v4259
        %4415 = vmatprep.subr.bf16.mxu0 %v4257
        %4416 = vmatpush2.bf16.msra.mxu0 %v4256
        %4417 = vmatprep.mubr.bf16.mxu0 %v3866
        %4418 = vmatmul.mubr.bf16.gmra.mxu0 %v3865
        %v4419 = vpop.f32.mrf.mxu0
        %v4420 = vadd.f32 %v3973, %v4419
        %v4421 = vpop.f32.mrf.mxu0
        %v4422 = vadd.f32 %v3977, %v4421
        %v4423 = vpop.f32.mrf.mxu0
        %v4424 = vpop.f32.mrf.mxu0
        %4425 = vdwg.mxu0
        %4426 = vmatprep.subr.bf16.mxu0 %v4302
        %4427 = vmatpush1.bf16.msra.mxu0 %v4301
        %4428 = vmatprep.subr.bf16.mxu0 %v4299
        %4429 = vmatpush1.bf16.msra.mxu0 %v4298
        %4430 = vmatprep.subr.bf16.mxu0 %v4296
        %4431 = vmatpush1.bf16.msra.mxu0 %v4295
        %4432 = vmatprep.subr.bf16.mxu0 %v4293
        %4433 = vmatpush1.bf16.msra.mxu0 %v4292
        %4434 = vmatprep.subr.bf16.mxu0 %v4290
        %4435 = vmatpush1.bf16.msra.mxu0 %v4289
        %4436 = vmatprep.subr.bf16.mxu0 %v4287
        %4437 = vmatpush1.bf16.msra.mxu0 %v4286
        %4438 = vmatprep.subr.bf16.mxu0 %v4284
        %4439 = vmatpush1.bf16.msra.mxu0 %v4283
        %4440 = vmatprep.subr.bf16.mxu0 %v4281
        %4441 = vmatpush1.bf16.msra.mxu0 %v4280
        %4442 = vmatprep.subr.bf16.mxu0 0
        %4443 = vmatpush2.bf16.msra.mxu0 0
        %4444 = vmatprep.subr.bf16.mxu0 0
        %4445 = vmatpush2.bf16.msra.mxu0 0
        %4446 = vmatprep.subr.bf16.mxu0 0
        %4447 = vmatpush2.bf16.msra.mxu0 0
        %4448 = vmatprep.subr.bf16.mxu0 0
        %4449 = vmatpush2.bf16.msra.mxu0 0
        %4450 = vmatprep.subr.bf16.mxu0 0
        %4451 = vmatpush2.bf16.msra.mxu0 0
        %4452 = vmatprep.subr.bf16.mxu0 0
        %4453 = vmatpush2.bf16.msra.mxu0 0
        %4454 = vmatprep.subr.bf16.mxu0 0
        %4455 = vmatpush2.bf16.msra.mxu0 0
        %4456 = vmatprep.subr.bf16.mxu0 %v4305
        %4457 = vmatpush2.bf16.msra.mxu0 %v4304
        %4458 = vmatprep.mubr.bf16.mxu0 %v4383
        %4459 = vmatmul.mubr.bf16.gmra.mxu0 %v3867
        %v4460 = vpop.f32.mrf.mxu0
        %v4461 = vadd.f32 %v4420, %v4460
        %v4462 = vpop.f32.mrf.mxu0
        %v4463 = vadd.f32 %v4422, %v4462
        %v4464 = vpop.f32.mrf.mxu0
        %v4465 = vpop.f32.mrf.mxu0
        %4466 = vdwg.mxu0
        %4467 = vmatprep.subr.bf16.mxu0 0
        %4468 = vmatpush1.bf16.msra.mxu0 %v4255
        %4469 = vmatprep.subr.bf16.mxu0 0
        %4470 = vmatpush1.bf16.msra.mxu0 %v4252
        %4471 = vmatprep.subr.bf16.mxu0 0
        %4472 = vmatpush1.bf16.msra.mxu0 %v4249
        %4473 = vmatprep.subr.bf16.mxu0 0
        %4474 = vmatpush1.bf16.msra.mxu0 %v4246
        %4475 = vmatprep.subr.bf16.mxu0 0
        %4476 = vmatpush1.bf16.msra.mxu0 %v4243
        %4477 = vmatprep.subr.bf16.mxu0 0
        %4478 = vmatpush1.bf16.msra.mxu0 %v4240
        %4479 = vmatprep.subr.bf16.mxu0 0
        %4480 = vmatpush1.bf16.msra.mxu0 %v4237
        %4481 = vmatprep.subr.bf16.mxu0 0
        %4482 = vmatpush1.bf16.msra.mxu0 %v4234
        %4483 = vmatprep.subr.bf16.mxu0 0
        %4484 = vmatpush2.bf16.msra.mxu0 %v4279
        %4485 = vmatprep.subr.bf16.mxu0 0
        %4486 = vmatpush2.bf16.msra.mxu0 %v4276
        %4487 = vmatprep.subr.bf16.mxu0 0
        %4488 = vmatpush2.bf16.msra.mxu0 %v4273
        %4489 = vmatprep.subr.bf16.mxu0 0
        %4490 = vmatpush2.bf16.msra.mxu0 %v4270
        %4491 = vmatprep.subr.bf16.mxu0 0
        %4492 = vmatpush2.bf16.msra.mxu0 %v4267
        %4493 = vmatprep.subr.bf16.mxu0 0
        %4494 = vmatpush2.bf16.msra.mxu0 %v4264
        %4495 = vmatprep.subr.bf16.mxu0 0
        %4496 = vmatpush2.bf16.msra.mxu0 %v4261
        %4497 = vmatprep.subr.bf16.mxu0 0
        %4498 = vmatpush2.bf16.msra.mxu0 %v4258
        %4499 = vmatprep.mubr.bf16.mxu0 %v3866
        %4500 = vmatmul.mubr.bf16.gmra.mxu0 %v3865
        %v4501 = vpop.f32.mrf.mxu0
        %v4502 = vadd.f32 %v3981, %v4501
        %v4503 = vpop.f32.mrf.mxu0
        %v4504 = vpop.f32.mrf.mxu0
        %v4505 = vpop.f32.mrf.mxu0
        %4506 = vdwg.mxu0
        %4507 = vmatprep.subr.bf16.mxu0 0
        %4508 = vmatpush1.bf16.msra.mxu0 %v4303
        %4509 = vmatprep.subr.bf16.mxu0 0
        %4510 = vmatpush1.bf16.msra.mxu0 %v4300
        %4511 = vmatprep.subr.bf16.mxu0 0
        %4512 = vmatpush1.bf16.msra.mxu0 %v4297
        %4513 = vmatprep.subr.bf16.mxu0 0
        %4514 = vmatpush1.bf16.msra.mxu0 %v4294
        %4515 = vmatprep.subr.bf16.mxu0 0
        %4516 = vmatpush1.bf16.msra.mxu0 %v4291
        %4517 = vmatprep.subr.bf16.mxu0 0
        %4518 = vmatpush1.bf16.msra.mxu0 %v4288
        %4519 = vmatprep.subr.bf16.mxu0 0
        %4520 = vmatpush1.bf16.msra.mxu0 %v4285
        %4521 = vmatprep.subr.bf16.mxu0 0
        %4522 = vmatpush1.bf16.msra.mxu0 %v4282
        %4523 = vmatprep.subr.bf16.mxu0 0
        %4524 = vmatpush2.bf16.msra.mxu0 0
        %4525 = vmatprep.subr.bf16.mxu0 0
        %4526 = vmatpush2.bf16.msra.mxu0 0
        %4527 = vmatprep.subr.bf16.mxu0 0
        %4528 = vmatpush2.bf16.msra.mxu0 0
        %4529 = vmatprep.subr.bf16.mxu0 0
        %4530 = vmatpush2.bf16.msra.mxu0 0
        %4531 = vmatprep.subr.bf16.mxu0 0
        %4532 = vmatpush2.bf16.msra.mxu0 0
        %4533 = vmatprep.subr.bf16.mxu0 0
        %4534 = vmatpush2.bf16.msra.mxu0 0
        %4535 = vmatprep.subr.bf16.mxu0 0
        %4536 = vmatpush2.bf16.msra.mxu0 0
        %4537 = vmatprep.subr.bf16.mxu0 0
        %4538 = vmatpush2.bf16.msra.mxu0 %v4306
        %4539 = vmatprep.mubr.bf16.mxu0 %v4383
        %4540 = vmatmul.mubr.bf16.gmra.mxu0 %v3867
        %v4541 = vpop.f32.mrf.mxu0
        %v4542 = vadd.f32 %v4502, %v4541
        %v4543 = vpop.f32.mrf.mxu0
        %v4544 = vpop.f32.mrf.mxu0
        %v4545 = vpop.f32.mrf.mxu0
        %4546 = vdwg.mxu0
        %v4547 = vmax.f32 %v4461, 0.0
        %v4548 = vmax.f32 %v4463, 0.0
        %v4549 = vmax.f32 %v4542, 0.0
        %v4550 = vpack.c.bf16 %v4547, %v4547
        %v4551 = vpack.c.bf16 %v4548, %v4548
        %v4552 = vpack.c.bf16 %v4549, %v4549
        %s4553 = scalar_lea.vmem %s486, 456
        %v4554 = vld [vmem:[%s4553] sm:$0xf]
        %v4555 = vld [vmem:[%s4553 + $0x4] sm:$0xf]
        %v4556 = vld [vmem:[%s4553 + $0x8] sm:$0xf]
        %v4557 = vld [vmem:[%s4553 + $0xc] sm:$0xf]
        %v4558 = vld [vmem:[%s4553 + $0x10] sm:$0xf]
        %v4559 = vld [vmem:[%s4553 + $0x14] sm:$0xf]
        %v4560 = vld [vmem:[%s4553 + $0x18] sm:$0xf]
        %v4561 = vld [vmem:[%s4553 + $0x1c] sm:$0xf]
        %v4562 = vld [vmem:[%s4553 + $0x20] sm:$0xf]
        %v4563 = vld [vmem:[%s4553 + $0x24] sm:$0xf]
        %v4564 = vld [vmem:[%s4553 + $0x28] sm:$0xf]
        %v4565 = vld [vmem:[%s4553 + $0x2c] sm:$0xf]
        %v4566 = vld [vmem:[%s4553 + $0x30] sm:$0xf]
        %v4567 = vld [vmem:[%s4553 + $0x34] sm:$0xf]
        %v4568 = vld [vmem:[%s4553 + $0x38] sm:$0xf]
        %v4569 = vld [vmem:[%s4553 + $0x3c] sm:$0xf]
        %v4570 = vld [vmem:[%s4553 + $0x40] sm:$0xf]
        %v4571 = vld [vmem:[%s4553 + $0x44] sm:$0xf]
        %v4572 = vld [vmem:[%s4553 + $0x48] sm:$0xf]
        %v4573 = vld [vmem:[%s4553 + $0x4c] sm:$0xf]
        %v4574 = vld [vmem:[%s4553 + $0x50] sm:$0xf]
        %v4575 = vld [vmem:[%s4553 + $0x54] sm:$0xf]
        %v4576 = vld [vmem:[%s4553 + $0x58] sm:$0xf]
        %v4577 = vld [vmem:[%s4553 + $0x5c] sm:$0xf]
        %v4578 = vld [vmem:[%s4553 + $0x60] sm:$0xf]
        %v4579 = vld [vmem:[%s4553 + $0x64] sm:$0xf]
        %v4580 = vld [vmem:[%s4553 + $0x68] sm:$0xf]
        %v4581 = vld [vmem:[%s4553 + $0x6c] sm:$0xf]
        %v4582 = vld [vmem:[%s4553 + $0x70] sm:$0xf]
        %v4583 = vld [vmem:[%s4553 + $0x74] sm:$0xf]
        %v4584 = vld [vmem:[%s4553 + $0x78] sm:$0xf]
        %v4585 = vld [vmem:[%s4553 + $0x7c] sm:$0xf]
        %v4586 = vld [vmem:[%s4553 + $0x80] sm:$0xf]
        %v4587 = vld [vmem:[%s4553 + $0x84] sm:$0xf]
        %v4588 = vld [vmem:[%s4553 + $0x88] sm:$0xf]
        %v4589 = vld [vmem:[%s4553 + $0x8c] sm:$0xf]
        %v4590 = vld [vmem:[%s4553 + $0x90] sm:$0xf]
        %v4591 = vld [vmem:[%s4553 + $0x94] sm:$0x3]
        %v4592 = vlaneseq
        %v4593 = vshrl.u32 %v4592, 7
        %v4594 = vsub.s32 3, %v4593
        %v4595 = vrot.slane %v501, %v4594
        %v4634 = vunpack.c.l.b16 %v4554
        %v4635 = vunpack.c.l.b16 %v4555
        %v4636 = vunpack.c.l.b16 %v4556
        %v4637 = vunpack.c.l.b16 %v4557
        %v4638 = vunpack.c.l.b16 %v4558
        %v4639 = vunpack.c.l.b16 %v4559
        %v4640 = vunpack.c.l.b16 %v4560
        %v4641 = vunpack.c.l.b16 %v4561
        %v4642 = vunpack.c.l.b16 %v4562
        %v4643 = vunpack.c.l.b16 %v4563
        %v4644 = vunpack.c.l.b16 %v4564
        %v4645 = vunpack.c.l.b16 %v4565
        %v4646 = vunpack.c.l.b16 %v4566
        %v4647 = vunpack.c.l.b16 %v4567
        %v4648 = vunpack.c.l.b16 %v4568
        %v4649 = vunpack.c.l.b16 %v4569
        %v4650 = vunpack.c.l.b16 %v4570
        %v4651 = vunpack.c.l.b16 %v4571
        %v4652 = vunpack.c.l.b16 %v4572
        %v4653 = vunpack.c.l.b16 %v4573
        %v4654 = vunpack.c.l.b16 %v4574
        %v4655 = vunpack.c.l.b16 %v4575
        %v4656 = vunpack.c.l.b16 %v4576
        %v4657 = vunpack.c.l.b16 %v4577
        %v4658 = vunpack.c.l.b16 %v4578
        %v4659 = vunpack.c.l.b16 %v4579
        %v4660 = vunpack.c.l.b16 %v4580
        %v4661 = vunpack.c.l.b16 %v4581
        %v4662 = vunpack.c.l.b16 %v4582
        %v4663 = vunpack.c.l.b16 %v4583
        %v4664 = vunpack.c.l.b16 %v4584
        %v4665 = vunpack.c.l.b16 %v4585
        %v4666 = vunpack.c.l.b16 %v4586
        %v4667 = vunpack.c.l.b16 %v4587
        %v4668 = vunpack.c.l.b16 %v4588
        %v4669 = vunpack.c.l.b16 %v4589
        %v4670 = vunpack.c.l.b16 %v4590
        %v4671 = vunpack.c.l.b16 %v4591
        %v4672 = vpack.c.b16 %v4635, %v4634
        %v4673 = vpack.c.b16 %v4637, %v4636
        %v4674 = vpack.c.b16 %v4639, %v4638
        %v4675 = vpack.c.b16 %v4641, %v4640
        %v4676 = vpack.c.b16 %v4643, %v4642
        %v4677 = vpack.c.b16 %v4645, %v4644
        %v4678 = vpack.c.b16 %v4647, %v4646
        %v4679 = vpack.c.b16 %v4649, %v4648
        %v4680 = vpack.c.b16 %v4651, %v4650
        %v4681 = vpack.c.b16 %v4653, %v4652
        %v4682 = vpack.c.b16 %v4655, %v4654
        %v4683 = vpack.c.b16 %v4657, %v4656
        %v4684 = vpack.c.b16 %v4659, %v4658
        %v4685 = vpack.c.b16 %v4661, %v4660
        %v4686 = vpack.c.b16 %v4663, %v4662
        %v4687 = vpack.c.b16 %v4665, %v4664
        %v4688 = vpack.c.b16 %v4667, %v4666
        %v4689 = vpack.c.b16 %v4669, %v4668
        %v4690 = vpack.c.b16 %v4671, %v4670
        %v4710 = vsel %vm1479, %v4552, 0
        %v4713 = vsel %vm1483, %v4690, 0
        %4715 = vmatprep.subr.bf16.mxu0 0
        %4716 = vmatpush1.bf16.msra.mxu0 %v4679
        %4717 = vmatprep.subr.bf16.mxu0 0
        %4718 = vmatpush1.bf16.msra.mxu0 %v4678
        %4719 = vmatprep.subr.bf16.mxu0 0
        %4720 = vmatpush1.bf16.msra.mxu0 %v4677
        %4721 = vmatprep.subr.bf16.mxu0 0
        %4722 = vmatpush1.bf16.msra.mxu0 %v4676
        %4723 = vmatprep.subr.bf16.mxu0 0
        %4724 = vmatpush1.bf16.msra.mxu0 %v4675
        %4725 = vmatprep.subr.bf16.mxu0 0
        %4726 = vmatpush1.bf16.msra.mxu0 %v4674
        %4727 = vmatprep.subr.bf16.mxu0 0
        %4728 = vmatpush1.bf16.msra.mxu0 %v4673
        %4729 = vmatprep.subr.bf16.mxu0 0
        %4730 = vmatpush1.bf16.msra.mxu0 %v4672
        %4731 = vmatprep.subr.bf16.mxu0 0
        %4732 = vmatpush2.bf16.msra.mxu0 %v4687
        %4733 = vmatprep.subr.bf16.mxu0 0
        %4734 = vmatpush2.bf16.msra.mxu0 %v4686
        %4735 = vmatprep.subr.bf16.mxu0 0
        %4736 = vmatpush2.bf16.msra.mxu0 %v4685
        %4737 = vmatprep.subr.bf16.mxu0 0
        %4738 = vmatpush2.bf16.msra.mxu0 %v4684
        %4739 = vmatprep.subr.bf16.mxu0 0
        %4740 = vmatpush2.bf16.msra.mxu0 %v4683
        %4741 = vmatprep.subr.bf16.mxu0 0
        %4742 = vmatpush2.bf16.msra.mxu0 %v4682
        %4743 = vmatprep.subr.bf16.mxu0 0
        %4744 = vmatpush2.bf16.msra.mxu0 %v4681
        %4745 = vmatprep.subr.bf16.mxu0 0
        %4746 = vmatpush2.bf16.msra.mxu0 %v4680
        %4747 = vmatprep.mubr.bf16.mxu0 %v4551
        %4748 = vmatmul.mubr.bf16.gmra.mxu0 %v4550
        %v4749 = vpop.f32.mrf.mxu0
        %v4750 = vadd.f32 %v4595, %v4749
        %v4751 = vpop.f32.mrf.mxu0
        %v4752 = vpop.f32.mrf.mxu0
        %v4753 = vpop.f32.mrf.mxu0
        %4754 = vdwg.mxu0
        %4755 = vmatprep.subr.bf16.mxu0 0
        %4756 = vmatpush1.bf16.msra.mxu0 0
        %4757 = vmatprep.subr.bf16.mxu0 0
        %4758 = vmatpush1.bf16.msra.mxu0 0
        %4759 = vmatprep.subr.bf16.mxu0 0
        %4760 = vmatpush1.bf16.msra.mxu0 0
        %4761 = vmatprep.subr.bf16.mxu0 0
        %4762 = vmatpush1.bf16.msra.mxu0 0
        %4763 = vmatprep.subr.bf16.mxu0 0
        %4764 = vmatpush1.bf16.msra.mxu0 0
        %4765 = vmatprep.subr.bf16.mxu0 0
        %4766 = vmatpush1.bf16.msra.mxu0 %v4713
        %4767 = vmatprep.subr.bf16.mxu0 0
        %4768 = vmatpush1.bf16.msra.mxu0 %v4689
        %4769 = vmatprep.subr.bf16.mxu0 0
        %4770 = vmatpush1.bf16.msra.mxu0 %v4688
        %4771 = vmatprep.subr.bf16.mxu0 0
        %4772 = vmatpush2.bf16.msra.mxu0 0
        %4773 = vmatprep.subr.bf16.mxu0 0
        %4774 = vmatpush2.bf16.msra.mxu0 0
        %4775 = vmatprep.subr.bf16.mxu0 0
        %4776 = vmatpush2.bf16.msra.mxu0 0
        %4777 = vmatprep.subr.bf16.mxu0 0
        %4778 = vmatpush2.bf16.msra.mxu0 0
        %4779 = vmatprep.subr.bf16.mxu0 0
        %4780 = vmatpush2.bf16.msra.mxu0 0
        %4781 = vmatprep.subr.bf16.mxu0 0
        %4782 = vmatpush2.bf16.msra.mxu0 0
        %4783 = vmatprep.subr.bf16.mxu0 0
        %4784 = vmatpush2.bf16.msra.mxu0 0
        %4785 = vmatprep.subr.bf16.mxu0 0
        %4786 = vmatpush2.bf16.msra.mxu0 0
        %4787 = vmatprep.mubr.bf16.mxu0 0
        %4788 = vmatmul.mubr.bf16.gmra.mxu0 %v4710
        %v4789 = vpop.f32.mrf.mxu0
        %v4790 = vadd.f32 %v4750, %v4789
        %v4791 = vpop.f32.mrf.mxu0
        %v4792 = vpop.f32.mrf.mxu0
        %v4793 = vpop.f32.mrf.mxu0
        %4794 = vdwg.mxu0
        %v4795 = vtanh.pop %v4790
        %v4796 = vadd.f32 %v4795, 1.0
        %v4797 = vmul.f32 %v4796, 11.0
        %v4798 = vadd.f32 %v4797, -20.0
        %v4799 = vmul.f32 %v4798, 1.442695
        %v4800 = vpow.pop %v4799
        %4802 = vrot.lane.b32.xlu0 %v505, 8
        %v4803 = vpop.permute.xlu0 %4802
        %v4805 = vmul.f32 %v4800, %v4803
        %4807 = vrot.lane.b32.xlu0 %v4805, 120
        %v4808 = vpop.permute.xlu0 %4807
        %v4810 = vadd.f32 %v4790, %v4808
        %v4811 = vtanh.pop %v4810
        %s4812 = scalar_lea.vmem %s471, 6 [#allocation10]
        %4813 = vst.msk [vmem:[%s4812] sm:$0x3] %vm1584, %v4811
        %s4814 = scalar_lea.vmem %s392, 128 [#allocation5]
        %v4815 = vld [vmem:[%s4814] sm:$0xff]
        %v4816 = vld [vmem:[%s4814 + $0x8] sm:$0xff]
        %v4817 = vld [vmem:[%s4814 + $0x10] sm:$0xff]
        %v4818 = vld [vmem:[%s4814 + $0x18] sm:$0xff]
        %v4819 = vlaneseq
        %v4820 = vshrl.u32 %v4819, 7
        %v4821 = vsub.s32 4, %v4820
        %v4822 = vrot.slane %v494, %v4821
        %v4823 = vlaneseq
        %v4824 = vshrl.u32 %v4823, 7
        %v4825 = vsub.s32 4, %v4824
        %v4826 = vrot.slane %v495, %v4825
        %v4827 = vlaneseq
        %v4828 = vshrl.u32 %v4827, 7
        %v4829 = vsub.s32 4, %v4828
        %v4830 = vrot.slane %v496, %v4829
        %v4831 = vlaneseq
        %v4832 = vshrl.u32 %v4831, 7
        %v4833 = vsub.s32 4, %v4832
        %v4834 = vrot.slane %v497, %v4833
        %v4839 = vunpack.c.l.b16 %v4815
        %v4840 = vunpack.c.h.b16 %v4815
        %v4841 = vunpack.c.l.b16 %v4816
        %v4842 = vunpack.c.h.b16 %v4816
        %v4843 = vunpack.c.l.b16 %v4817
        %v4844 = vunpack.c.h.b16 %v4817
        %v4845 = vunpack.c.l.b16 %v4818
        %v4846 = vunpack.c.h.b16 %v4818
        %v4847 = vpack.c.b16 %v4843, %v4839
        %v4848 = vpack.c.b16 %v4844, %v4840
        %v4849 = vpack.c.b16 %v4845, %v4841
        %v4850 = vpack.c.b16 %v4846, %v4842
        %4855 = vmatprep.subr.bf16.mxu0 0
        %4856 = vmatpush1.bf16.msra.mxu0 0
        %4857 = vmatprep.subr.bf16.mxu0 0
        %4858 = vmatpush1.bf16.msra.mxu0 0
        %4859 = vmatprep.subr.bf16.mxu0 0
        %4860 = vmatpush1.bf16.msra.mxu0 0
        %4861 = vmatprep.subr.bf16.mxu0 0
        %4862 = vmatpush1.bf16.msra.mxu0 0
        %4863 = vmatprep.subr.bf16.mxu0 0
        %4864 = vmatpush1.bf16.msra.mxu0 0
        %4865 = vmatprep.subr.bf16.mxu0 0
        %4866 = vmatpush1.bf16.msra.mxu0 0
        %4867 = vmatprep.subr.bf16.mxu0 0
        %4868 = vmatpush1.bf16.msra.mxu0 0
        %4869 = vmatprep.subr.bf16.mxu0 %v4848
        %4870 = vmatpush1.bf16.msra.mxu0 %v4847
        %4871 = vmatprep.subr.bf16.mxu0 0
        %4872 = vmatpush2.bf16.msra.mxu0 0
        %4873 = vmatprep.subr.bf16.mxu0 0
        %4874 = vmatpush2.bf16.msra.mxu0 0
        %4875 = vmatprep.subr.bf16.mxu0 0
        %4876 = vmatpush2.bf16.msra.mxu0 0
        %4877 = vmatprep.subr.bf16.mxu0 0
        %4878 = vmatpush2.bf16.msra.mxu0 0
        %4879 = vmatprep.subr.bf16.mxu0 0
        %4880 = vmatpush2.bf16.msra.mxu0 0
        %4881 = vmatprep.subr.bf16.mxu0 0
        %4882 = vmatpush2.bf16.msra.mxu0 0
        %4883 = vmatprep.subr.bf16.mxu0 0
        %4884 = vmatpush2.bf16.msra.mxu0 0
        %4885 = vmatprep.subr.bf16.mxu0 0
        %4886 = vmatpush2.bf16.msra.mxu0 0
        %4887 = vmatprep.mubr.bf16.mxu0 0
        %4888 = vmatmul.mubr.bf16.gmra.mxu0 %v549
        %v4889 = vpop.f32.mrf.mxu0
        %v4890 = vadd.f32 %v4822, %v4889
        %v4891 = vpop.f32.mrf.mxu0
        %v4892 = vadd.f32 %v4826, %v4891
        %v4893 = vpop.f32.mrf.mxu0
        %v4894 = vpop.f32.mrf.mxu0
        %4895 = vdwg.mxu0
        %4896 = vmatprep.subr.bf16.mxu0 0
        %4897 = vmatpush1.bf16.msra.mxu0 0
        %4898 = vmatprep.subr.bf16.mxu0 0
        %4899 = vmatpush1.bf16.msra.mxu0 0
        %4900 = vmatprep.subr.bf16.mxu0 0
        %4901 = vmatpush1.bf16.msra.mxu0 0
        %4902 = vmatprep.subr.bf16.mxu0 0
        %4903 = vmatpush1.bf16.msra.mxu0 0
        %4904 = vmatprep.subr.bf16.mxu0 0
        %4905 = vmatpush1.bf16.msra.mxu0 0
        %4906 = vmatprep.subr.bf16.mxu0 0
        %4907 = vmatpush1.bf16.msra.mxu0 0
        %4908 = vmatprep.subr.bf16.mxu0 0
        %4909 = vmatpush1.bf16.msra.mxu0 0
        %4910 = vmatprep.subr.bf16.mxu0 %v4850
        %4911 = vmatpush1.bf16.msra.mxu0 %v4849
        %4912 = vmatprep.subr.bf16.mxu0 0
        %4913 = vmatpush2.bf16.msra.mxu0 0
        %4914 = vmatprep.subr.bf16.mxu0 0
        %4915 = vmatpush2.bf16.msra.mxu0 0
        %4916 = vmatprep.subr.bf16.mxu0 0
        %4917 = vmatpush2.bf16.msra.mxu0 0
        %4918 = vmatprep.subr.bf16.mxu0 0
        %4919 = vmatpush2.bf16.msra.mxu0 0
        %4920 = vmatprep.subr.bf16.mxu0 0
        %4921 = vmatpush2.bf16.msra.mxu0 0
        %4922 = vmatprep.subr.bf16.mxu0 0
        %4923 = vmatpush2.bf16.msra.mxu0 0
        %4924 = vmatprep.subr.bf16.mxu0 0
        %4925 = vmatpush2.bf16.msra.mxu0 0
        %4926 = vmatprep.subr.bf16.mxu0 0
        %4927 = vmatpush2.bf16.msra.mxu0 0
        %4928 = vmatprep.mubr.bf16.mxu0 0
        %4929 = vmatmul.mubr.bf16.gmra.mxu0 %v549
        %v4930 = vpop.f32.mrf.mxu0
        %v4931 = vadd.f32 %v4830, %v4930
        %v4932 = vpop.f32.mrf.mxu0
        %v4933 = vadd.f32 %v4834, %v4932
        %v4934 = vpop.f32.mrf.mxu0
        %v4935 = vpop.f32.mrf.mxu0
        %4936 = vdwg.mxu0
        %v4937 = vmax.f32 %v4890, 0.0
        %v4938 = vmax.f32 %v4892, 0.0
        %v4939 = vmax.f32 %v4931, 0.0
        %v4940 = vmax.f32 %v4933, 0.0
        %v4941 = vpack.c.bf16 %v4937, %v4937
        %v4942 = vpack.c.bf16 %v4938, %v4938
        %v4943 = vpack.c.bf16 %v4939, %v4939
        %v4944 = vpack.c.bf16 %v4940, %v4940
        %s4945 = scalar_lea.vmem %s401, 2400 [#allocation7]
        %v4946 = vld [vmem:[%s4945] sm:$0xff]
        %v4947 = vld [vmem:[%s4945 + $0x8] sm:$0xf]
        %v4948 = vld [vmem:[%s4945 + $0xc] sm:$0xff]
        %v4949 = vld [vmem:[%s4945 + $0x14] sm:$0xf]
        %v4950 = vld [vmem:[%s4945 + $0x18] sm:$0xff]
        %v4951 = vld [vmem:[%s4945 + $0x20] sm:$0xf]
        %v4952 = vld [vmem:[%s4945 + $0x24] sm:$0xff]
        %v4953 = vld [vmem:[%s4945 + $0x2c] sm:$0xf]
        %v4954 = vld [vmem:[%s4945 + $0x30] sm:$0xff]
        %v4955 = vld [vmem:[%s4945 + $0x38] sm:$0xf]
        %v4956 = vld [vmem:[%s4945 + $0x3c] sm:$0xff]
        %v4957 = vld [vmem:[%s4945 + $0x44] sm:$0xf]
        %v4958 = vld [vmem:[%s4945 + $0x48] sm:$0xff]
        %v4959 = vld [vmem:[%s4945 + $0x50] sm:$0xf]
        %v4960 = vld [vmem:[%s4945 + $0x54] sm:$0xff]
        %v4961 = vld [vmem:[%s4945 + $0x5c] sm:$0xf]
        %v4962 = vld [vmem:[%s4945 + $0x60] sm:$0xff]
        %v4963 = vld [vmem:[%s4945 + $0x68] sm:$0xf]
        %v4964 = vld [vmem:[%s4945 + $0x6c] sm:$0xff]
        %v4965 = vld [vmem:[%s4945 + $0x74] sm:$0xf]
        %v4966 = vld [vmem:[%s4945 + $0x78] sm:$0xff]
        %v4967 = vld [vmem:[%s4945 + $0x80] sm:$0xf]
        %v4968 = vld [vmem:[%s4945 + $0x84] sm:$0xff]
        %v4969 = vld [vmem:[%s4945 + $0x8c] sm:$0xf]
        %v4970 = vld [vmem:[%s4945 + $0x90] sm:$0xff]
        %v4971 = vld [vmem:[%s4945 + $0x98] sm:$0xf]
        %v4972 = vld [vmem:[%s4945 + $0x9c] sm:$0xff]
        %v4973 = vld [vmem:[%s4945 + $0xa4] sm:$0xf]
        %v4974 = vld [vmem:[%s4945 + $0xa8] sm:$0xff]
        %v4975 = vld [vmem:[%s4945 + $0xb0] sm:$0xf]
        %v4976 = vld [vmem:[%s4945 + $0xb4] sm:$0xff]
        %v4977 = vld [vmem:[%s4945 + $0xbc] sm:$0xf]
        %v4978 = vld [vmem:[%s4945 + $0xc0] sm:$0xff]
        %v4979 = vld [vmem:[%s4945 + $0xc8] sm:$0xf]
        %v4980 = vld [vmem:[%s4945 + $0xcc] sm:$0xff]
        %v4981 = vld [vmem:[%s4945 + $0xd4] sm:$0xf]
        %v4982 = vld [vmem:[%s4945 + $0xd8] sm:$0xff]
        %v4983 = vld [vmem:[%s4945 + $0xe0] sm:$0xf]
        %v4984 = vld [vmem:[%s4945 + $0xe4] sm:$0xff]
        %v4985 = vld [vmem:[%s4945 + $0xec] sm:$0xf]
        %v4986 = vld [vmem:[%s4945 + $0xf0] sm:$0xff]
        %v4987 = vld [vmem:[%s4945 + $0xf8] sm:$0xf]
        %v4988 = vld [vmem:[%s4945 + $0xfc] sm:$0xff]
        %v4989 = vld [vmem:[%s4945 + $0x104] sm:$0xf]
        %v4990 = vld [vmem:[%s4945 + $0x108] sm:$0xff]
        %v4991 = vld [vmem:[%s4945 + $0x110] sm:$0xf]
        %v4992 = vld [vmem:[%s4945 + $0x114] sm:$0xff]
        %v4993 = vld [vmem:[%s4945 + $0x11c] sm:$0xf]
        %v4994 = vld [vmem:[%s4945 + $0x120] sm:$0xff]
        %v4995 = vld [vmem:[%s4945 + $0x128] sm:$0xf]
        %v4996 = vld [vmem:[%s4945 + $0x12c] sm:$0xff]
        %v4997 = vld [vmem:[%s4945 + $0x134] sm:$0xf]
        %v4998 = vld [vmem:[%s4945 + $0x138] sm:$0xff]
        %v4999 = vld [vmem:[%s4945 + $0x140] sm:$0xf]
        %v5000 = vld [vmem:[%s4945 + $0x144] sm:$0xff]
        %v5001 = vld [vmem:[%s4945 + $0x14c] sm:$0xf]
        %v5002 = vld [vmem:[%s4945 + $0x150] sm:$0xff]
        %v5003 = vld [vmem:[%s4945 + $0x158] sm:$0xf]
        %v5004 = vld [vmem:[%s4945 + $0x15c] sm:$0xff]
        %v5005 = vld [vmem:[%s4945 + $0x164] sm:$0xf]
        %v5006 = vld [vmem:[%s4945 + $0x168] sm:$0xff]
        %v5007 = vld [vmem:[%s4945 + $0x170] sm:$0xf]
        %v5008 = vld [vmem:[%s4945 + $0x174] sm:$0xff]
        %v5009 = vld [vmem:[%s4945 + $0x17c] sm:$0xf]
        %v5010 = vld [vmem:[%s4945 + $0x180] sm:$0xff]
        %v5011 = vld [vmem:[%s4945 + $0x188] sm:$0xf]
        %v5012 = vld [vmem:[%s4945 + $0x18c] sm:$0xff]
        %v5013 = vld [vmem:[%s4945 + $0x194] sm:$0xf]
        %v5014 = vld [vmem:[%s4945 + $0x198] sm:$0xff]
        %v5015 = vld [vmem:[%s4945 + $0x1a0] sm:$0xf]
        %v5016 = vld [vmem:[%s4945 + $0x1a4] sm:$0xff]
        %v5017 = vld [vmem:[%s4945 + $0x1ac] sm:$0xf]
        %v5018 = vld [vmem:[%s4945 + $0x1b0] sm:$0xff]
        %v5019 = vld [vmem:[%s4945 + $0x1b8] sm:$0xf]
        %v5020 = vld [vmem:[%s4945 + $0x1bc] sm:$0xff]
        %v5021 = vld [vmem:[%s4945 + $0x1c4] sm:$0xf]
        %v5022 = vld [vmem:[%s4945 + $0x1c8] sm:$0xff]
        %v5023 = vld [vmem:[%s4945 + $0x1d0] sm:$0xf]
        %v5024 = vld [vmem:[%s4945 + $0x1d4] sm:$0xff]
        %v5025 = vld [vmem:[%s4945 + $0x1dc] sm:$0xf]
        %v5026 = vld [vmem:[%s4945 + $0x1e0] sm:$0xff]
        %v5027 = vld [vmem:[%s4945 + $0x1e8] sm:$0xf]
        %v5028 = vld [vmem:[%s4945 + $0x1ec] sm:$0xff]
        %v5029 = vld [vmem:[%s4945 + $0x1f4] sm:$0xf]
        %v5030 = vld [vmem:[%s4945 + $0x1f8] sm:$0xff]
        %v5031 = vld [vmem:[%s4945 + $0x200] sm:$0xf]
        %v5032 = vld [vmem:[%s4945 + $0x204] sm:$0xff]
        %v5033 = vld [vmem:[%s4945 + $0x20c] sm:$0xf]
        %v5034 = vld [vmem:[%s4945 + $0x210] sm:$0xff]
        %v5035 = vld [vmem:[%s4945 + $0x218] sm:$0xf]
        %v5036 = vld [vmem:[%s4945 + $0x21c] sm:$0xff]
        %v5037 = vld [vmem:[%s4945 + $0x224] sm:$0xf]
        %v5038 = vld [vmem:[%s4945 + $0x228] sm:$0xff]
        %v5039 = vld [vmem:[%s4945 + $0x230] sm:$0xf]
        %v5040 = vld [vmem:[%s4945 + $0x234] sm:$0xff]
        %v5041 = vld [vmem:[%s4945 + $0x23c] sm:$0xf]
        %v5042 = vld [vmem:[%s4945 + $0x240] sm:$0xff]
        %v5043 = vld [vmem:[%s4945 + $0x248] sm:$0xf]
        %v5044 = vld [vmem:[%s4945 + $0x24c] sm:$0xff]
        %v5045 = vld [vmem:[%s4945 + $0x254] sm:$0xf]
        %v5046 = vlaneseq
        %v5047 = vshrl.u32 %v5046, 7
        %v5048 = vsub.s32 4, %v5047
        %v5049 = vrot.slane %v498, %v5048
        %v5050 = vlaneseq
        %v5051 = vshrl.u32 %v5050, 7
        %v5052 = vsub.s32 4, %v5051
        %v5053 = vrot.slane %v499, %v5052
        %v5054 = vlaneseq
        %v5055 = vshrl.u32 %v5054, 7
        %v5056 = vsub.s32 4, %v5055
        %v5057 = vrot.slane %v500, %v5056
        %v5158 = vunpack.c.l.b16 %v4946
        %v5159 = vunpack.c.h.b16 %v4946
        %v5160 = vunpack.c.l.b16 %v4947
        %v5161 = vunpack.c.l.b16 %v4948
        %v5162 = vunpack.c.h.b16 %v4948
        %v5163 = vunpack.c.l.b16 %v4949
        %v5164 = vunpack.c.l.b16 %v4950
        %v5165 = vunpack.c.h.b16 %v4950
        %v5166 = vunpack.c.l.b16 %v4951
        %v5167 = vunpack.c.l.b16 %v4952
        %v5168 = vunpack.c.h.b16 %v4952
        %v5169 = vunpack.c.l.b16 %v4953
        %v5170 = vunpack.c.l.b16 %v4954
        %v5171 = vunpack.c.h.b16 %v4954
        %v5172 = vunpack.c.l.b16 %v4955
        %v5173 = vunpack.c.l.b16 %v4956
        %v5174 = vunpack.c.h.b16 %v4956
        %v5175 = vunpack.c.l.b16 %v4957
        %v5176 = vunpack.c.l.b16 %v4958
        %v5177 = vunpack.c.h.b16 %v4958
        %v5178 = vunpack.c.l.b16 %v4959
        %v5179 = vunpack.c.l.b16 %v4960
        %v5180 = vunpack.c.h.b16 %v4960
        %v5181 = vunpack.c.l.b16 %v4961
        %v5182 = vunpack.c.l.b16 %v4962
        %v5183 = vunpack.c.h.b16 %v4962
        %v5184 = vunpack.c.l.b16 %v4963
        %v5185 = vunpack.c.l.b16 %v4964
        %v5186 = vunpack.c.h.b16 %v4964
        %v5187 = vunpack.c.l.b16 %v4965
        %v5188 = vunpack.c.l.b16 %v4966
        %v5189 = vunpack.c.h.b16 %v4966
        %v5190 = vunpack.c.l.b16 %v4967
        %v5191 = vunpack.c.l.b16 %v4968
        %v5192 = vunpack.c.h.b16 %v4968
        %v5193 = vunpack.c.l.b16 %v4969
        %v5194 = vunpack.c.l.b16 %v4970
        %v5195 = vunpack.c.h.b16 %v4970
        %v5196 = vunpack.c.l.b16 %v4971
        %v5197 = vunpack.c.l.b16 %v4972
        %v5198 = vunpack.c.h.b16 %v4972
        %v5199 = vunpack.c.l.b16 %v4973
        %v5200 = vunpack.c.l.b16 %v4974
        %v5201 = vunpack.c.h.b16 %v4974
        %v5202 = vunpack.c.l.b16 %v4975
        %v5203 = vunpack.c.l.b16 %v4976
        %v5204 = vunpack.c.h.b16 %v4976
        %v5205 = vunpack.c.l.b16 %v4977
        %v5206 = vunpack.c.l.b16 %v4978
        %v5207 = vunpack.c.h.b16 %v4978
        %v5208 = vunpack.c.l.b16 %v4979
        %v5209 = vunpack.c.l.b16 %v4980
        %v5210 = vunpack.c.h.b16 %v4980
        %v5211 = vunpack.c.l.b16 %v4981
        %v5212 = vunpack.c.l.b16 %v4982
        %v5213 = vunpack.c.h.b16 %v4982
        %v5214 = vunpack.c.l.b16 %v4983
        %v5215 = vunpack.c.l.b16 %v4984
        %v5216 = vunpack.c.h.b16 %v4984
        %v5217 = vunpack.c.l.b16 %v4985
        %v5218 = vunpack.c.l.b16 %v4986
        %v5219 = vunpack.c.h.b16 %v4986
        %v5220 = vunpack.c.l.b16 %v4987
        %v5221 = vunpack.c.l.b16 %v4988
        %v5222 = vunpack.c.h.b16 %v4988
        %v5223 = vunpack.c.l.b16 %v4989
        %v5224 = vunpack.c.l.b16 %v4990
        %v5225 = vunpack.c.h.b16 %v4990
        %v5226 = vunpack.c.l.b16 %v4991
        %v5227 = vunpack.c.l.b16 %v4992
        %v5228 = vunpack.c.h.b16 %v4992
        %v5229 = vunpack.c.l.b16 %v4993
        %v5230 = vunpack.c.l.b16 %v4994
        %v5231 = vunpack.c.h.b16 %v4994
        %v5232 = vunpack.c.l.b16 %v4995
        %v5233 = vunpack.c.l.b16 %v4996
        %v5234 = vunpack.c.h.b16 %v4996
        %v5235 = vunpack.c.l.b16 %v4997
        %v5236 = vunpack.c.l.b16 %v4998
        %v5237 = vunpack.c.h.b16 %v4998
        %v5238 = vunpack.c.l.b16 %v4999
        %v5239 = vunpack.c.l.b16 %v5000
        %v5240 = vunpack.c.h.b16 %v5000
        %v5241 = vunpack.c.l.b16 %v5001
        %v5242 = vunpack.c.l.b16 %v5002
        %v5243 = vunpack.c.h.b16 %v5002
        %v5244 = vunpack.c.l.b16 %v5003
        %v5245 = vunpack.c.l.b16 %v5004
        %v5246 = vunpack.c.h.b16 %v5004
        %v5247 = vunpack.c.l.b16 %v5005
        %v5248 = vunpack.c.l.b16 %v5006
        %v5249 = vunpack.c.h.b16 %v5006
        %v5250 = vunpack.c.l.b16 %v5007
        %v5251 = vunpack.c.l.b16 %v5008
        %v5252 = vunpack.c.h.b16 %v5008
        %v5253 = vunpack.c.l.b16 %v5009
        %v5254 = vunpack.c.l.b16 %v5010
        %v5255 = vunpack.c.h.b16 %v5010
        %v5256 = vunpack.c.l.b16 %v5011
        %v5257 = vunpack.c.l.b16 %v5012
        %v5258 = vunpack.c.h.b16 %v5012
        %v5259 = vunpack.c.l.b16 %v5013
        %v5260 = vunpack.c.l.b16 %v5014
        %v5261 = vunpack.c.h.b16 %v5014
        %v5262 = vunpack.c.l.b16 %v5015
        %v5263 = vunpack.c.l.b16 %v5016
        %v5264 = vunpack.c.h.b16 %v5016
        %v5265 = vunpack.c.l.b16 %v5017
        %v5266 = vunpack.c.l.b16 %v5018
        %v5267 = vunpack.c.h.b16 %v5018
        %v5268 = vunpack.c.l.b16 %v5019
        %v5269 = vunpack.c.l.b16 %v5020
        %v5270 = vunpack.c.h.b16 %v5020
        %v5271 = vunpack.c.l.b16 %v5021
        %v5272 = vunpack.c.l.b16 %v5022
        %v5273 = vunpack.c.h.b16 %v5022
        %v5274 = vunpack.c.l.b16 %v5023
        %v5275 = vunpack.c.l.b16 %v5024
        %v5276 = vunpack.c.h.b16 %v5024
        %v5277 = vunpack.c.l.b16 %v5025
        %v5278 = vunpack.c.l.b16 %v5026
        %v5279 = vunpack.c.h.b16 %v5026
        %v5280 = vunpack.c.l.b16 %v5027
        %v5281 = vunpack.c.l.b16 %v5028
        %v5282 = vunpack.c.h.b16 %v5028
        %v5283 = vunpack.c.l.b16 %v5029
        %v5284 = vunpack.c.l.b16 %v5030
        %v5285 = vunpack.c.h.b16 %v5030
        %v5286 = vunpack.c.l.b16 %v5031
        %v5287 = vunpack.c.l.b16 %v5032
        %v5288 = vunpack.c.h.b16 %v5032
        %v5289 = vunpack.c.l.b16 %v5033
        %v5290 = vunpack.c.l.b16 %v5034
        %v5291 = vunpack.c.h.b16 %v5034
        %v5292 = vunpack.c.l.b16 %v5035
        %v5293 = vunpack.c.l.b16 %v5036
        %v5294 = vunpack.c.h.b16 %v5036
        %v5295 = vunpack.c.l.b16 %v5037
        %v5296 = vunpack.c.l.b16 %v5038
        %v5297 = vunpack.c.h.b16 %v5038
        %v5298 = vunpack.c.l.b16 %v5039
        %v5299 = vunpack.c.l.b16 %v5040
        %v5300 = vunpack.c.h.b16 %v5040
        %v5301 = vunpack.c.l.b16 %v5041
        %v5302 = vunpack.c.l.b16 %v5042
        %v5303 = vunpack.c.h.b16 %v5042
        %v5304 = vunpack.c.l.b16 %v5043
        %v5305 = vunpack.c.l.b16 %v5044
        %v5306 = vunpack.c.h.b16 %v5044
        %v5307 = vunpack.c.l.b16 %v5045
        %v5308 = vpack.c.b16 %v5161, %v5158
        %v5309 = vpack.c.b16 %v5162, %v5159
        %v5310 = vpack.c.b16 %v5163, %v5160
        %v5311 = vpack.c.b16 %v5167, %v5164
        %v5312 = vpack.c.b16 %v5168, %v5165
        %v5313 = vpack.c.b16 %v5169, %v5166
        %v5314 = vpack.c.b16 %v5173, %v5170
        %v5315 = vpack.c.b16 %v5174, %v5171
        %v5316 = vpack.c.b16 %v5175, %v5172
        %v5317 = vpack.c.b16 %v5179, %v5176
        %v5318 = vpack.c.b16 %v5180, %v5177
        %v5319 = vpack.c.b16 %v5181, %v5178
        %v5320 = vpack.c.b16 %v5185, %v5182
        %v5321 = vpack.c.b16 %v5186, %v5183
        %v5322 = vpack.c.b16 %v5187, %v5184
        %v5323 = vpack.c.b16 %v5191, %v5188
        %v5324 = vpack.c.b16 %v5192, %v5189
        %v5325 = vpack.c.b16 %v5193, %v5190
        %v5326 = vpack.c.b16 %v5197, %v5194
        %v5327 = vpack.c.b16 %v5198, %v5195
        %v5328 = vpack.c.b16 %v5199, %v5196
        %v5329 = vpack.c.b16 %v5203, %v5200
        %v5330 = vpack.c.b16 %v5204, %v5201
        %v5331 = vpack.c.b16 %v5205, %v5202
        %v5332 = vpack.c.b16 %v5209, %v5206
        %v5333 = vpack.c.b16 %v5210, %v5207
        %v5334 = vpack.c.b16 %v5211, %v5208
        %v5335 = vpack.c.b16 %v5215, %v5212
        %v5336 = vpack.c.b16 %v5216, %v5213
        %v5337 = vpack.c.b16 %v5217, %v5214
        %v5338 = vpack.c.b16 %v5221, %v5218
        %v5339 = vpack.c.b16 %v5222, %v5219
        %v5340 = vpack.c.b16 %v5223, %v5220
        %v5341 = vpack.c.b16 %v5227, %v5224
        %v5342 = vpack.c.b16 %v5228, %v5225
        %v5343 = vpack.c.b16 %v5229, %v5226
        %v5344 = vpack.c.b16 %v5233, %v5230
        %v5345 = vpack.c.b16 %v5234, %v5231
        %v5346 = vpack.c.b16 %v5235, %v5232
        %v5347 = vpack.c.b16 %v5239, %v5236
        %v5348 = vpack.c.b16 %v5240, %v5237
        %v5349 = vpack.c.b16 %v5241, %v5238
        %v5350 = vpack.c.b16 %v5245, %v5242
        %v5351 = vpack.c.b16 %v5246, %v5243
        %v5352 = vpack.c.b16 %v5247, %v5244
        %v5353 = vpack.c.b16 %v5251, %v5248
        %v5354 = vpack.c.b16 %v5252, %v5249
        %v5355 = vpack.c.b16 %v5253, %v5250
        %v5356 = vpack.c.b16 %v5257, %v5254
        %v5357 = vpack.c.b16 %v5258, %v5255
        %v5358 = vpack.c.b16 %v5259, %v5256
        %v5359 = vpack.c.b16 %v5263, %v5260
        %v5360 = vpack.c.b16 %v5264, %v5261
        %v5361 = vpack.c.b16 %v5265, %v5262
        %v5362 = vpack.c.b16 %v5269, %v5266
        %v5363 = vpack.c.b16 %v5270, %v5267
        %v5364 = vpack.c.b16 %v5271, %v5268
        %v5365 = vpack.c.b16 %v5275, %v5272
        %v5366 = vpack.c.b16 %v5276, %v5273
        %v5367 = vpack.c.b16 %v5277, %v5274
        %v5368 = vpack.c.b16 %v5281, %v5278
        %v5369 = vpack.c.b16 %v5282, %v5279
        %v5370 = vpack.c.b16 %v5283, %v5280
        %v5371 = vpack.c.b16 %v5287, %v5284
        %v5372 = vpack.c.b16 %v5288, %v5285
        %v5373 = vpack.c.b16 %v5289, %v5286
        %v5374 = vpack.c.b16 %v5293, %v5290
        %v5375 = vpack.c.b16 %v5294, %v5291
        %v5376 = vpack.c.b16 %v5295, %v5292
        %v5377 = vpack.c.b16 %v5299, %v5296
        %v5378 = vpack.c.b16 %v5300, %v5297
        %v5379 = vpack.c.b16 %v5301, %v5298
        %v5380 = vpack.c.b16 %v5305, %v5302
        %v5381 = vpack.c.b16 %v5306, %v5303
        %v5382 = vpack.c.b16 %v5307, %v5304
        %v5459 = vsel %vm547, %v4944, 0
        %5461 = vmatprep.subr.bf16.mxu0 %v5330
        %5462 = vmatpush1.bf16.msra.mxu0 %v5329
        %5463 = vmatprep.subr.bf16.mxu0 %v5327
        %5464 = vmatpush1.bf16.msra.mxu0 %v5326
        %5465 = vmatprep.subr.bf16.mxu0 %v5324
        %5466 = vmatpush1.bf16.msra.mxu0 %v5323
        %5467 = vmatprep.subr.bf16.mxu0 %v5321
        %5468 = vmatpush1.bf16.msra.mxu0 %v5320
        %5469 = vmatprep.subr.bf16.mxu0 %v5318
        %5470 = vmatpush1.bf16.msra.mxu0 %v5317
        %5471 = vmatprep.subr.bf16.mxu0 %v5315
        %5472 = vmatpush1.bf16.msra.mxu0 %v5314
        %5473 = vmatprep.subr.bf16.mxu0 %v5312
        %5474 = vmatpush1.bf16.msra.mxu0 %v5311
        %5475 = vmatprep.subr.bf16.mxu0 %v5309
        %5476 = vmatpush1.bf16.msra.mxu0 %v5308
        %5477 = vmatprep.subr.bf16.mxu0 %v5354
        %5478 = vmatpush2.bf16.msra.mxu0 %v5353
        %5479 = vmatprep.subr.bf16.mxu0 %v5351
        %5480 = vmatpush2.bf16.msra.mxu0 %v5350
        %5481 = vmatprep.subr.bf16.mxu0 %v5348
        %5482 = vmatpush2.bf16.msra.mxu0 %v5347
        %5483 = vmatprep.subr.bf16.mxu0 %v5345
        %5484 = vmatpush2.bf16.msra.mxu0 %v5344
        %5485 = vmatprep.subr.bf16.mxu0 %v5342
        %5486 = vmatpush2.bf16.msra.mxu0 %v5341
        %5487 = vmatprep.subr.bf16.mxu0 %v5339
        %5488 = vmatpush2.bf16.msra.mxu0 %v5338
        %5489 = vmatprep.subr.bf16.mxu0 %v5336
        %5490 = vmatpush2.bf16.msra.mxu0 %v5335
        %5491 = vmatprep.subr.bf16.mxu0 %v5333
        %5492 = vmatpush2.bf16.msra.mxu0 %v5332
        %5493 = vmatprep.mubr.bf16.mxu0 %v4942
        %5494 = vmatmul.mubr.bf16.gmra.mxu0 %v4941
        %v5495 = vpop.f32.mrf.mxu0
        %v5496 = vadd.f32 %v5049, %v5495
        %v5497 = vpop.f32.mrf.mxu0
        %v5498 = vadd.f32 %v5053, %v5497
        %v5499 = vpop.f32.mrf.mxu0
        %v5500 = vpop.f32.mrf.mxu0
        %5501 = vdwg.mxu0
        %5502 = vmatprep.subr.bf16.mxu0 %v5378
        %5503 = vmatpush1.bf16.msra.mxu0 %v5377
        %5504 = vmatprep.subr.bf16.mxu0 %v5375
        %5505 = vmatpush1.bf16.msra.mxu0 %v5374
        %5506 = vmatprep.subr.bf16.mxu0 %v5372
        %5507 = vmatpush1.bf16.msra.mxu0 %v5371
        %5508 = vmatprep.subr.bf16.mxu0 %v5369
        %5509 = vmatpush1.bf16.msra.mxu0 %v5368
        %5510 = vmatprep.subr.bf16.mxu0 %v5366
        %5511 = vmatpush1.bf16.msra.mxu0 %v5365
        %5512 = vmatprep.subr.bf16.mxu0 %v5363
        %5513 = vmatpush1.bf16.msra.mxu0 %v5362
        %5514 = vmatprep.subr.bf16.mxu0 %v5360
        %5515 = vmatpush1.bf16.msra.mxu0 %v5359
        %5516 = vmatprep.subr.bf16.mxu0 %v5357
        %5517 = vmatpush1.bf16.msra.mxu0 %v5356
        %5518 = vmatprep.subr.bf16.mxu0 0
        %5519 = vmatpush2.bf16.msra.mxu0 0
        %5520 = vmatprep.subr.bf16.mxu0 0
        %5521 = vmatpush2.bf16.msra.mxu0 0
        %5522 = vmatprep.subr.bf16.mxu0 0
        %5523 = vmatpush2.bf16.msra.mxu0 0
        %5524 = vmatprep.subr.bf16.mxu0 0
        %5525 = vmatpush2.bf16.msra.mxu0 0
        %5526 = vmatprep.subr.bf16.mxu0 0
        %5527 = vmatpush2.bf16.msra.mxu0 0
        %5528 = vmatprep.subr.bf16.mxu0 0
        %5529 = vmatpush2.bf16.msra.mxu0 0
        %5530 = vmatprep.subr.bf16.mxu0 0
        %5531 = vmatpush2.bf16.msra.mxu0 0
        %5532 = vmatprep.subr.bf16.mxu0 %v5381
        %5533 = vmatpush2.bf16.msra.mxu0 %v5380
        %5534 = vmatprep.mubr.bf16.mxu0 %v5459
        %5535 = vmatmul.mubr.bf16.gmra.mxu0 %v4943
        %v5536 = vpop.f32.mrf.mxu0
        %v5537 = vadd.f32 %v5496, %v5536
        %v5538 = vpop.f32.mrf.mxu0
        %v5539 = vadd.f32 %v5498, %v5538
        %v5540 = vpop.f32.mrf.mxu0
        %v5541 = vpop.f32.mrf.mxu0
        %5542 = vdwg.mxu0
        %5543 = vmatprep.subr.bf16.mxu0 0
        %5544 = vmatpush1.bf16.msra.mxu0 %v5331
        %5545 = vmatprep.subr.bf16.mxu0 0
        %5546 = vmatpush1.bf16.msra.mxu0 %v5328
        %5547 = vmatprep.subr.bf16.mxu0 0
        %5548 = vmatpush1.bf16.msra.mxu0 %v5325
        %5549 = vmatprep.subr.bf16.mxu0 0
        %5550 = vmatpush1.bf16.msra.mxu0 %v5322
        %5551 = vmatprep.subr.bf16.mxu0 0
        %5552 = vmatpush1.bf16.msra.mxu0 %v5319
        %5553 = vmatprep.subr.bf16.mxu0 0
        %5554 = vmatpush1.bf16.msra.mxu0 %v5316
        %5555 = vmatprep.subr.bf16.mxu0 0
        %5556 = vmatpush1.bf16.msra.mxu0 %v5313
        %5557 = vmatprep.subr.bf16.mxu0 0
        %5558 = vmatpush1.bf16.msra.mxu0 %v5310
        %5559 = vmatprep.subr.bf16.mxu0 0
        %5560 = vmatpush2.bf16.msra.mxu0 %v5355
        %5561 = vmatprep.subr.bf16.mxu0 0
        %5562 = vmatpush2.bf16.msra.mxu0 %v5352
        %5563 = vmatprep.subr.bf16.mxu0 0
        %5564 = vmatpush2.bf16.msra.mxu0 %v5349
        %5565 = vmatprep.subr.bf16.mxu0 0
        %5566 = vmatpush2.bf16.msra.mxu0 %v5346
        %5567 = vmatprep.subr.bf16.mxu0 0
        %5568 = vmatpush2.bf16.msra.mxu0 %v5343
        %5569 = vmatprep.subr.bf16.mxu0 0
        %5570 = vmatpush2.bf16.msra.mxu0 %v5340
        %5571 = vmatprep.subr.bf16.mxu0 0
        %5572 = vmatpush2.bf16.msra.mxu0 %v5337
        %5573 = vmatprep.subr.bf16.mxu0 0
        %5574 = vmatpush2.bf16.msra.mxu0 %v5334
        %5575 = vmatprep.mubr.bf16.mxu0 %v4942
        %5576 = vmatmul.mubr.bf16.gmra.mxu0 %v4941
        %v5577 = vpop.f32.mrf.mxu0
        %v5578 = vadd.f32 %v5057, %v5577
        %v5579 = vpop.f32.mrf.mxu0
        %v5580 = vpop.f32.mrf.mxu0
        %v5581 = vpop.f32.mrf.mxu0
        %5582 = vdwg.mxu0
        %5583 = vmatprep.subr.bf16.mxu0 0
        %5584 = vmatpush1.bf16.msra.mxu0 %v5379
        %5585 = vmatprep.subr.bf16.mxu0 0
        %5586 = vmatpush1.bf16.msra.mxu0 %v5376
        %5587 = vmatprep.subr.bf16.mxu0 0
        %5588 = vmatpush1.bf16.msra.mxu0 %v5373
        %5589 = vmatprep.subr.bf16.mxu0 0
        %5590 = vmatpush1.bf16.msra.mxu0 %v5370
        %5591 = vmatprep.subr.bf16.mxu0 0
        %5592 = vmatpush1.bf16.msra.mxu0 %v5367
        %5593 = vmatprep.subr.bf16.mxu0 0
        %5594 = vmatpush1.bf16.msra.mxu0 %v5364
        %5595 = vmatprep.subr.bf16.mxu0 0
        %5596 = vmatpush1.bf16.msra.mxu0 %v5361
        %5597 = vmatprep.subr.bf16.mxu0 0
        %5598 = vmatpush1.bf16.msra.mxu0 %v5358
        %5599 = vmatprep.subr.bf16.mxu0 0
        %5600 = vmatpush2.bf16.msra.mxu0 0
        %5601 = vmatprep.subr.bf16.mxu0 0
        %5602 = vmatpush2.bf16.msra.mxu0 0
        %5603 = vmatprep.subr.bf16.mxu0 0
        %5604 = vmatpush2.bf16.msra.mxu0 0
        %5605 = vmatprep.subr.bf16.mxu0 0
        %5606 = vmatpush2.bf16.msra.mxu0 0
        %5607 = vmatprep.subr.bf16.mxu0 0
        %5608 = vmatpush2.bf16.msra.mxu0 0
        %5609 = vmatprep.subr.bf16.mxu0 0
        %5610 = vmatpush2.bf16.msra.mxu0 0
        %5611 = vmatprep.subr.bf16.mxu0 0
        %5612 = vmatpush2.bf16.msra.mxu0 0
        %5613 = vmatprep.subr.bf16.mxu0 0
        %5614 = vmatpush2.bf16.msra.mxu0 %v5382
        %5615 = vmatprep.mubr.bf16.mxu0 %v5459
        %5616 = vmatmul.mubr.bf16.gmra.mxu0 %v4943
        %v5617 = vpop.f32.mrf.mxu0
        %v5618 = vadd.f32 %v5578, %v5617
        %v5619 = vpop.f32.mrf.mxu0
        %v5620 = vpop.f32.mrf.mxu0
        %v5621 = vpop.f32.mrf.mxu0
        %5622 = vdwg.mxu0
        %v5623 = vmax.f32 %v5537, 0.0
        %v5624 = vmax.f32 %v5539, 0.0
        %v5625 = vmax.f32 %v5618, 0.0
        %v5626 = vpack.c.bf16 %v5623, %v5623
        %v5627 = vpack.c.bf16 %v5624, %v5624
        %v5628 = vpack.c.bf16 %v5625, %v5625
        %s5629 = scalar_lea.vmem %s486, 608
        %v5630 = vld [vmem:[%s5629] sm:$0xf]
        %v5631 = vld [vmem:[%s5629 + $0x4] sm:$0xf]
        %v5632 = vld [vmem:[%s5629 + $0x8] sm:$0xf]
        %v5633 = vld [vmem:[%s5629 + $0xc] sm:$0xf]
        %v5634 = vld [vmem:[%s5629 + $0x10] sm:$0xf]
        %v5635 = vld [vmem:[%s5629 + $0x14] sm:$0xf]
        %v5636 = vld [vmem:[%s5629 + $0x18] sm:$0xf]
        %v5637 = vld [vmem:[%s5629 + $0x1c] sm:$0xf]
        %v5638 = vld [vmem:[%s5629 + $0x20] sm:$0xf]
        %v5639 = vld [vmem:[%s5629 + $0x24] sm:$0xf]
        %v5640 = vld [vmem:[%s5629 + $0x28] sm:$0xf]
        %v5641 = vld [vmem:[%s5629 + $0x2c] sm:$0xf]
        %v5642 = vld [vmem:[%s5629 + $0x30] sm:$0xf]
        %v5643 = vld [vmem:[%s5629 + $0x34] sm:$0xf]
        %v5644 = vld [vmem:[%s5629 + $0x38] sm:$0xf]
        %v5645 = vld [vmem:[%s5629 + $0x3c] sm:$0xf]
        %v5646 = vld [vmem:[%s5629 + $0x40] sm:$0xf]
        %v5647 = vld [vmem:[%s5629 + $0x44] sm:$0xf]
        %v5648 = vld [vmem:[%s5629 + $0x48] sm:$0xf]
        %v5649 = vld [vmem:[%s5629 + $0x4c] sm:$0xf]
        %v5650 = vld [vmem:[%s5629 + $0x50] sm:$0xf]
        %v5651 = vld [vmem:[%s5629 + $0x54] sm:$0xf]
        %v5652 = vld [vmem:[%s5629 + $0x58] sm:$0xf]
        %v5653 = vld [vmem:[%s5629 + $0x5c] sm:$0xf]
        %v5654 = vld [vmem:[%s5629 + $0x60] sm:$0xf]
        %v5655 = vld [vmem:[%s5629 + $0x64] sm:$0xf]
        %v5656 = vld [vmem:[%s5629 + $0x68] sm:$0xf]
        %v5657 = vld [vmem:[%s5629 + $0x6c] sm:$0xf]
        %v5658 = vld [vmem:[%s5629 + $0x70] sm:$0xf]
        %v5659 = vld [vmem:[%s5629 + $0x74] sm:$0xf]
        %v5660 = vld [vmem:[%s5629 + $0x78] sm:$0xf]
        %v5661 = vld [vmem:[%s5629 + $0x7c] sm:$0xf]
        %v5662 = vld [vmem:[%s5629 + $0x80] sm:$0xf]
        %v5663 = vld [vmem:[%s5629 + $0x84] sm:$0xf]
        %v5664 = vld [vmem:[%s5629 + $0x88] sm:$0xf]
        %v5665 = vld [vmem:[%s5629 + $0x8c] sm:$0xf]
        %v5666 = vld [vmem:[%s5629 + $0x90] sm:$0xf]
        %v5667 = vld [vmem:[%s5629 + $0x94] sm:$0x3]
        %v5668 = vlaneseq
        %v5669 = vshrl.u32 %v5668, 7
        %v5670 = vsub.s32 4, %v5669
        %v5671 = vrot.slane %v501, %v5670
        %v5710 = vunpack.c.l.b16 %v5630
        %v5711 = vunpack.c.l.b16 %v5631
        %v5712 = vunpack.c.l.b16 %v5632
        %v5713 = vunpack.c.l.b16 %v5633
        %v5714 = vunpack.c.l.b16 %v5634
        %v5715 = vunpack.c.l.b16 %v5635
        %v5716 = vunpack.c.l.b16 %v5636
        %v5717 = vunpack.c.l.b16 %v5637
        %v5718 = vunpack.c.l.b16 %v5638
        %v5719 = vunpack.c.l.b16 %v5639
        %v5720 = vunpack.c.l.b16 %v5640
        %v5721 = vunpack.c.l.b16 %v5641
        %v5722 = vunpack.c.l.b16 %v5642
        %v5723 = vunpack.c.l.b16 %v5643
        %v5724 = vunpack.c.l.b16 %v5644
        %v5725 = vunpack.c.l.b16 %v5645
        %v5726 = vunpack.c.l.b16 %v5646
        %v5727 = vunpack.c.l.b16 %v5647
        %v5728 = vunpack.c.l.b16 %v5648
        %v5729 = vunpack.c.l.b16 %v5649
        %v5730 = vunpack.c.l.b16 %v5650
        %v5731 = vunpack.c.l.b16 %v5651
        %v5732 = vunpack.c.l.b16 %v5652
        %v5733 = vunpack.c.l.b16 %v5653
        %v5734 = vunpack.c.l.b16 %v5654
        %v5735 = vunpack.c.l.b16 %v5655
        %v5736 = vunpack.c.l.b16 %v5656
        %v5737 = vunpack.c.l.b16 %v5657
        %v5738 = vunpack.c.l.b16 %v5658
        %v5739 = vunpack.c.l.b16 %v5659
        %v5740 = vunpack.c.l.b16 %v5660
        %v5741 = vunpack.c.l.b16 %v5661
        %v5742 = vunpack.c.l.b16 %v5662
        %v5743 = vunpack.c.l.b16 %v5663
        %v5744 = vunpack.c.l.b16 %v5664
        %v5745 = vunpack.c.l.b16 %v5665
        %v5746 = vunpack.c.l.b16 %v5666
        %v5747 = vunpack.c.l.b16 %v5667
        %v5748 = vpack.c.b16 %v5711, %v5710
        %v5749 = vpack.c.b16 %v5713, %v5712
        %v5750 = vpack.c.b16 %v5715, %v5714
        %v5751 = vpack.c.b16 %v5717, %v5716
        %v5752 = vpack.c.b16 %v5719, %v5718
        %v5753 = vpack.c.b16 %v5721, %v5720
        %v5754 = vpack.c.b16 %v5723, %v5722
        %v5755 = vpack.c.b16 %v5725, %v5724
        %v5756 = vpack.c.b16 %v5727, %v5726
        %v5757 = vpack.c.b16 %v5729, %v5728
        %v5758 = vpack.c.b16 %v5731, %v5730
        %v5759 = vpack.c.b16 %v5733, %v5732
        %v5760 = vpack.c.b16 %v5735, %v5734
        %v5761 = vpack.c.b16 %v5737, %v5736
        %v5762 = vpack.c.b16 %v5739, %v5738
        %v5763 = vpack.c.b16 %v5741, %v5740
        %v5764 = vpack.c.b16 %v5743, %v5742
        %v5765 = vpack.c.b16 %v5745, %v5744
        %v5766 = vpack.c.b16 %v5747, %v5746
        %v5786 = vsel %vm1479, %v5628, 0
        %v5789 = vsel %vm1483, %v5766, 0
        %5791 = vmatprep.subr.bf16.mxu0 0
        %5792 = vmatpush1.bf16.msra.mxu0 %v5755
        %5793 = vmatprep.subr.bf16.mxu0 0
        %5794 = vmatpush1.bf16.msra.mxu0 %v5754
        %5795 = vmatprep.subr.bf16.mxu0 0
        %5796 = vmatpush1.bf16.msra.mxu0 %v5753
        %5797 = vmatprep.subr.bf16.mxu0 0
        %5798 = vmatpush1.bf16.msra.mxu0 %v5752
        %5799 = vmatprep.subr.bf16.mxu0 0
        %5800 = vmatpush1.bf16.msra.mxu0 %v5751
        %5801 = vmatprep.subr.bf16.mxu0 0
        %5802 = vmatpush1.bf16.msra.mxu0 %v5750
        %5803 = vmatprep.subr.bf16.mxu0 0
        %5804 = vmatpush1.bf16.msra.mxu0 %v5749
        %5805 = vmatprep.subr.bf16.mxu0 0
        %5806 = vmatpush1.bf16.msra.mxu0 %v5748
        %5807 = vmatprep.subr.bf16.mxu0 0
        %5808 = vmatpush2.bf16.msra.mxu0 %v5763
        %5809 = vmatprep.subr.bf16.mxu0 0
        %5810 = vmatpush2.bf16.msra.mxu0 %v5762
        %5811 = vmatprep.subr.bf16.mxu0 0
        %5812 = vmatpush2.bf16.msra.mxu0 %v5761
        %5813 = vmatprep.subr.bf16.mxu0 0
        %5814 = vmatpush2.bf16.msra.mxu0 %v5760
        %5815 = vmatprep.subr.bf16.mxu0 0
        %5816 = vmatpush2.bf16.msra.mxu0 %v5759
        %5817 = vmatprep.subr.bf16.mxu0 0
        %5818 = vmatpush2.bf16.msra.mxu0 %v5758
        %5819 = vmatprep.subr.bf16.mxu0 0
        %5820 = vmatpush2.bf16.msra.mxu0 %v5757
        %5821 = vmatprep.subr.bf16.mxu0 0
        %5822 = vmatpush2.bf16.msra.mxu0 %v5756
        %5823 = vmatprep.mubr.bf16.mxu0 %v5627
        %5824 = vmatmul.mubr.bf16.gmra.mxu0 %v5626
        %v5825 = vpop.f32.mrf.mxu0
        %v5826 = vadd.f32 %v5671, %v5825
        %v5827 = vpop.f32.mrf.mxu0
        %v5828 = vpop.f32.mrf.mxu0
        %v5829 = vpop.f32.mrf.mxu0
        %5830 = vdwg.mxu0
        %5831 = vmatprep.subr.bf16.mxu0 0
        %5832 = vmatpush1.bf16.msra.mxu0 0
        %5833 = vmatprep.subr.bf16.mxu0 0
        %5834 = vmatpush1.bf16.msra.mxu0 0
        %5835 = vmatprep.subr.bf16.mxu0 0
        %5836 = vmatpush1.bf16.msra.mxu0 0
        %5837 = vmatprep.subr.bf16.mxu0 0
        %5838 = vmatpush1.bf16.msra.mxu0 0
        %5839 = vmatprep.subr.bf16.mxu0 0
        %5840 = vmatpush1.bf16.msra.mxu0 0
        %5841 = vmatprep.subr.bf16.mxu0 0
        %5842 = vmatpush1.bf16.msra.mxu0 %v5789
        %5843 = vmatprep.subr.bf16.mxu0 0
        %5844 = vmatpush1.bf16.msra.mxu0 %v5765
        %5845 = vmatprep.subr.bf16.mxu0 0
        %5846 = vmatpush1.bf16.msra.mxu0 %v5764
        %5847 = vmatprep.subr.bf16.mxu0 0
        %5848 = vmatpush2.bf16.msra.mxu0 0
        %5849 = vmatprep.subr.bf16.mxu0 0
        %5850 = vmatpush2.bf16.msra.mxu0 0
        %5851 = vmatprep.subr.bf16.mxu0 0
        %5852 = vmatpush2.bf16.msra.mxu0 0
        %5853 = vmatprep.subr.bf16.mxu0 0
        %5854 = vmatpush2.bf16.msra.mxu0 0
        %5855 = vmatprep.subr.bf16.mxu0 0
        %5856 = vmatpush2.bf16.msra.mxu0 0
        %5857 = vmatprep.subr.bf16.mxu0 0
        %5858 = vmatpush2.bf16.msra.mxu0 0
        %5859 = vmatprep.subr.bf16.mxu0 0
        %5860 = vmatpush2.bf16.msra.mxu0 0
        %5861 = vmatprep.subr.bf16.mxu0 0
        %5862 = vmatpush2.bf16.msra.mxu0 0
        %5863 = vmatprep.mubr.bf16.mxu0 0
        %5864 = vmatmul.mubr.bf16.gmra.mxu0 %v5786
        %v5865 = vpop.f32.mrf.mxu0
        %v5866 = vadd.f32 %v5826, %v5865
        %v5867 = vpop.f32.mrf.mxu0
        %v5868 = vpop.f32.mrf.mxu0
        %v5869 = vpop.f32.mrf.mxu0
        %5870 = vdwg.mxu0
        %v5871 = vtanh.pop %v5866
        %v5872 = vadd.f32 %v5871, 1.0
        %v5873 = vmul.f32 %v5872, 11.0
        %v5874 = vadd.f32 %v5873, -20.0
        %v5875 = vmul.f32 %v5874, 1.442695
        %v5876 = vpow.pop %v5875
        %5878 = vrot.lane.b32.xlu0 %v506, 8
        %v5879 = vpop.permute.xlu0 %5878
        %v5881 = vmul.f32 %v5876, %v5879
        %5883 = vrot.lane.b32.xlu0 %v5881, 120
        %v5884 = vpop.permute.xlu0 %5883
        %v5886 = vadd.f32 %v5866, %v5884
        %v5887 = vtanh.pop %v5886
        %s5888 = scalar_lea.vmem %s471, 8 [#allocation10]
        %5889 = vst.msk [vmem:[%s5888] sm:$0x3] %vm1584, %v5887
        %s5890 = sand.u32 %s240, 1
        %s5891 = scalar_lea.sflag [#allocation4], %s5890
        %s5892 = sand.u32 %s240, 1
        %s5893 = smul.addr %s5892, 10
        %s5894 = scalar_lea.vmem [#allocation10], %s5893
        // Predicated region
        $region69: #{tpu_custom_call.1} parent=51 // pred_check
          %p5895 = pneg %p250
        $region70: #{tpu_custom_call.1} parent=51 // pred_check_branch
          %5897 = sbr.rel (%p5895) target = $region72
        $region71: #{tpu_custom_call.1} parent=51 // pred_region
          %s5899 = ssub.s32 160, 160
          %5900 = vsyncadd %s5891, %s5899
          %s5901 = smul.addr %s29, 5
          %s5902 = smul.addr %s5901, 32
          %s5903 = scalar_lea.hbm %s8, %s5902
          %s5904 = sshll.u32 %s5894, 4
          %s5905 = int_to_ptr.vmem [resolvable:$true] %s5904
          %5910 = dma.vmem_to_hbm [thread:$0]  %s5905, 160, %s5903, %s5891, 32, 32, 2
        $region72: #{tpu_custom_call.1} parent=51 // pred_fallthru
          _
      $region52: #{tpu_custom_call.1} parent=5 // pred_fallthru
        _
      %p5911 = scmp.le.s32.totalorder 2, %s24
      // Predicated region
      $region73: #{tpu_custom_call.1} parent=5 // pred_check
        %p5912 = pneg %p5911
      $region74: #{tpu_custom_call.1} parent=5 // pred_check_branch
        %5914 = sbr.rel (%p5912) target = $region76
      $region75: #{tpu_custom_call.1} parent=5 // pred_region
        %s5915 = ssub.s32 %s24, 2
        // Predicated region
        $region77: #{tpu_custom_call.1} parent=75 // pred_check
          %p5916 = pneg %p256
        $region78: #{tpu_custom_call.1} parent=75 // pred_check_branch
          %5918 = sbr.rel (%p5916) target = $region80
        $region79: #{tpu_custom_call.1} parent=75 // pred_region
          %s5919 = sand.u32 %s241, 1
          %s5920 = scalar_lea.sflag [#allocation4], %s5919
          %s5921 = sand.u32 %s241, 1
          %s5922 = smul.addr %s5921, 10
          %s5923 = scalar_lea.vmem [#allocation10], %s5922
          %5924 = dma.done %s5920, 160
        $region80: #{tpu_custom_call.1} parent=75 // pred_fallthru
          _
      $region76: #{tpu_custom_call.1} parent=5 // pred_fallthru
        _
    $region6: #{tpu_custom_call.1} parent=1 // loop_footer
      %s28 = sadd.s32 1, %s24
    $region7: #{tpu_custom_call.1} parent=1 // loop_footer_branch
      %23 = sbr.rel target = $region3
    $region8: #{tpu_custom_call.1} parent=1 // loop_exit
      _
    %5925 = vsyncpa [#allocation3], 1
    %s5926 = scalar_lea.sflag [#allocation3], 1
    %5927 = vsyncpa %s5926, 1
    %5928 = vsyncpa [#allocation6], 1
    %s5929 = scalar_lea.sflag [#allocation6], 1
    %5930 = vsyncpa %s5929, 1
    %5931 = vsyncpa [#allocation9], 1
    %s5932 = scalar_lea.sflag [#allocation9], 1
    %5933 = vsyncpa %s5932, 1
    %5934 = vsyncpa [#allocation4], 1
    %s5935 = scalar_lea.sflag [#allocation4], 1
    %5936 = vsyncpa %s5935, 1

</llo_original>
